<compile_context>
chip_gen: v7x
topology: tpu7x:2x2x1
jax: 0.10.0
libtpu: 0.0.40
codegen_flags: <defaults>
</compile_context>

<pallas_src>
import jax
import jax.numpy as jnp
from jax import lax
from jax.experimental import pallas as pl
from jax.experimental.pallas import tpu as pltpu


def _conv3x3_direct_kernel(x_ref, w_ref, b_ref, o_ref):
    """Direct 'valid' conv, stride 1, fully unrolled (tiny static shapes).

    x_ref: (N, IC, H, W)          input, VMEM
    w_ref: (OC, IC*KH*KW)         flattened conv weights, SMEM (scalar reads)
    b_ref: (OC,)                  bias, SMEM
    o_ref: (N, OC, H_out, W_out)  output, VMEM — already NCHW, no reshape needed
    """
    N, IC, H, W = x_ref.shape
    _, OC, H_out, W_out = o_ref.shape
    KH = H - H_out + 1
    KW = W - W_out + 1
    K = IC * KH * KW

    # Read every weight / bias scalar from SMEM exactly once; reuse across images.
    w = [[w_ref[o, k] for k in range(K)] for o in range(OC)]
    b = [b_ref[o] for o in range(OC)]

    for n in range(N):
        # f32 accumulators, one (H_out, W_out) tile per output channel,
        # initialized with the bias (f32 accumulation per the review note).
        acc = [jnp.full((H_out, W_out), b[o], jnp.float32) for o in range(OC)]
        for c in range(IC):
            for kh in range(KH):
                for kw in range(KW):
                    # Shifted window for this tap: a plain VMEM load with static
                    # offsets — no im2col slab, no in-kernel reshape/relayout.
                    win = x_ref[n, c, kh:kh + H_out, kw:kw + W_out]
                    k = (c * KH + kh) * KW + kw
                    for o in range(OC):
                        acc[o] = acc[o] + w[o][k] * win
        for o in range(OC):
            o_ref[n, o] = acc[o].astype(o_ref.dtype)


@jax.jit
def conv2d_pallas(x_nchw, weight_oihw, bias):
    """Valid conv, stride 1. x: (N, IC, H, W); weight: (OC, IC, KH, KW); bias: (OC,)."""
    N, IC, H, W = x_nchw.shape
    OC, _, KH, KW = weight_oihw.shape
    H_out, W_out = H - KH + 1, W - KW + 1

    # Flatten weights to (OC, K) with (c, kh, kw) ordering — matches the kernel's
    # tap index k = (c*KH + kh)*KW + kw.  Tiny (648 B); pure layout plumbing.
    w2d = weight_oihw.reshape(OC, IC * KH * KW)

    # VMEM-budget / batch guard (review, v7x forward-looking item): the whole
    # problem is resident in VMEM with no grid.  If this ever approaches the
    # v7x scoped VMEM default (~32 MiB), switch to a grid over N with
    # dimension_semantics=("parallel",) so both v7x TensorCores are used.
    vmem_bytes = 4 * (x_nchw.size + N * OC * H_out * W_out)
    assert vmem_bytes < 16 * 1024 * 1024, (
        "whole-problem-resident design needs a batch grid at this size")

    flops = 2 * N * OC * IC * KH * KW * H_out * W_out + N * OC * H_out * W_out
    bytes_accessed = 4 * (x_nchw.size + w2d.size + bias.size + N * OC * H_out * W_out)

    return pl.pallas_call(
        _conv3x3_direct_kernel,
        out_shape=jax.ShapeDtypeStruct((N, OC, H_out, W_out), x_nchw.dtype),
        # No grid: single invocation, whole arrays resident on-chip.
        in_specs=[
            pl.BlockSpec(memory_space=pltpu.MemorySpace.VMEM),   # x
            pl.BlockSpec(memory_space=pltpu.MemorySpace.SMEM),   # weights (scalars)
            pl.BlockSpec(memory_space=pltpu.MemorySpace.SMEM),   # bias (scalars)
        ],
        out_specs=pl.BlockSpec(memory_space=pltpu.MemorySpace.VMEM),
        cost_estimate=pl.CostEstimate(
            flops=flops, transcendentals=0, bytes_accessed=bytes_accessed),
    )(x_nchw, w2d, bias)


class MyNetPallas:
    """MyNet.forward == conv1 only (maxpool1 is defined in __init__ but unused)."""

    def __init__(self, key):
        IC, OC, Ksz = 3, 6, 3
        k1, k2 = jax.random.split(key)
        # PyTorch default Conv2d init: U(-sqrt(k), sqrt(k)), k = 1/(IC*KH*KW)
        bound = 1.0 / jnp.sqrt(IC * Ksz * Ksz)
        # Keep PyTorch weight layout (OC, IC, KH, KW) as the canonical parameter.
        self.weight = jax.random.uniform(k1, (OC, IC, Ksz, Ksz), jnp.float32,
                                         minval=-bound, maxval=bound)
        self.bias = jax.random.uniform(k2, (OC,), jnp.float32,
                                       minval=-bound, maxval=bound)

    def __call__(self, x_nchw):
        return conv2d_pallas(x_nchw, self.weight, self.bias)


if __name__ == "__main__":
    key = jax.random.PRNGKey(0)
    k_param, k_x = jax.random.split(key)

    net = MyNetPallas(k_param)

    # Small NCHW input consistent with Conv2d(in_channels=3, ...)
    x = jax.random.normal(k_x, (2, 3, 16, 16), jnp.float32)

    out = jax.block_until_ready(net(x))

    # Sanity check vs pure-JAX reference conv.
    ref = lax.conv_general_dilated(
        x, net.weight, window_strides=(1, 1), padding="VALID",
        dimension_numbers=("NCHW", "OIHW", "NCHW"),
    ) + net.bias.reshape(1, -1, 1, 1)
    assert out.shape == (2, 6, 14, 14), out.shape
    assert jnp.allclose(out, ref, atol=1e-5, rtol=1e-5), "mismatch vs reference"

    print("KERNEL_OK")
</pallas_src>

<mosaic_0001>
module attributes {stable_mosaic.version = 11 : i64} {
  func.func @_conv3x3_direct_kernel(%arg0: memref<2x3x16x16xf32, #tpu.memory_space<vmem>>, %arg1: memref<6x27xf32, #tpu.memory_space<smem>>, %arg2: memref<6xf32, #tpu.memory_space<smem>>, %arg3: memref<2x6x14x14xf32, #tpu.memory_space<vmem>>) attributes {dimension_semantics = [], scalar_prefetch = 0 : i64, scratch_operands = 0 : i64, tpu.core_type = #tpu.core_type<tc>} {
    %c0 = arith.constant 0 : index
    %c0_0 = arith.constant 0 : index
    %0 = memref.load %arg1[%c0, %c0_0] : memref<6x27xf32, #tpu.memory_space<smem>>
    %c0_1 = arith.constant 0 : index
    %c1 = arith.constant 1 : index
    %1 = memref.load %arg1[%c0_1, %c1] : memref<6x27xf32, #tpu.memory_space<smem>>
    %c0_2 = arith.constant 0 : index
    %c2 = arith.constant 2 : index
    %2 = memref.load %arg1[%c0_2, %c2] : memref<6x27xf32, #tpu.memory_space<smem>>
    %c0_3 = arith.constant 0 : index
    %c3 = arith.constant 3 : index
    %3 = memref.load %arg1[%c0_3, %c3] : memref<6x27xf32, #tpu.memory_space<smem>>
    %c0_4 = arith.constant 0 : index
    %c4 = arith.constant 4 : index
    %4 = memref.load %arg1[%c0_4, %c4] : memref<6x27xf32, #tpu.memory_space<smem>>
    %c0_5 = arith.constant 0 : index
    %c5 = arith.constant 5 : index
    %5 = memref.load %arg1[%c0_5, %c5] : memref<6x27xf32, #tpu.memory_space<smem>>
    %c0_6 = arith.constant 0 : index
    %c6 = arith.constant 6 : index
    %6 = memref.load %arg1[%c0_6, %c6] : memref<6x27xf32, #tpu.memory_space<smem>>
    %c0_7 = arith.constant 0 : index
    %c7 = arith.constant 7 : index
    %7 = memref.load %arg1[%c0_7, %c7] : memref<6x27xf32, #tpu.memory_space<smem>>
    %c0_8 = arith.constant 0 : index
    %c8 = arith.constant 8 : index
    %8 = memref.load %arg1[%c0_8, %c8] : memref<6x27xf32, #tpu.memory_space<smem>>
    %c0_9 = arith.constant 0 : index
    %c9 = arith.constant 9 : index
    %9 = memref.load %arg1[%c0_9, %c9] : memref<6x27xf32, #tpu.memory_space<smem>>
    %c0_10 = arith.constant 0 : index
    %c10 = arith.constant 10 : index
    %10 = memref.load %arg1[%c0_10, %c10] : memref<6x27xf32, #tpu.memory_space<smem>>
    %c0_11 = arith.constant 0 : index
    %c11 = arith.constant 11 : index
    %11 = memref.load %arg1[%c0_11, %c11] : memref<6x27xf32, #tpu.memory_space<smem>>
    %c0_12 = arith.constant 0 : index
    %c12 = arith.constant 12 : index
    %12 = memref.load %arg1[%c0_12, %c12] : memref<6x27xf32, #tpu.memory_space<smem>>
    %c0_13 = arith.constant 0 : index
    %c13 = arith.constant 13 : index
    %13 = memref.load %arg1[%c0_13, %c13] : memref<6x27xf32, #tpu.memory_space<smem>>
    %c0_14 = arith.constant 0 : index
    %c14 = arith.constant 14 : index
    %14 = memref.load %arg1[%c0_14, %c14] : memref<6x27xf32, #tpu.memory_space<smem>>
    %c0_15 = arith.constant 0 : index
    %c15 = arith.constant 15 : index
    %15 = memref.load %arg1[%c0_15, %c15] : memref<6x27xf32, #tpu.memory_space<smem>>
    %c0_16 = arith.constant 0 : index
    %c16 = arith.constant 16 : index
    %16 = memref.load %arg1[%c0_16, %c16] : memref<6x27xf32, #tpu.memory_space<smem>>
    %c0_17 = arith.constant 0 : index
    %c17 = arith.constant 17 : index
    %17 = memref.load %arg1[%c0_17, %c17] : memref<6x27xf32, #tpu.memory_space<smem>>
    %c0_18 = arith.constant 0 : index
    %c18 = arith.constant 18 : index
    %18 = memref.load %arg1[%c0_18, %c18] : memref<6x27xf32, #tpu.memory_space<smem>>
    %c0_19 = arith.constant 0 : index
    %c19 = arith.constant 19 : index
    %19 = memref.load %arg1[%c0_19, %c19] : memref<6x27xf32, #tpu.memory_space<smem>>
    %c0_20 = arith.constant 0 : index
    %c20 = arith.constant 20 : index
    %20 = memref.load %arg1[%c0_20, %c20] : memref<6x27xf32, #tpu.memory_space<smem>>
    %c0_21 = arith.constant 0 : index
    %c21 = arith.constant 21 : index
    %21 = memref.load %arg1[%c0_21, %c21] : memref<6x27xf32, #tpu.memory_space<smem>>
    %c0_22 = arith.constant 0 : index
    %c22 = arith.constant 22 : index
    %22 = memref.load %arg1[%c0_22, %c22] : memref<6x27xf32, #tpu.memory_space<smem>>
    %c0_23 = arith.constant 0 : index
    %c23 = arith.constant 23 : index
    %23 = memref.load %arg1[%c0_23, %c23] : memref<6x27xf32, #tpu.memory_space<smem>>
    %c0_24 = arith.constant 0 : index
    %c24 = arith.constant 24 : index
    %24 = memref.load %arg1[%c0_24, %c24] : memref<6x27xf32, #tpu.memory_space<smem>>
    %c0_25 = arith.constant 0 : index
    %c25 = arith.constant 25 : index
    %25 = memref.load %arg1[%c0_25, %c25] : memref<6x27xf32, #tpu.memory_space<smem>>
    %c0_26 = arith.constant 0 : index
    %c26 = arith.constant 26 : index
    %26 = memref.load %arg1[%c0_26, %c26] : memref<6x27xf32, #tpu.memory_space<smem>>
    %c1_27 = arith.constant 1 : index
    %c0_28 = arith.constant 0 : index
    %27 = memref.load %arg1[%c1_27, %c0_28] : memref<6x27xf32, #tpu.memory_space<smem>>
    %c1_29 = arith.constant 1 : index
    %c1_30 = arith.constant 1 : index
    %28 = memref.load %arg1[%c1_29, %c1_30] : memref<6x27xf32, #tpu.memory_space<smem>>
    %c1_31 = arith.constant 1 : index
    %c2_32 = arith.constant 2 : index
    %29 = memref.load %arg1[%c1_31, %c2_32] : memref<6x27xf32, #tpu.memory_space<smem>>
    %c1_33 = arith.constant 1 : index
    %c3_34 = arith.constant 3 : index
    %30 = memref.load %arg1[%c1_33, %c3_34] : memref<6x27xf32, #tpu.memory_space<smem>>
    %c1_35 = arith.constant 1 : index
    %c4_36 = arith.constant 4 : index
    %31 = memref.load %arg1[%c1_35, %c4_36] : memref<6x27xf32, #tpu.memory_space<smem>>
    %c1_37 = arith.constant 1 : index
    %c5_38 = arith.constant 5 : index
    %32 = memref.load %arg1[%c1_37, %c5_38] : memref<6x27xf32, #tpu.memory_space<smem>>
    %c1_39 = arith.constant 1 : index
    %c6_40 = arith.constant 6 : index
    %33 = memref.load %arg1[%c1_39, %c6_40] : memref<6x27xf32, #tpu.memory_space<smem>>
    %c1_41 = arith.constant 1 : index
    %c7_42 = arith.constant 7 : index
    %34 = memref.load %arg1[%c1_41, %c7_42] : memref<6x27xf32, #tpu.memory_space<smem>>
    %c1_43 = arith.constant 1 : index
    %c8_44 = arith.constant 8 : index
    %35 = memref.load %arg1[%c1_43, %c8_44] : memref<6x27xf32, #tpu.memory_space<smem>>
    %c1_45 = arith.constant 1 : index
    %c9_46 = arith.constant 9 : index
    %36 = memref.load %arg1[%c1_45, %c9_46] : memref<6x27xf32, #tpu.memory_space<smem>>
    %c1_47 = arith.constant 1 : index
    %c10_48 = arith.constant 10 : index
    %37 = memref.load %arg1[%c1_47, %c10_48] : memref<6x27xf32, #tpu.memory_space<smem>>
    %c1_49 = arith.constant 1 : index
    %c11_50 = arith.constant 11 : index
    %38 = memref.load %arg1[%c1_49, %c11_50] : memref<6x27xf32, #tpu.memory_space<smem>>
    %c1_51 = arith.constant 1 : index
    %c12_52 = arith.constant 12 : index
    %39 = memref.load %arg1[%c1_51, %c12_52] : memref<6x27xf32, #tpu.memory_space<smem>>
    %c1_53 = arith.constant 1 : index
    %c13_54 = arith.constant 13 : index
    %40 = memref.load %arg1[%c1_53, %c13_54] : memref<6x27xf32, #tpu.memory_space<smem>>
    %c1_55 = arith.constant 1 : index
    %c14_56 = arith.constant 14 : index
    %41 = memref.load %arg1[%c1_55, %c14_56] : memref<6x27xf32, #tpu.memory_space<smem>>
    %c1_57 = arith.constant 1 : index
    %c15_58 = arith.constant 15 : index
    %42 = memref.load %arg1[%c1_57, %c15_58] : memref<6x27xf32, #tpu.memory_space<smem>>
    %c1_59 = arith.constant 1 : index
    %c16_60 = arith.constant 16 : index
    %43 = memref.load %arg1[%c1_59, %c16_60] : memref<6x27xf32, #tpu.memory_space<smem>>
    %c1_61 = arith.constant 1 : index
    %c17_62 = arith.constant 17 : index
    %44 = memref.load %arg1[%c1_61, %c17_62] : memref<6x27xf32, #tpu.memory_space<smem>>
    %c1_63 = arith.constant 1 : index
    %c18_64 = arith.constant 18 : index
    %45 = memref.load %arg1[%c1_63, %c18_64] : memref<6x27xf32, #tpu.memory_space<smem>>
    %c1_65 = arith.constant 1 : index
    %c19_66 = arith.constant 19 : index
    %46 = memref.load %arg1[%c1_65, %c19_66] : memref<6x27xf32, #tpu.memory_space<smem>>
    %c1_67 = arith.constant 1 : index
    %c20_68 = arith.constant 20 : index
    %47 = memref.load %arg1[%c1_67, %c20_68] : memref<6x27xf32, #tpu.memory_space<smem>>
    %c1_69 = arith.constant 1 : index
    %c21_70 = arith.constant 21 : index
    %48 = memref.load %arg1[%c1_69, %c21_70] : memref<6x27xf32, #tpu.memory_space<smem>>
    %c1_71 = arith.constant 1 : index
    %c22_72 = arith.constant 22 : index
    %49 = memref.load %arg1[%c1_71, %c22_72] : memref<6x27xf32, #tpu.memory_space<smem>>
    %c1_73 = arith.constant 1 : index
    %c23_74 = arith.constant 23 : index
    %50 = memref.load %arg1[%c1_73, %c23_74] : memref<6x27xf32, #tpu.memory_space<smem>>
    %c1_75 = arith.constant 1 : index
    %c24_76 = arith.constant 24 : index
    %51 = memref.load %arg1[%c1_75, %c24_76] : memref<6x27xf32, #tpu.memory_space<smem>>
    %c1_77 = arith.constant 1 : index
    %c25_78 = arith.constant 25 : index
    %52 = memref.load %arg1[%c1_77, %c25_78] : memref<6x27xf32, #tpu.memory_space<smem>>
    %c1_79 = arith.constant 1 : index
    %c26_80 = arith.constant 26 : index
    %53 = memref.load %arg1[%c1_79, %c26_80] : memref<6x27xf32, #tpu.memory_space<smem>>
    %c2_81 = arith.constant 2 : index
    %c0_82 = arith.constant 0 : index
    %54 = memref.load %arg1[%c2_81, %c0_82] : memref<6x27xf32, #tpu.memory_space<smem>>
    %c2_83 = arith.constant 2 : index
    %c1_84 = arith.constant 1 : index
    %55 = memref.load %arg1[%c2_83, %c1_84] : memref<6x27xf32, #tpu.memory_space<smem>>
    %c2_85 = arith.constant 2 : index
    %c2_86 = arith.constant 2 : index
    %56 = memref.load %arg1[%c2_85, %c2_86] : memref<6x27xf32, #tpu.memory_space<smem>>
    %c2_87 = arith.constant 2 : index
    %c3_88 = arith.constant 3 : index
    %57 = memref.load %arg1[%c2_87, %c3_88] : memref<6x27xf32, #tpu.memory_space<smem>>
    %c2_89 = arith.constant 2 : index
    %c4_90 = arith.constant 4 : index
    %58 = memref.load %arg1[%c2_89, %c4_90] : memref<6x27xf32, #tpu.memory_space<smem>>
    %c2_91 = arith.constant 2 : index
    %c5_92 = arith.constant 5 : index
    %59 = memref.load %arg1[%c2_91, %c5_92] : memref<6x27xf32, #tpu.memory_space<smem>>
    %c2_93 = arith.constant 2 : index
    %c6_94 = arith.constant 6 : index
    %60 = memref.load %arg1[%c2_93, %c6_94] : memref<6x27xf32, #tpu.memory_space<smem>>
    %c2_95 = arith.constant 2 : index
    %c7_96 = arith.constant 7 : index
    %61 = memref.load %arg1[%c2_95, %c7_96] : memref<6x27xf32, #tpu.memory_space<smem>>
    %c2_97 = arith.constant 2 : index
    %c8_98 = arith.constant 8 : index
    %62 = memref.load %arg1[%c2_97, %c8_98] : memref<6x27xf32, #tpu.memory_space<smem>>
    %c2_99 = arith.constant 2 : index
    %c9_100 = arith.constant 9 : index
    %63 = memref.load %arg1[%c2_99, %c9_100] : memref<6x27xf32, #tpu.memory_space<smem>>
    %c2_101 = arith.constant 2 : index
    %c10_102 = arith.constant 10 : index
    %64 = memref.load %arg1[%c2_101, %c10_102] : memref<6x27xf32, #tpu.memory_space<smem>>
    %c2_103 = arith.constant 2 : index
    %c11_104 = arith.constant 11 : index
    %65 = memref.load %arg1[%c2_103, %c11_104] : memref<6x27xf32, #tpu.memory_space<smem>>
    %c2_105 = arith.constant 2 : index
    %c12_106 = arith.constant 12 : index
    %66 = memref.load %arg1[%c2_105, %c12_106] : memref<6x27xf32, #tpu.memory_space<smem>>
    %c2_107 = arith.constant 2 : index
    %c13_108 = arith.constant 13 : index
    %67 = memref.load %arg1[%c2_107, %c13_108] : memref<6x27xf32, #tpu.memory_space<smem>>
    %c2_109 = arith.constant 2 : index
    %c14_110 = arith.constant 14 : index
    %68 = memref.load %arg1[%c2_109, %c14_110] : memref<6x27xf32, #tpu.memory_space<smem>>
    %c2_111 = arith.constant 2 : index
    %c15_112 = arith.constant 15 : index
    %69 = memref.load %arg1[%c2_111, %c15_112] : memref<6x27xf32, #tpu.memory_space<smem>>
    %c2_113 = arith.constant 2 : index
    %c16_114 = arith.constant 16 : index
    %70 = memref.load %arg1[%c2_113, %c16_114] : memref<6x27xf32, #tpu.memory_space<smem>>
    %c2_115 = arith.constant 2 : index
    %c17_116 = arith.constant 17 : index
    %71 = memref.load %arg1[%c2_115, %c17_116] : memref<6x27xf32, #tpu.memory_space<smem>>
    %c2_117 = arith.constant 2 : index
    %c18_118 = arith.constant 18 : index
    %72 = memref.load %arg1[%c2_117, %c18_118] : memref<6x27xf32, #tpu.memory_space<smem>>
    %c2_119 = arith.constant 2 : index
    %c19_120 = arith.constant 19 : index
    %73 = memref.load %arg1[%c2_119, %c19_120] : memref<6x27xf32, #tpu.memory_space<smem>>
    %c2_121 = arith.constant 2 : index
    %c20_122 = arith.constant 20 : index
    %74 = memref.load %arg1[%c2_121, %c20_122] : memref<6x27xf32, #tpu.memory_space<smem>>
    %c2_123 = arith.constant 2 : index
    %c21_124 = arith.constant 21 : index
    %75 = memref.load %arg1[%c2_123, %c21_124] : memref<6x27xf32, #tpu.memory_space<smem>>
    %c2_125 = arith.constant 2 : index
    %c22_126 = arith.constant 22 : index
    %76 = memref.load %arg1[%c2_125, %c22_126] : memref<6x27xf32, #tpu.memory_space<smem>>
    %c2_127 = arith.constant 2 : index
    %c23_128 = arith.constant 23 : index
    %77 = memref.load %arg1[%c2_127, %c23_128] : memref<6x27xf32, #tpu.memory_space<smem>>
    %c2_129 = arith.constant 2 : index
    %c24_130 = arith.constant 24 : index
    %78 = memref.load %arg1[%c2_129, %c24_130] : memref<6x27xf32, #tpu.memory_space<smem>>
    %c2_131 = arith.constant 2 : index
    %c25_132 = arith.constant 25 : index
    %79 = memref.load %arg1[%c2_131, %c25_132] : memref<6x27xf32, #tpu.memory_space<smem>>
    %c2_133 = arith.constant 2 : index
    %c26_134 = arith.constant 26 : index
    %80 = memref.load %arg1[%c2_133, %c26_134] : memref<6x27xf32, #tpu.memory_space<smem>>
    %c3_135 = arith.constant 3 : index
    %c0_136 = arith.constant 0 : index
    %81 = memref.load %arg1[%c3_135, %c0_136] : memref<6x27xf32, #tpu.memory_space<smem>>
    %c3_137 = arith.constant 3 : index
    %c1_138 = arith.constant 1 : index
    %82 = memref.load %arg1[%c3_137, %c1_138] : memref<6x27xf32, #tpu.memory_space<smem>>
    %c3_139 = arith.constant 3 : index
    %c2_140 = arith.constant 2 : index
    %83 = memref.load %arg1[%c3_139, %c2_140] : memref<6x27xf32, #tpu.memory_space<smem>>
    %c3_141 = arith.constant 3 : index
    %c3_142 = arith.constant 3 : index
    %84 = memref.load %arg1[%c3_141, %c3_142] : memref<6x27xf32, #tpu.memory_space<smem>>
    %c3_143 = arith.constant 3 : index
    %c4_144 = arith.constant 4 : index
    %85 = memref.load %arg1[%c3_143, %c4_144] : memref<6x27xf32, #tpu.memory_space<smem>>
    %c3_145 = arith.constant 3 : index
    %c5_146 = arith.constant 5 : index
    %86 = memref.load %arg1[%c3_145, %c5_146] : memref<6x27xf32, #tpu.memory_space<smem>>
    %c3_147 = arith.constant 3 : index
    %c6_148 = arith.constant 6 : index
    %87 = memref.load %arg1[%c3_147, %c6_148] : memref<6x27xf32, #tpu.memory_space<smem>>
    %c3_149 = arith.constant 3 : index
    %c7_150 = arith.constant 7 : index
    %88 = memref.load %arg1[%c3_149, %c7_150] : memref<6x27xf32, #tpu.memory_space<smem>>
    %c3_151 = arith.constant 3 : index
    %c8_152 = arith.constant 8 : index
    %89 = memref.load %arg1[%c3_151, %c8_152] : memref<6x27xf32, #tpu.memory_space<smem>>
    %c3_153 = arith.constant 3 : index
    %c9_154 = arith.constant 9 : index
    %90 = memref.load %arg1[%c3_153, %c9_154] : memref<6x27xf32, #tpu.memory_space<smem>>
    %c3_155 = arith.constant 3 : index
    %c10_156 = arith.constant 10 : index
    %91 = memref.load %arg1[%c3_155, %c10_156] : memref<6x27xf32, #tpu.memory_space<smem>>
    %c3_157 = arith.constant 3 : index
    %c11_158 = arith.constant 11 : index
    %92 = memref.load %arg1[%c3_157, %c11_158] : memref<6x27xf32, #tpu.memory_space<smem>>
    %c3_159 = arith.constant 3 : index
    %c12_160 = arith.constant 12 : index
    %93 = memref.load %arg1[%c3_159, %c12_160] : memref<6x27xf32, #tpu.memory_space<smem>>
    %c3_161 = arith.constant 3 : index
    %c13_162 = arith.constant 13 : index
    %94 = memref.load %arg1[%c3_161, %c13_162] : memref<6x27xf32, #tpu.memory_space<smem>>
    %c3_163 = arith.constant 3 : index
    %c14_164 = arith.constant 14 : index
    %95 = memref.load %arg1[%c3_163, %c14_164] : memref<6x27xf32, #tpu.memory_space<smem>>
    %c3_165 = arith.constant 3 : index
    %c15_166 = arith.constant 15 : index
    %96 = memref.load %arg1[%c3_165, %c15_166] : memref<6x27xf32, #tpu.memory_space<smem>>
    %c3_167 = arith.constant 3 : index
    %c16_168 = arith.constant 16 : index
    %97 = memref.load %arg1[%c3_167, %c16_168] : memref<6x27xf32, #tpu.memory_space<smem>>
    %c3_169 = arith.constant 3 : index
    %c17_170 = arith.constant 17 : index
    %98 = memref.load %arg1[%c3_169, %c17_170] : memref<6x27xf32, #tpu.memory_space<smem>>
    %c3_171 = arith.constant 3 : index
    %c18_172 = arith.constant 18 : index
    %99 = memref.load %arg1[%c3_171, %c18_172] : memref<6x27xf32, #tpu.memory_space<smem>>
    %c3_173 = arith.constant 3 : index
    %c19_174 = arith.constant 19 : index
    %100 = memref.load %arg1[%c3_173, %c19_174] : memref<6x27xf32, #tpu.memory_space<smem>>
    %c3_175 = arith.constant 3 : index
    %c20_176 = arith.constant 20 : index
    %101 = memref.load %arg1[%c3_175, %c20_176] : memref<6x27xf32, #tpu.memory_space<smem>>
    %c3_177 = arith.constant 3 : index
    %c21_178 = arith.constant 21 : index
    %102 = memref.load %arg1[%c3_177, %c21_178] : memref<6x27xf32, #tpu.memory_space<smem>>
    %c3_179 = arith.constant 3 : index
    %c22_180 = arith.constant 22 : index
    %103 = memref.load %arg1[%c3_179, %c22_180] : memref<6x27xf32, #tpu.memory_space<smem>>
    %c3_181 = arith.constant 3 : index
    %c23_182 = arith.constant 23 : index
    %104 = memref.load %arg1[%c3_181, %c23_182] : memref<6x27xf32, #tpu.memory_space<smem>>
    %c3_183 = arith.constant 3 : index
    %c24_184 = arith.constant 24 : index
    %105 = memref.load %arg1[%c3_183, %c24_184] : memref<6x27xf32, #tpu.memory_space<smem>>
    %c3_185 = arith.constant 3 : index
    %c25_186 = arith.constant 25 : index
    %106 = memref.load %arg1[%c3_185, %c25_186] : memref<6x27xf32, #tpu.memory_space<smem>>
    %c3_187 = arith.constant 3 : index
    %c26_188 = arith.constant 26 : index
    %107 = memref.load %arg1[%c3_187, %c26_188] : memref<6x27xf32, #tpu.memory_space<smem>>
    %c4_189 = arith.constant 4 : index
    %c0_190 = arith.constant 0 : index
    %108 = memref.load %arg1[%c4_189, %c0_190] : memref<6x27xf32, #tpu.memory_space<smem>>
    %c4_191 = arith.constant 4 : index
    %c1_192 = arith.constant 1 : index
    %109 = memref.load %arg1[%c4_191, %c1_192] : memref<6x27xf32, #tpu.memory_space<smem>>
    %c4_193 = arith.constant 4 : index
    %c2_194 = arith.constant 2 : index
    %110 = memref.load %arg1[%c4_193, %c2_194] : memref<6x27xf32, #tpu.memory_space<smem>>
    %c4_195 = arith.constant 4 : index
    %c3_196 = arith.constant 3 : index
    %111 = memref.load %arg1[%c4_195, %c3_196] : memref<6x27xf32, #tpu.memory_space<smem>>
    %c4_197 = arith.constant 4 : index
    %c4_198 = arith.constant 4 : index
    %112 = memref.load %arg1[%c4_197, %c4_198] : memref<6x27xf32, #tpu.memory_space<smem>>
    %c4_199 = arith.constant 4 : index
    %c5_200 = arith.constant 5 : index
    %113 = memref.load %arg1[%c4_199, %c5_200] : memref<6x27xf32, #tpu.memory_space<smem>>
    %c4_201 = arith.constant 4 : index
    %c6_202 = arith.constant 6 : index
    %114 = memref.load %arg1[%c4_201, %c6_202] : memref<6x27xf32, #tpu.memory_space<smem>>
    %c4_203 = arith.constant 4 : index
    %c7_204 = arith.constant 7 : index
    %115 = memref.load %arg1[%c4_203, %c7_204] : memref<6x27xf32, #tpu.memory_space<smem>>
    %c4_205 = arith.constant 4 : index
    %c8_206 = arith.constant 8 : index
    %116 = memref.load %arg1[%c4_205, %c8_206] : memref<6x27xf32, #tpu.memory_space<smem>>
    %c4_207 = arith.constant 4 : index
    %c9_208 = arith.constant 9 : index
    %117 = memref.load %arg1[%c4_207, %c9_208] : memref<6x27xf32, #tpu.memory_space<smem>>
    %c4_209 = arith.constant 4 : index
    %c10_210 = arith.constant 10 : index
    %118 = memref.load %arg1[%c4_209, %c10_210] : memref<6x27xf32, #tpu.memory_space<smem>>
    %c4_211 = arith.constant 4 : index
    %c11_212 = arith.constant 11 : index
    %119 = memref.load %arg1[%c4_211, %c11_212] : memref<6x27xf32, #tpu.memory_space<smem>>
    %c4_213 = arith.constant 4 : index
    %c12_214 = arith.constant 12 : index
    %120 = memref.load %arg1[%c4_213, %c12_214] : memref<6x27xf32, #tpu.memory_space<smem>>
    %c4_215 = arith.constant 4 : index
    %c13_216 = arith.constant 13 : index
    %121 = memref.load %arg1[%c4_215, %c13_216] : memref<6x27xf32, #tpu.memory_space<smem>>
    %c4_217 = arith.constant 4 : index
    %c14_218 = arith.constant 14 : index
    %122 = memref.load %arg1[%c4_217, %c14_218] : memref<6x27xf32, #tpu.memory_space<smem>>
    %c4_219 = arith.constant 4 : index
    %c15_220 = arith.constant 15 : index
    %123 = memref.load %arg1[%c4_219, %c15_220] : memref<6x27xf32, #tpu.memory_space<smem>>
    %c4_221 = arith.constant 4 : index
    %c16_222 = arith.constant 16 : index
    %124 = memref.load %arg1[%c4_221, %c16_222] : memref<6x27xf32, #tpu.memory_space<smem>>
    %c4_223 = arith.constant 4 : index
    %c17_224 = arith.constant 17 : index
    %125 = memref.load %arg1[%c4_223, %c17_224] : memref<6x27xf32, #tpu.memory_space<smem>>
    %c4_225 = arith.constant 4 : index
    %c18_226 = arith.constant 18 : index
    %126 = memref.load %arg1[%c4_225, %c18_226] : memref<6x27xf32, #tpu.memory_space<smem>>
    %c4_227 = arith.constant 4 : index
    %c19_228 = arith.constant 19 : index
    %127 = memref.load %arg1[%c4_227, %c19_228] : memref<6x27xf32, #tpu.memory_space<smem>>
    %c4_229 = arith.constant 4 : index
    %c20_230 = arith.constant 20 : index
    %128 = memref.load %arg1[%c4_229, %c20_230] : memref<6x27xf32, #tpu.memory_space<smem>>
    %c4_231 = arith.constant 4 : index
    %c21_232 = arith.constant 21 : index
    %129 = memref.load %arg1[%c4_231, %c21_232] : memref<6x27xf32, #tpu.memory_space<smem>>
    %c4_233 = arith.constant 4 : index
    %c22_234 = arith.constant 22 : index
    %130 = memref.load %arg1[%c4_233, %c22_234] : memref<6x27xf32, #tpu.memory_space<smem>>
    %c4_235 = arith.constant 4 : index
    %c23_236 = arith.constant 23 : index
    %131 = memref.load %arg1[%c4_235, %c23_236] : memref<6x27xf32, #tpu.memory_space<smem>>
    %c4_237 = arith.constant 4 : index
    %c24_238 = arith.constant 24 : index
    %132 = memref.load %arg1[%c4_237, %c24_238] : memref<6x27xf32, #tpu.memory_space<smem>>
    %c4_239 = arith.constant 4 : index
    %c25_240 = arith.constant 25 : index
    %133 = memref.load %arg1[%c4_239, %c25_240] : memref<6x27xf32, #tpu.memory_space<smem>>
    %c4_241 = arith.constant 4 : index
    %c26_242 = arith.constant 26 : index
    %134 = memref.load %arg1[%c4_241, %c26_242] : memref<6x27xf32, #tpu.memory_space<smem>>
    %c5_243 = arith.constant 5 : index
    %c0_244 = arith.constant 0 : index
    %135 = memref.load %arg1[%c5_243, %c0_244] : memref<6x27xf32, #tpu.memory_space<smem>>
    %c5_245 = arith.constant 5 : index
    %c1_246 = arith.constant 1 : index
    %136 = memref.load %arg1[%c5_245, %c1_246] : memref<6x27xf32, #tpu.memory_space<smem>>
    %c5_247 = arith.constant 5 : index
    %c2_248 = arith.constant 2 : index
    %137 = memref.load %arg1[%c5_247, %c2_248] : memref<6x27xf32, #tpu.memory_space<smem>>
    %c5_249 = arith.constant 5 : index
    %c3_250 = arith.constant 3 : index
    %138 = memref.load %arg1[%c5_249, %c3_250] : memref<6x27xf32, #tpu.memory_space<smem>>
    %c5_251 = arith.constant 5 : index
    %c4_252 = arith.constant 4 : index
    %139 = memref.load %arg1[%c5_251, %c4_252] : memref<6x27xf32, #tpu.memory_space<smem>>
    %c5_253 = arith.constant 5 : index
    %c5_254 = arith.constant 5 : index
    %140 = memref.load %arg1[%c5_253, %c5_254] : memref<6x27xf32, #tpu.memory_space<smem>>
    %c5_255 = arith.constant 5 : index
    %c6_256 = arith.constant 6 : index
    %141 = memref.load %arg1[%c5_255, %c6_256] : memref<6x27xf32, #tpu.memory_space<smem>>
    %c5_257 = arith.constant 5 : index
    %c7_258 = arith.constant 7 : index
    %142 = memref.load %arg1[%c5_257, %c7_258] : memref<6x27xf32, #tpu.memory_space<smem>>
    %c5_259 = arith.constant 5 : index
    %c8_260 = arith.constant 8 : index
    %143 = memref.load %arg1[%c5_259, %c8_260] : memref<6x27xf32, #tpu.memory_space<smem>>
    %c5_261 = arith.constant 5 : index
    %c9_262 = arith.constant 9 : index
    %144 = memref.load %arg1[%c5_261, %c9_262] : memref<6x27xf32, #tpu.memory_space<smem>>
    %c5_263 = arith.constant 5 : index
    %c10_264 = arith.constant 10 : index
    %145 = memref.load %arg1[%c5_263, %c10_264] : memref<6x27xf32, #tpu.memory_space<smem>>
    %c5_265 = arith.constant 5 : index
    %c11_266 = arith.constant 11 : index
    %146 = memref.load %arg1[%c5_265, %c11_266] : memref<6x27xf32, #tpu.memory_space<smem>>
    %c5_267 = arith.constant 5 : index
    %c12_268 = arith.constant 12 : index
    %147 = memref.load %arg1[%c5_267, %c12_268] : memref<6x27xf32, #tpu.memory_space<smem>>
    %c5_269 = arith.constant 5 : index
    %c13_270 = arith.constant 13 : index
    %148 = memref.load %arg1[%c5_269, %c13_270] : memref<6x27xf32, #tpu.memory_space<smem>>
    %c5_271 = arith.constant 5 : index
    %c14_272 = arith.constant 14 : index
    %149 = memref.load %arg1[%c5_271, %c14_272] : memref<6x27xf32, #tpu.memory_space<smem>>
    %c5_273 = arith.constant 5 : index
    %c15_274 = arith.constant 15 : index
    %150 = memref.load %arg1[%c5_273, %c15_274] : memref<6x27xf32, #tpu.memory_space<smem>>
    %c5_275 = arith.constant 5 : index
    %c16_276 = arith.constant 16 : index
    %151 = memref.load %arg1[%c5_275, %c16_276] : memref<6x27xf32, #tpu.memory_space<smem>>
    %c5_277 = arith.constant 5 : index
    %c17_278 = arith.constant 17 : index
    %152 = memref.load %arg1[%c5_277, %c17_278] : memref<6x27xf32, #tpu.memory_space<smem>>
    %c5_279 = arith.constant 5 : index
    %c18_280 = arith.constant 18 : index
    %153 = memref.load %arg1[%c5_279, %c18_280] : memref<6x27xf32, #tpu.memory_space<smem>>
    %c5_281 = arith.constant 5 : index
    %c19_282 = arith.constant 19 : index
    %154 = memref.load %arg1[%c5_281, %c19_282] : memref<6x27xf32, #tpu.memory_space<smem>>
    %c5_283 = arith.constant 5 : index
    %c20_284 = arith.constant 20 : index
    %155 = memref.load %arg1[%c5_283, %c20_284] : memref<6x27xf32, #tpu.memory_space<smem>>
    %c5_285 = arith.constant 5 : index
    %c21_286 = arith.constant 21 : index
    %156 = memref.load %arg1[%c5_285, %c21_286] : memref<6x27xf32, #tpu.memory_space<smem>>
    %c5_287 = arith.constant 5 : index
    %c22_288 = arith.constant 22 : index
    %157 = memref.load %arg1[%c5_287, %c22_288] : memref<6x27xf32, #tpu.memory_space<smem>>
    %c5_289 = arith.constant 5 : index
    %c23_290 = arith.constant 23 : index
    %158 = memref.load %arg1[%c5_289, %c23_290] : memref<6x27xf32, #tpu.memory_space<smem>>
    %c5_291 = arith.constant 5 : index
    %c24_292 = arith.constant 24 : index
    %159 = memref.load %arg1[%c5_291, %c24_292] : memref<6x27xf32, #tpu.memory_space<smem>>
    %c5_293 = arith.constant 5 : index
    %c25_294 = arith.constant 25 : index
    %160 = memref.load %arg1[%c5_293, %c25_294] : memref<6x27xf32, #tpu.memory_space<smem>>
    %c5_295 = arith.constant 5 : index
    %c26_296 = arith.constant 26 : index
    %161 = memref.load %arg1[%c5_295, %c26_296] : memref<6x27xf32, #tpu.memory_space<smem>>
    %c0_297 = arith.constant 0 : index
    %162 = memref.load %arg2[%c0_297] : memref<6xf32, #tpu.memory_space<smem>>
    %c1_298 = arith.constant 1 : index
    %163 = memref.load %arg2[%c1_298] : memref<6xf32, #tpu.memory_space<smem>>
    %c2_299 = arith.constant 2 : index
    %164 = memref.load %arg2[%c2_299] : memref<6xf32, #tpu.memory_space<smem>>
    %c3_300 = arith.constant 3 : index
    %165 = memref.load %arg2[%c3_300] : memref<6xf32, #tpu.memory_space<smem>>
    %c4_301 = arith.constant 4 : index
    %166 = memref.load %arg2[%c4_301] : memref<6xf32, #tpu.memory_space<smem>>
    %c5_302 = arith.constant 5 : index
    %167 = memref.load %arg2[%c5_302] : memref<6xf32, #tpu.memory_space<smem>>
    %168 = vector.broadcast %162 : f32 to vector<14x14xf32>
    %169 = vector.broadcast %163 : f32 to vector<14x14xf32>
    %170 = vector.broadcast %164 : f32 to vector<14x14xf32>
    %171 = vector.broadcast %165 : f32 to vector<14x14xf32>
    %172 = vector.broadcast %166 : f32 to vector<14x14xf32>
    %173 = vector.broadcast %167 : f32 to vector<14x14xf32>
    %c0_303 = arith.constant 0 : index
    %c0_304 = arith.constant 0 : index
    %c0_305 = arith.constant 0 : index
    %c0_306 = arith.constant 0 : index
    %174 = vector.load %arg0[%c0_303, %c0_304, %c0_305, %c0_306] : memref<2x3x16x16xf32, #tpu.memory_space<vmem>>, vector<1x1x14x14xf32>
    %175 = vector.shape_cast %174 : vector<1x1x14x14xf32> to vector<14x14xf32>
    %176 = vector.broadcast %0 : f32 to vector<14x14xf32>
    %177 = arith.mulf %176, %175 : vector<14x14xf32>
    %178 = arith.addf %168, %177 : vector<14x14xf32>
    %179 = vector.broadcast %27 : f32 to vector<14x14xf32>
    %180 = arith.mulf %179, %175 : vector<14x14xf32>
    %181 = arith.addf %169, %180 : vector<14x14xf32>
    %182 = vector.broadcast %54 : f32 to vector<14x14xf32>
    %183 = arith.mulf %182, %175 : vector<14x14xf32>
    %184 = arith.addf %170, %183 : vector<14x14xf32>
    %185 = vector.broadcast %81 : f32 to vector<14x14xf32>
    %186 = arith.mulf %185, %175 : vector<14x14xf32>
    %187 = arith.addf %171, %186 : vector<14x14xf32>
    %188 = vector.broadcast %108 : f32 to vector<14x14xf32>
    %189 = arith.mulf %188, %175 : vector<14x14xf32>
    %190 = arith.addf %172, %189 : vector<14x14xf32>
    %191 = vector.broadcast %135 : f32 to vector<14x14xf32>
    %192 = arith.mulf %191, %175 : vector<14x14xf32>
    %193 = arith.addf %173, %192 : vector<14x14xf32>
    %c0_307 = arith.constant 0 : index
    %c0_308 = arith.constant 0 : index
    %c0_309 = arith.constant 0 : index
    %c1_310 = arith.constant 1 : index
    %194 = vector.load %arg0[%c0_307, %c0_308, %c0_309, %c1_310] : memref<2x3x16x16xf32, #tpu.memory_space<vmem>>, vector<1x1x14x14xf32>
    %195 = vector.shape_cast %194 : vector<1x1x14x14xf32> to vector<14x14xf32>
    %196 = vector.broadcast %1 : f32 to vector<14x14xf32>
    %197 = arith.mulf %196, %195 : vector<14x14xf32>
    %198 = arith.addf %178, %197 : vector<14x14xf32>
    %199 = vector.broadcast %28 : f32 to vector<14x14xf32>
    %200 = arith.mulf %199, %195 : vector<14x14xf32>
    %201 = arith.addf %181, %200 : vector<14x14xf32>
    %202 = vector.broadcast %55 : f32 to vector<14x14xf32>
    %203 = arith.mulf %202, %195 : vector<14x14xf32>
    %204 = arith.addf %184, %203 : vector<14x14xf32>
    %205 = vector.broadcast %82 : f32 to vector<14x14xf32>
    %206 = arith.mulf %205, %195 : vector<14x14xf32>
    %207 = arith.addf %187, %206 : vector<14x14xf32>
    %208 = vector.broadcast %109 : f32 to vector<14x14xf32>
    %209 = arith.mulf %208, %195 : vector<14x14xf32>
    %210 = arith.addf %190, %209 : vector<14x14xf32>
    %211 = vector.broadcast %136 : f32 to vector<14x14xf32>
    %212 = arith.mulf %211, %195 : vector<14x14xf32>
    %213 = arith.addf %193, %212 : vector<14x14xf32>
    %c0_311 = arith.constant 0 : index
    %c0_312 = arith.constant 0 : index
    %c0_313 = arith.constant 0 : index
    %c2_314 = arith.constant 2 : index
    %214 = vector.load %arg0[%c0_311, %c0_312, %c0_313, %c2_314] : memref<2x3x16x16xf32, #tpu.memory_space<vmem>>, vector<1x1x14x14xf32>
    %215 = vector.shape_cast %214 : vector<1x1x14x14xf32> to vector<14x14xf32>
    %216 = vector.broadcast %2 : f32 to vector<14x14xf32>
    %217 = arith.mulf %216, %215 : vector<14x14xf32>
    %218 = arith.addf %198, %217 : vector<14x14xf32>
    %219 = vector.broadcast %29 : f32 to vector<14x14xf32>
    %220 = arith.mulf %219, %215 : vector<14x14xf32>
    %221 = arith.addf %201, %220 : vector<14x14xf32>
    %222 = vector.broadcast %56 : f32 to vector<14x14xf32>
    %223 = arith.mulf %222, %215 : vector<14x14xf32>
    %224 = arith.addf %204, %223 : vector<14x14xf32>
    %225 = vector.broadcast %83 : f32 to vector<14x14xf32>
    %226 = arith.mulf %225, %215 : vector<14x14xf32>
    %227 = arith.addf %207, %226 : vector<14x14xf32>
    %228 = vector.broadcast %110 : f32 to vector<14x14xf32>
    %229 = arith.mulf %228, %215 : vector<14x14xf32>
    %230 = arith.addf %210, %229 : vector<14x14xf32>
    %231 = vector.broadcast %137 : f32 to vector<14x14xf32>
    %232 = arith.mulf %231, %215 : vector<14x14xf32>
    %233 = arith.addf %213, %232 : vector<14x14xf32>
    %c0_315 = arith.constant 0 : index
    %c0_316 = arith.constant 0 : index
    %c1_317 = arith.constant 1 : index
    %c0_318 = arith.constant 0 : index
    %234 = vector.load %arg0[%c0_315, %c0_316, %c1_317, %c0_318] : memref<2x3x16x16xf32, #tpu.memory_space<vmem>>, vector<1x1x14x14xf32>
    %235 = vector.shape_cast %234 : vector<1x1x14x14xf32> to vector<14x14xf32>
    %236 = vector.broadcast %3 : f32 to vector<14x14xf32>
    %237 = arith.mulf %236, %235 : vector<14x14xf32>
    %238 = arith.addf %218, %237 : vector<14x14xf32>
    %239 = vector.broadcast %30 : f32 to vector<14x14xf32>
    %240 = arith.mulf %239, %235 : vector<14x14xf32>
    %241 = arith.addf %221, %240 : vector<14x14xf32>
    %242 = vector.broadcast %57 : f32 to vector<14x14xf32>
    %243 = arith.mulf %242, %235 : vector<14x14xf32>
    %244 = arith.addf %224, %243 : vector<14x14xf32>
    %245 = vector.broadcast %84 : f32 to vector<14x14xf32>
    %246 = arith.mulf %245, %235 : vector<14x14xf32>
    %247 = arith.addf %227, %246 : vector<14x14xf32>
    %248 = vector.broadcast %111 : f32 to vector<14x14xf32>
    %249 = arith.mulf %248, %235 : vector<14x14xf32>
    %250 = arith.addf %230, %249 : vector<14x14xf32>
    %251 = vector.broadcast %138 : f32 to vector<14x14xf32>
    %252 = arith.mulf %251, %235 : vector<14x14xf32>
    %253 = arith.addf %233, %252 : vector<14x14xf32>
    %c0_319 = arith.constant 0 : index
    %c0_320 = arith.constant 0 : index
    %c1_321 = arith.constant 1 : index
    %c1_322 = arith.constant 1 : index
    %254 = vector.load %arg0[%c0_319, %c0_320, %c1_321, %c1_322] : memref<2x3x16x16xf32, #tpu.memory_space<vmem>>, vector<1x1x14x14xf32>
    %255 = vector.shape_cast %254 : vector<1x1x14x14xf32> to vector<14x14xf32>
    %256 = vector.broadcast %4 : f32 to vector<14x14xf32>
    %257 = arith.mulf %256, %255 : vector<14x14xf32>
    %258 = arith.addf %238, %257 : vector<14x14xf32>
    %259 = vector.broadcast %31 : f32 to vector<14x14xf32>
    %260 = arith.mulf %259, %255 : vector<14x14xf32>
    %261 = arith.addf %241, %260 : vector<14x14xf32>
    %262 = vector.broadcast %58 : f32 to vector<14x14xf32>
    %263 = arith.mulf %262, %255 : vector<14x14xf32>
    %264 = arith.addf %244, %263 : vector<14x14xf32>
    %265 = vector.broadcast %85 : f32 to vector<14x14xf32>
    %266 = arith.mulf %265, %255 : vector<14x14xf32>
    %267 = arith.addf %247, %266 : vector<14x14xf32>
    %268 = vector.broadcast %112 : f32 to vector<14x14xf32>
    %269 = arith.mulf %268, %255 : vector<14x14xf32>
    %270 = arith.addf %250, %269 : vector<14x14xf32>
    %271 = vector.broadcast %139 : f32 to vector<14x14xf32>
    %272 = arith.mulf %271, %255 : vector<14x14xf32>
    %273 = arith.addf %253, %272 : vector<14x14xf32>
    %c0_323 = arith.constant 0 : index
    %c0_324 = arith.constant 0 : index
    %c1_325 = arith.constant 1 : index
    %c2_326 = arith.constant 2 : index
    %274 = vector.load %arg0[%c0_323, %c0_324, %c1_325, %c2_326] : memref<2x3x16x16xf32, #tpu.memory_space<vmem>>, vector<1x1x14x14xf32>
    %275 = vector.shape_cast %274 : vector<1x1x14x14xf32> to vector<14x14xf32>
    %276 = vector.broadcast %5 : f32 to vector<14x14xf32>
    %277 = arith.mulf %276, %275 : vector<14x14xf32>
    %278 = arith.addf %258, %277 : vector<14x14xf32>
    %279 = vector.broadcast %32 : f32 to vector<14x14xf32>
    %280 = arith.mulf %279, %275 : vector<14x14xf32>
    %281 = arith.addf %261, %280 : vector<14x14xf32>
    %282 = vector.broadcast %59 : f32 to vector<14x14xf32>
    %283 = arith.mulf %282, %275 : vector<14x14xf32>
    %284 = arith.addf %264, %283 : vector<14x14xf32>
    %285 = vector.broadcast %86 : f32 to vector<14x14xf32>
    %286 = arith.mulf %285, %275 : vector<14x14xf32>
    %287 = arith.addf %267, %286 : vector<14x14xf32>
    %288 = vector.broadcast %113 : f32 to vector<14x14xf32>
    %289 = arith.mulf %288, %275 : vector<14x14xf32>
    %290 = arith.addf %270, %289 : vector<14x14xf32>
    %291 = vector.broadcast %140 : f32 to vector<14x14xf32>
    %292 = arith.mulf %291, %275 : vector<14x14xf32>
    %293 = arith.addf %273, %292 : vector<14x14xf32>
    %c0_327 = arith.constant 0 : index
    %c0_328 = arith.constant 0 : index
    %c2_329 = arith.constant 2 : index
    %c0_330 = arith.constant 0 : index
    %294 = vector.load %arg0[%c0_327, %c0_328, %c2_329, %c0_330] : memref<2x3x16x16xf32, #tpu.memory_space<vmem>>, vector<1x1x14x14xf32>
    %295 = vector.shape_cast %294 : vector<1x1x14x14xf32> to vector<14x14xf32>
    %296 = vector.broadcast %6 : f32 to vector<14x14xf32>
    %297 = arith.mulf %296, %295 : vector<14x14xf32>
    %298 = arith.addf %278, %297 : vector<14x14xf32>
    %299 = vector.broadcast %33 : f32 to vector<14x14xf32>
    %300 = arith.mulf %299, %295 : vector<14x14xf32>
    %301 = arith.addf %281, %300 : vector<14x14xf32>
    %302 = vector.broadcast %60 : f32 to vector<14x14xf32>
    %303 = arith.mulf %302, %295 : vector<14x14xf32>
    %304 = arith.addf %284, %303 : vector<14x14xf32>
    %305 = vector.broadcast %87 : f32 to vector<14x14xf32>
    %306 = arith.mulf %305, %295 : vector<14x14xf32>
    %307 = arith.addf %287, %306 : vector<14x14xf32>
    %308 = vector.broadcast %114 : f32 to vector<14x14xf32>
    %309 = arith.mulf %308, %295 : vector<14x14xf32>
    %310 = arith.addf %290, %309 : vector<14x14xf32>
    %311 = vector.broadcast %141 : f32 to vector<14x14xf32>
    %312 = arith.mulf %311, %295 : vector<14x14xf32>
    %313 = arith.addf %293, %312 : vector<14x14xf32>
    %c0_331 = arith.constant 0 : index
    %c0_332 = arith.constant 0 : index
    %c2_333 = arith.constant 2 : index
    %c1_334 = arith.constant 1 : index
    %314 = vector.load %arg0[%c0_331, %c0_332, %c2_333, %c1_334] : memref<2x3x16x16xf32, #tpu.memory_space<vmem>>, vector<1x1x14x14xf32>
    %315 = vector.shape_cast %314 : vector<1x1x14x14xf32> to vector<14x14xf32>
    %316 = vector.broadcast %7 : f32 to vector<14x14xf32>
    %317 = arith.mulf %316, %315 : vector<14x14xf32>
    %318 = arith.addf %298, %317 : vector<14x14xf32>
    %319 = vector.broadcast %34 : f32 to vector<14x14xf32>
    %320 = arith.mulf %319, %315 : vector<14x14xf32>
    %321 = arith.addf %301, %320 : vector<14x14xf32>
    %322 = vector.broadcast %61 : f32 to vector<14x14xf32>
    %323 = arith.mulf %322, %315 : vector<14x14xf32>
    %324 = arith.addf %304, %323 : vector<14x14xf32>
    %325 = vector.broadcast %88 : f32 to vector<14x14xf32>
    %326 = arith.mulf %325, %315 : vector<14x14xf32>
    %327 = arith.addf %307, %326 : vector<14x14xf32>
    %328 = vector.broadcast %115 : f32 to vector<14x14xf32>
    %329 = arith.mulf %328, %315 : vector<14x14xf32>
    %330 = arith.addf %310, %329 : vector<14x14xf32>
    %331 = vector.broadcast %142 : f32 to vector<14x14xf32>
    %332 = arith.mulf %331, %315 : vector<14x14xf32>
    %333 = arith.addf %313, %332 : vector<14x14xf32>
    %c0_335 = arith.constant 0 : index
    %c0_336 = arith.constant 0 : index
    %c2_337 = arith.constant 2 : index
    %c2_338 = arith.constant 2 : index
    %334 = vector.load %arg0[%c0_335, %c0_336, %c2_337, %c2_338] : memref<2x3x16x16xf32, #tpu.memory_space<vmem>>, vector<1x1x14x14xf32>
    %335 = vector.shape_cast %334 : vector<1x1x14x14xf32> to vector<14x14xf32>
    %336 = vector.broadcast %8 : f32 to vector<14x14xf32>
    %337 = arith.mulf %336, %335 : vector<14x14xf32>
    %338 = arith.addf %318, %337 : vector<14x14xf32>
    %339 = vector.broadcast %35 : f32 to vector<14x14xf32>
    %340 = arith.mulf %339, %335 : vector<14x14xf32>
    %341 = arith.addf %321, %340 : vector<14x14xf32>
    %342 = vector.broadcast %62 : f32 to vector<14x14xf32>
    %343 = arith.mulf %342, %335 : vector<14x14xf32>
    %344 = arith.addf %324, %343 : vector<14x14xf32>
    %345 = vector.broadcast %89 : f32 to vector<14x14xf32>
    %346 = arith.mulf %345, %335 : vector<14x14xf32>
    %347 = arith.addf %327, %346 : vector<14x14xf32>
    %348 = vector.broadcast %116 : f32 to vector<14x14xf32>
    %349 = arith.mulf %348, %335 : vector<14x14xf32>
    %350 = arith.addf %330, %349 : vector<14x14xf32>
    %351 = vector.broadcast %143 : f32 to vector<14x14xf32>
    %352 = arith.mulf %351, %335 : vector<14x14xf32>
    %353 = arith.addf %333, %352 : vector<14x14xf32>
    %c0_339 = arith.constant 0 : index
    %c1_340 = arith.constant 1 : index
    %c0_341 = arith.constant 0 : index
    %c0_342 = arith.constant 0 : index
    %354 = vector.load %arg0[%c0_339, %c1_340, %c0_341, %c0_342] : memref<2x3x16x16xf32, #tpu.memory_space<vmem>>, vector<1x1x14x14xf32>
    %355 = vector.shape_cast %354 : vector<1x1x14x14xf32> to vector<14x14xf32>
    %356 = vector.broadcast %9 : f32 to vector<14x14xf32>
    %357 = arith.mulf %356, %355 : vector<14x14xf32>
    %358 = arith.addf %338, %357 : vector<14x14xf32>
    %359 = vector.broadcast %36 : f32 to vector<14x14xf32>
    %360 = arith.mulf %359, %355 : vector<14x14xf32>
    %361 = arith.addf %341, %360 : vector<14x14xf32>
    %362 = vector.broadcast %63 : f32 to vector<14x14xf32>
    %363 = arith.mulf %362, %355 : vector<14x14xf32>
    %364 = arith.addf %344, %363 : vector<14x14xf32>
    %365 = vector.broadcast %90 : f32 to vector<14x14xf32>
    %366 = arith.mulf %365, %355 : vector<14x14xf32>
    %367 = arith.addf %347, %366 : vector<14x14xf32>
    %368 = vector.broadcast %117 : f32 to vector<14x14xf32>
    %369 = arith.mulf %368, %355 : vector<14x14xf32>
    %370 = arith.addf %350, %369 : vector<14x14xf32>
    %371 = vector.broadcast %144 : f32 to vector<14x14xf32>
    %372 = arith.mulf %371, %355 : vector<14x14xf32>
    %373 = arith.addf %353, %372 : vector<14x14xf32>
    %c0_343 = arith.constant 0 : index
    %c1_344 = arith.constant 1 : index
    %c0_345 = arith.constant 0 : index
    %c1_346 = arith.constant 1 : index
    %374 = vector.load %arg0[%c0_343, %c1_344, %c0_345, %c1_346] : memref<2x3x16x16xf32, #tpu.memory_space<vmem>>, vector<1x1x14x14xf32>
    %375 = vector.shape_cast %374 : vector<1x1x14x14xf32> to vector<14x14xf32>
    %376 = vector.broadcast %10 : f32 to vector<14x14xf32>
    %377 = arith.mulf %376, %375 : vector<14x14xf32>
    %378 = arith.addf %358, %377 : vector<14x14xf32>
    %379 = vector.broadcast %37 : f32 to vector<14x14xf32>
    %380 = arith.mulf %379, %375 : vector<14x14xf32>
    %381 = arith.addf %361, %380 : vector<14x14xf32>
    %382 = vector.broadcast %64 : f32 to vector<14x14xf32>
    %383 = arith.mulf %382, %375 : vector<14x14xf32>
    %384 = arith.addf %364, %383 : vector<14x14xf32>
    %385 = vector.broadcast %91 : f32 to vector<14x14xf32>
    %386 = arith.mulf %385, %375 : vector<14x14xf32>
    %387 = arith.addf %367, %386 : vector<14x14xf32>
    %388 = vector.broadcast %118 : f32 to vector<14x14xf32>
    %389 = arith.mulf %388, %375 : vector<14x14xf32>
    %390 = arith.addf %370, %389 : vector<14x14xf32>
    %391 = vector.broadcast %145 : f32 to vector<14x14xf32>
    %392 = arith.mulf %391, %375 : vector<14x14xf32>
    %393 = arith.addf %373, %392 : vector<14x14xf32>
    %c0_347 = arith.constant 0 : index
    %c1_348 = arith.constant 1 : index
    %c0_349 = arith.constant 0 : index
    %c2_350 = arith.constant 2 : index
    %394 = vector.load %arg0[%c0_347, %c1_348, %c0_349, %c2_350] : memref<2x3x16x16xf32, #tpu.memory_space<vmem>>, vector<1x1x14x14xf32>
    %395 = vector.shape_cast %394 : vector<1x1x14x14xf32> to vector<14x14xf32>
    %396 = vector.broadcast %11 : f32 to vector<14x14xf32>
    %397 = arith.mulf %396, %395 : vector<14x14xf32>
    %398 = arith.addf %378, %397 : vector<14x14xf32>
    %399 = vector.broadcast %38 : f32 to vector<14x14xf32>
    %400 = arith.mulf %399, %395 : vector<14x14xf32>
    %401 = arith.addf %381, %400 : vector<14x14xf32>
    %402 = vector.broadcast %65 : f32 to vector<14x14xf32>
    %403 = arith.mulf %402, %395 : vector<14x14xf32>
    %404 = arith.addf %384, %403 : vector<14x14xf32>
    %405 = vector.broadcast %92 : f32 to vector<14x14xf32>
    %406 = arith.mulf %405, %395 : vector<14x14xf32>
    %407 = arith.addf %387, %406 : vector<14x14xf32>
    %408 = vector.broadcast %119 : f32 to vector<14x14xf32>
    %409 = arith.mulf %408, %395 : vector<14x14xf32>
    %410 = arith.addf %390, %409 : vector<14x14xf32>
    %411 = vector.broadcast %146 : f32 to vector<14x14xf32>
    %412 = arith.mulf %411, %395 : vector<14x14xf32>
    %413 = arith.addf %393, %412 : vector<14x14xf32>
    %c0_351 = arith.constant 0 : index
    %c1_352 = arith.constant 1 : index
    %c1_353 = arith.constant 1 : index
    %c0_354 = arith.constant 0 : index
    %414 = vector.load %arg0[%c0_351, %c1_352, %c1_353, %c0_354] : memref<2x3x16x16xf32, #tpu.memory_space<vmem>>, vector<1x1x14x14xf32>
    %415 = vector.shape_cast %414 : vector<1x1x14x14xf32> to vector<14x14xf32>
    %416 = vector.broadcast %12 : f32 to vector<14x14xf32>
    %417 = arith.mulf %416, %415 : vector<14x14xf32>
    %418 = arith.addf %398, %417 : vector<14x14xf32>
    %419 = vector.broadcast %39 : f32 to vector<14x14xf32>
    %420 = arith.mulf %419, %415 : vector<14x14xf32>
    %421 = arith.addf %401, %420 : vector<14x14xf32>
    %422 = vector.broadcast %66 : f32 to vector<14x14xf32>
    %423 = arith.mulf %422, %415 : vector<14x14xf32>
    %424 = arith.addf %404, %423 : vector<14x14xf32>
    %425 = vector.broadcast %93 : f32 to vector<14x14xf32>
    %426 = arith.mulf %425, %415 : vector<14x14xf32>
    %427 = arith.addf %407, %426 : vector<14x14xf32>
    %428 = vector.broadcast %120 : f32 to vector<14x14xf32>
    %429 = arith.mulf %428, %415 : vector<14x14xf32>
    %430 = arith.addf %410, %429 : vector<14x14xf32>
    %431 = vector.broadcast %147 : f32 to vector<14x14xf32>
    %432 = arith.mulf %431, %415 : vector<14x14xf32>
    %433 = arith.addf %413, %432 : vector<14x14xf32>
    %c0_355 = arith.constant 0 : index
    %c1_356 = arith.constant 1 : index
    %c1_357 = arith.constant 1 : index
    %c1_358 = arith.constant 1 : index
    %434 = vector.load %arg0[%c0_355, %c1_356, %c1_357, %c1_358] : memref<2x3x16x16xf32, #tpu.memory_space<vmem>>, vector<1x1x14x14xf32>
    %435 = vector.shape_cast %434 : vector<1x1x14x14xf32> to vector<14x14xf32>
    %436 = vector.broadcast %13 : f32 to vector<14x14xf32>
    %437 = arith.mulf %436, %435 : vector<14x14xf32>
    %438 = arith.addf %418, %437 : vector<14x14xf32>
    %439 = vector.broadcast %40 : f32 to vector<14x14xf32>
    %440 = arith.mulf %439, %435 : vector<14x14xf32>
    %441 = arith.addf %421, %440 : vector<14x14xf32>
    %442 = vector.broadcast %67 : f32 to vector<14x14xf32>
    %443 = arith.mulf %442, %435 : vector<14x14xf32>
    %444 = arith.addf %424, %443 : vector<14x14xf32>
    %445 = vector.broadcast %94 : f32 to vector<14x14xf32>
    %446 = arith.mulf %445, %435 : vector<14x14xf32>
    %447 = arith.addf %427, %446 : vector<14x14xf32>
    %448 = vector.broadcast %121 : f32 to vector<14x14xf32>
    %449 = arith.mulf %448, %435 : vector<14x14xf32>
    %450 = arith.addf %430, %449 : vector<14x14xf32>
    %451 = vector.broadcast %148 : f32 to vector<14x14xf32>
    %452 = arith.mulf %451, %435 : vector<14x14xf32>
    %453 = arith.addf %433, %452 : vector<14x14xf32>
    %c0_359 = arith.constant 0 : index
    %c1_360 = arith.constant 1 : index
    %c1_361 = arith.constant 1 : index
    %c2_362 = arith.constant 2 : index
    %454 = vector.load %arg0[%c0_359, %c1_360, %c1_361, %c2_362] : memref<2x3x16x16xf32, #tpu.memory_space<vmem>>, vector<1x1x14x14xf32>
    %455 = vector.shape_cast %454 : vector<1x1x14x14xf32> to vector<14x14xf32>
    %456 = vector.broadcast %14 : f32 to vector<14x14xf32>
    %457 = arith.mulf %456, %455 : vector<14x14xf32>
    %458 = arith.addf %438, %457 : vector<14x14xf32>
    %459 = vector.broadcast %41 : f32 to vector<14x14xf32>
    %460 = arith.mulf %459, %455 : vector<14x14xf32>
    %461 = arith.addf %441, %460 : vector<14x14xf32>
    %462 = vector.broadcast %68 : f32 to vector<14x14xf32>
    %463 = arith.mulf %462, %455 : vector<14x14xf32>
    %464 = arith.addf %444, %463 : vector<14x14xf32>
    %465 = vector.broadcast %95 : f32 to vector<14x14xf32>
    %466 = arith.mulf %465, %455 : vector<14x14xf32>
    %467 = arith.addf %447, %466 : vector<14x14xf32>
    %468 = vector.broadcast %122 : f32 to vector<14x14xf32>
    %469 = arith.mulf %468, %455 : vector<14x14xf32>
    %470 = arith.addf %450, %469 : vector<14x14xf32>
    %471 = vector.broadcast %149 : f32 to vector<14x14xf32>
    %472 = arith.mulf %471, %455 : vector<14x14xf32>
    %473 = arith.addf %453, %472 : vector<14x14xf32>
    %c0_363 = arith.constant 0 : index
    %c1_364 = arith.constant 1 : index
    %c2_365 = arith.constant 2 : index
    %c0_366 = arith.constant 0 : index
    %474 = vector.load %arg0[%c0_363, %c1_364, %c2_365, %c0_366] : memref<2x3x16x16xf32, #tpu.memory_space<vmem>>, vector<1x1x14x14xf32>
    %475 = vector.shape_cast %474 : vector<1x1x14x14xf32> to vector<14x14xf32>
    %476 = vector.broadcast %15 : f32 to vector<14x14xf32>
    %477 = arith.mulf %476, %475 : vector<14x14xf32>
    %478 = arith.addf %458, %477 : vector<14x14xf32>
    %479 = vector.broadcast %42 : f32 to vector<14x14xf32>
    %480 = arith.mulf %479, %475 : vector<14x14xf32>
    %481 = arith.addf %461, %480 : vector<14x14xf32>
    %482 = vector.broadcast %69 : f32 to vector<14x14xf32>
    %483 = arith.mulf %482, %475 : vector<14x14xf32>
    %484 = arith.addf %464, %483 : vector<14x14xf32>
    %485 = vector.broadcast %96 : f32 to vector<14x14xf32>
    %486 = arith.mulf %485, %475 : vector<14x14xf32>
    %487 = arith.addf %467, %486 : vector<14x14xf32>
    %488 = vector.broadcast %123 : f32 to vector<14x14xf32>
    %489 = arith.mulf %488, %475 : vector<14x14xf32>
    %490 = arith.addf %470, %489 : vector<14x14xf32>
    %491 = vector.broadcast %150 : f32 to vector<14x14xf32>
    %492 = arith.mulf %491, %475 : vector<14x14xf32>
    %493 = arith.addf %473, %492 : vector<14x14xf32>
    %c0_367 = arith.constant 0 : index
    %c1_368 = arith.constant 1 : index
    %c2_369 = arith.constant 2 : index
    %c1_370 = arith.constant 1 : index
    %494 = vector.load %arg0[%c0_367, %c1_368, %c2_369, %c1_370] : memref<2x3x16x16xf32, #tpu.memory_space<vmem>>, vector<1x1x14x14xf32>
    %495 = vector.shape_cast %494 : vector<1x1x14x14xf32> to vector<14x14xf32>
    %496 = vector.broadcast %16 : f32 to vector<14x14xf32>
    %497 = arith.mulf %496, %495 : vector<14x14xf32>
    %498 = arith.addf %478, %497 : vector<14x14xf32>
    %499 = vector.broadcast %43 : f32 to vector<14x14xf32>
    %500 = arith.mulf %499, %495 : vector<14x14xf32>
    %501 = arith.addf %481, %500 : vector<14x14xf32>
    %502 = vector.broadcast %70 : f32 to vector<14x14xf32>
    %503 = arith.mulf %502, %495 : vector<14x14xf32>
    %504 = arith.addf %484, %503 : vector<14x14xf32>
    %505 = vector.broadcast %97 : f32 to vector<14x14xf32>
    %506 = arith.mulf %505, %495 : vector<14x14xf32>
    %507 = arith.addf %487, %506 : vector<14x14xf32>
    %508 = vector.broadcast %124 : f32 to vector<14x14xf32>
    %509 = arith.mulf %508, %495 : vector<14x14xf32>
    %510 = arith.addf %490, %509 : vector<14x14xf32>
    %511 = vector.broadcast %151 : f32 to vector<14x14xf32>
    %512 = arith.mulf %511, %495 : vector<14x14xf32>
    %513 = arith.addf %493, %512 : vector<14x14xf32>
    %c0_371 = arith.constant 0 : index
    %c1_372 = arith.constant 1 : index
    %c2_373 = arith.constant 2 : index
    %c2_374 = arith.constant 2 : index
    %514 = vector.load %arg0[%c0_371, %c1_372, %c2_373, %c2_374] : memref<2x3x16x16xf32, #tpu.memory_space<vmem>>, vector<1x1x14x14xf32>
    %515 = vector.shape_cast %514 : vector<1x1x14x14xf32> to vector<14x14xf32>
    %516 = vector.broadcast %17 : f32 to vector<14x14xf32>
    %517 = arith.mulf %516, %515 : vector<14x14xf32>
    %518 = arith.addf %498, %517 : vector<14x14xf32>
    %519 = vector.broadcast %44 : f32 to vector<14x14xf32>
    %520 = arith.mulf %519, %515 : vector<14x14xf32>
    %521 = arith.addf %501, %520 : vector<14x14xf32>
    %522 = vector.broadcast %71 : f32 to vector<14x14xf32>
    %523 = arith.mulf %522, %515 : vector<14x14xf32>
    %524 = arith.addf %504, %523 : vector<14x14xf32>
    %525 = vector.broadcast %98 : f32 to vector<14x14xf32>
    %526 = arith.mulf %525, %515 : vector<14x14xf32>
    %527 = arith.addf %507, %526 : vector<14x14xf32>
    %528 = vector.broadcast %125 : f32 to vector<14x14xf32>
    %529 = arith.mulf %528, %515 : vector<14x14xf32>
    %530 = arith.addf %510, %529 : vector<14x14xf32>
    %531 = vector.broadcast %152 : f32 to vector<14x14xf32>
    %532 = arith.mulf %531, %515 : vector<14x14xf32>
    %533 = arith.addf %513, %532 : vector<14x14xf32>
    %c0_375 = arith.constant 0 : index
    %c2_376 = arith.constant 2 : index
    %c0_377 = arith.constant 0 : index
    %c0_378 = arith.constant 0 : index
    %534 = vector.load %arg0[%c0_375, %c2_376, %c0_377, %c0_378] : memref<2x3x16x16xf32, #tpu.memory_space<vmem>>, vector<1x1x14x14xf32>
    %535 = vector.shape_cast %534 : vector<1x1x14x14xf32> to vector<14x14xf32>
    %536 = vector.broadcast %18 : f32 to vector<14x14xf32>
    %537 = arith.mulf %536, %535 : vector<14x14xf32>
    %538 = arith.addf %518, %537 : vector<14x14xf32>
    %539 = vector.broadcast %45 : f32 to vector<14x14xf32>
    %540 = arith.mulf %539, %535 : vector<14x14xf32>
    %541 = arith.addf %521, %540 : vector<14x14xf32>
    %542 = vector.broadcast %72 : f32 to vector<14x14xf32>
    %543 = arith.mulf %542, %535 : vector<14x14xf32>
    %544 = arith.addf %524, %543 : vector<14x14xf32>
    %545 = vector.broadcast %99 : f32 to vector<14x14xf32>
    %546 = arith.mulf %545, %535 : vector<14x14xf32>
    %547 = arith.addf %527, %546 : vector<14x14xf32>
    %548 = vector.broadcast %126 : f32 to vector<14x14xf32>
    %549 = arith.mulf %548, %535 : vector<14x14xf32>
    %550 = arith.addf %530, %549 : vector<14x14xf32>
    %551 = vector.broadcast %153 : f32 to vector<14x14xf32>
    %552 = arith.mulf %551, %535 : vector<14x14xf32>
    %553 = arith.addf %533, %552 : vector<14x14xf32>
    %c0_379 = arith.constant 0 : index
    %c2_380 = arith.constant 2 : index
    %c0_381 = arith.constant 0 : index
    %c1_382 = arith.constant 1 : index
    %554 = vector.load %arg0[%c0_379, %c2_380, %c0_381, %c1_382] : memref<2x3x16x16xf32, #tpu.memory_space<vmem>>, vector<1x1x14x14xf32>
    %555 = vector.shape_cast %554 : vector<1x1x14x14xf32> to vector<14x14xf32>
    %556 = vector.broadcast %19 : f32 to vector<14x14xf32>
    %557 = arith.mulf %556, %555 : vector<14x14xf32>
    %558 = arith.addf %538, %557 : vector<14x14xf32>
    %559 = vector.broadcast %46 : f32 to vector<14x14xf32>
    %560 = arith.mulf %559, %555 : vector<14x14xf32>
    %561 = arith.addf %541, %560 : vector<14x14xf32>
    %562 = vector.broadcast %73 : f32 to vector<14x14xf32>
    %563 = arith.mulf %562, %555 : vector<14x14xf32>
    %564 = arith.addf %544, %563 : vector<14x14xf32>
    %565 = vector.broadcast %100 : f32 to vector<14x14xf32>
    %566 = arith.mulf %565, %555 : vector<14x14xf32>
    %567 = arith.addf %547, %566 : vector<14x14xf32>
    %568 = vector.broadcast %127 : f32 to vector<14x14xf32>
    %569 = arith.mulf %568, %555 : vector<14x14xf32>
    %570 = arith.addf %550, %569 : vector<14x14xf32>
    %571 = vector.broadcast %154 : f32 to vector<14x14xf32>
    %572 = arith.mulf %571, %555 : vector<14x14xf32>
    %573 = arith.addf %553, %572 : vector<14x14xf32>
    %c0_383 = arith.constant 0 : index
    %c2_384 = arith.constant 2 : index
    %c0_385 = arith.constant 0 : index
    %c2_386 = arith.constant 2 : index
    %574 = vector.load %arg0[%c0_383, %c2_384, %c0_385, %c2_386] : memref<2x3x16x16xf32, #tpu.memory_space<vmem>>, vector<1x1x14x14xf32>
    %575 = vector.shape_cast %574 : vector<1x1x14x14xf32> to vector<14x14xf32>
    %576 = vector.broadcast %20 : f32 to vector<14x14xf32>
    %577 = arith.mulf %576, %575 : vector<14x14xf32>
    %578 = arith.addf %558, %577 : vector<14x14xf32>
    %579 = vector.broadcast %47 : f32 to vector<14x14xf32>
    %580 = arith.mulf %579, %575 : vector<14x14xf32>
    %581 = arith.addf %561, %580 : vector<14x14xf32>
    %582 = vector.broadcast %74 : f32 to vector<14x14xf32>
    %583 = arith.mulf %582, %575 : vector<14x14xf32>
    %584 = arith.addf %564, %583 : vector<14x14xf32>
    %585 = vector.broadcast %101 : f32 to vector<14x14xf32>
    %586 = arith.mulf %585, %575 : vector<14x14xf32>
    %587 = arith.addf %567, %586 : vector<14x14xf32>
    %588 = vector.broadcast %128 : f32 to vector<14x14xf32>
    %589 = arith.mulf %588, %575 : vector<14x14xf32>
    %590 = arith.addf %570, %589 : vector<14x14xf32>
    %591 = vector.broadcast %155 : f32 to vector<14x14xf32>
    %592 = arith.mulf %591, %575 : vector<14x14xf32>
    %593 = arith.addf %573, %592 : vector<14x14xf32>
    %c0_387 = arith.constant 0 : index
    %c2_388 = arith.constant 2 : index
    %c1_389 = arith.constant 1 : index
    %c0_390 = arith.constant 0 : index
    %594 = vector.load %arg0[%c0_387, %c2_388, %c1_389, %c0_390] : memref<2x3x16x16xf32, #tpu.memory_space<vmem>>, vector<1x1x14x14xf32>
    %595 = vector.shape_cast %594 : vector<1x1x14x14xf32> to vector<14x14xf32>
    %596 = vector.broadcast %21 : f32 to vector<14x14xf32>
    %597 = arith.mulf %596, %595 : vector<14x14xf32>
    %598 = arith.addf %578, %597 : vector<14x14xf32>
    %599 = vector.broadcast %48 : f32 to vector<14x14xf32>
    %600 = arith.mulf %599, %595 : vector<14x14xf32>
    %601 = arith.addf %581, %600 : vector<14x14xf32>
    %602 = vector.broadcast %75 : f32 to vector<14x14xf32>
    %603 = arith.mulf %602, %595 : vector<14x14xf32>
    %604 = arith.addf %584, %603 : vector<14x14xf32>
    %605 = vector.broadcast %102 : f32 to vector<14x14xf32>
    %606 = arith.mulf %605, %595 : vector<14x14xf32>
    %607 = arith.addf %587, %606 : vector<14x14xf32>
    %608 = vector.broadcast %129 : f32 to vector<14x14xf32>
    %609 = arith.mulf %608, %595 : vector<14x14xf32>
    %610 = arith.addf %590, %609 : vector<14x14xf32>
    %611 = vector.broadcast %156 : f32 to vector<14x14xf32>
    %612 = arith.mulf %611, %595 : vector<14x14xf32>
    %613 = arith.addf %593, %612 : vector<14x14xf32>
    %c0_391 = arith.constant 0 : index
    %c2_392 = arith.constant 2 : index
    %c1_393 = arith.constant 1 : index
    %c1_394 = arith.constant 1 : index
    %614 = vector.load %arg0[%c0_391, %c2_392, %c1_393, %c1_394] : memref<2x3x16x16xf32, #tpu.memory_space<vmem>>, vector<1x1x14x14xf32>
    %615 = vector.shape_cast %614 : vector<1x1x14x14xf32> to vector<14x14xf32>
    %616 = vector.broadcast %22 : f32 to vector<14x14xf32>
    %617 = arith.mulf %616, %615 : vector<14x14xf32>
    %618 = arith.addf %598, %617 : vector<14x14xf32>
    %619 = vector.broadcast %49 : f32 to vector<14x14xf32>
    %620 = arith.mulf %619, %615 : vector<14x14xf32>
    %621 = arith.addf %601, %620 : vector<14x14xf32>
    %622 = vector.broadcast %76 : f32 to vector<14x14xf32>
    %623 = arith.mulf %622, %615 : vector<14x14xf32>
    %624 = arith.addf %604, %623 : vector<14x14xf32>
    %625 = vector.broadcast %103 : f32 to vector<14x14xf32>
    %626 = arith.mulf %625, %615 : vector<14x14xf32>
    %627 = arith.addf %607, %626 : vector<14x14xf32>
    %628 = vector.broadcast %130 : f32 to vector<14x14xf32>
    %629 = arith.mulf %628, %615 : vector<14x14xf32>
    %630 = arith.addf %610, %629 : vector<14x14xf32>
    %631 = vector.broadcast %157 : f32 to vector<14x14xf32>
    %632 = arith.mulf %631, %615 : vector<14x14xf32>
    %633 = arith.addf %613, %632 : vector<14x14xf32>
    %c0_395 = arith.constant 0 : index
    %c2_396 = arith.constant 2 : index
    %c1_397 = arith.constant 1 : index
    %c2_398 = arith.constant 2 : index
    %634 = vector.load %arg0[%c0_395, %c2_396, %c1_397, %c2_398] : memref<2x3x16x16xf32, #tpu.memory_space<vmem>>, vector<1x1x14x14xf32>
    %635 = vector.shape_cast %634 : vector<1x1x14x14xf32> to vector<14x14xf32>
    %636 = vector.broadcast %23 : f32 to vector<14x14xf32>
    %637 = arith.mulf %636, %635 : vector<14x14xf32>
    %638 = arith.addf %618, %637 : vector<14x14xf32>
    %639 = vector.broadcast %50 : f32 to vector<14x14xf32>
    %640 = arith.mulf %639, %635 : vector<14x14xf32>
    %641 = arith.addf %621, %640 : vector<14x14xf32>
    %642 = vector.broadcast %77 : f32 to vector<14x14xf32>
    %643 = arith.mulf %642, %635 : vector<14x14xf32>
    %644 = arith.addf %624, %643 : vector<14x14xf32>
    %645 = vector.broadcast %104 : f32 to vector<14x14xf32>
    %646 = arith.mulf %645, %635 : vector<14x14xf32>
    %647 = arith.addf %627, %646 : vector<14x14xf32>
    %648 = vector.broadcast %131 : f32 to vector<14x14xf32>
    %649 = arith.mulf %648, %635 : vector<14x14xf32>
    %650 = arith.addf %630, %649 : vector<14x14xf32>
    %651 = vector.broadcast %158 : f32 to vector<14x14xf32>
    %652 = arith.mulf %651, %635 : vector<14x14xf32>
    %653 = arith.addf %633, %652 : vector<14x14xf32>
    %c0_399 = arith.constant 0 : index
    %c2_400 = arith.constant 2 : index
    %c2_401 = arith.constant 2 : index
    %c0_402 = arith.constant 0 : index
    %654 = vector.load %arg0[%c0_399, %c2_400, %c2_401, %c0_402] : memref<2x3x16x16xf32, #tpu.memory_space<vmem>>, vector<1x1x14x14xf32>
    %655 = vector.shape_cast %654 : vector<1x1x14x14xf32> to vector<14x14xf32>
    %656 = vector.broadcast %24 : f32 to vector<14x14xf32>
    %657 = arith.mulf %656, %655 : vector<14x14xf32>
    %658 = arith.addf %638, %657 : vector<14x14xf32>
    %659 = vector.broadcast %51 : f32 to vector<14x14xf32>
    %660 = arith.mulf %659, %655 : vector<14x14xf32>
    %661 = arith.addf %641, %660 : vector<14x14xf32>
    %662 = vector.broadcast %78 : f32 to vector<14x14xf32>
    %663 = arith.mulf %662, %655 : vector<14x14xf32>
    %664 = arith.addf %644, %663 : vector<14x14xf32>
    %665 = vector.broadcast %105 : f32 to vector<14x14xf32>
    %666 = arith.mulf %665, %655 : vector<14x14xf32>
    %667 = arith.addf %647, %666 : vector<14x14xf32>
    %668 = vector.broadcast %132 : f32 to vector<14x14xf32>
    %669 = arith.mulf %668, %655 : vector<14x14xf32>
    %670 = arith.addf %650, %669 : vector<14x14xf32>
    %671 = vector.broadcast %159 : f32 to vector<14x14xf32>
    %672 = arith.mulf %671, %655 : vector<14x14xf32>
    %673 = arith.addf %653, %672 : vector<14x14xf32>
    %c0_403 = arith.constant 0 : index
    %c2_404 = arith.constant 2 : index
    %c2_405 = arith.constant 2 : index
    %c1_406 = arith.constant 1 : index
    %674 = vector.load %arg0[%c0_403, %c2_404, %c2_405, %c1_406] : memref<2x3x16x16xf32, #tpu.memory_space<vmem>>, vector<1x1x14x14xf32>
    %675 = vector.shape_cast %674 : vector<1x1x14x14xf32> to vector<14x14xf32>
    %676 = vector.broadcast %25 : f32 to vector<14x14xf32>
    %677 = arith.mulf %676, %675 : vector<14x14xf32>
    %678 = arith.addf %658, %677 : vector<14x14xf32>
    %679 = vector.broadcast %52 : f32 to vector<14x14xf32>
    %680 = arith.mulf %679, %675 : vector<14x14xf32>
    %681 = arith.addf %661, %680 : vector<14x14xf32>
    %682 = vector.broadcast %79 : f32 to vector<14x14xf32>
    %683 = arith.mulf %682, %675 : vector<14x14xf32>
    %684 = arith.addf %664, %683 : vector<14x14xf32>
    %685 = vector.broadcast %106 : f32 to vector<14x14xf32>
    %686 = arith.mulf %685, %675 : vector<14x14xf32>
    %687 = arith.addf %667, %686 : vector<14x14xf32>
    %688 = vector.broadcast %133 : f32 to vector<14x14xf32>
    %689 = arith.mulf %688, %675 : vector<14x14xf32>
    %690 = arith.addf %670, %689 : vector<14x14xf32>
    %691 = vector.broadcast %160 : f32 to vector<14x14xf32>
    %692 = arith.mulf %691, %675 : vector<14x14xf32>
    %693 = arith.addf %673, %692 : vector<14x14xf32>
    %c0_407 = arith.constant 0 : index
    %c2_408 = arith.constant 2 : index
    %c2_409 = arith.constant 2 : index
    %c2_410 = arith.constant 2 : index
    %694 = vector.load %arg0[%c0_407, %c2_408, %c2_409, %c2_410] : memref<2x3x16x16xf32, #tpu.memory_space<vmem>>, vector<1x1x14x14xf32>
    %695 = vector.shape_cast %694 : vector<1x1x14x14xf32> to vector<14x14xf32>
    %696 = vector.broadcast %26 : f32 to vector<14x14xf32>
    %697 = arith.mulf %696, %695 : vector<14x14xf32>
    %698 = arith.addf %678, %697 : vector<14x14xf32>
    %699 = vector.broadcast %53 : f32 to vector<14x14xf32>
    %700 = arith.mulf %699, %695 : vector<14x14xf32>
    %701 = arith.addf %681, %700 : vector<14x14xf32>
    %702 = vector.broadcast %80 : f32 to vector<14x14xf32>
    %703 = arith.mulf %702, %695 : vector<14x14xf32>
    %704 = arith.addf %684, %703 : vector<14x14xf32>
    %705 = vector.broadcast %107 : f32 to vector<14x14xf32>
    %706 = arith.mulf %705, %695 : vector<14x14xf32>
    %707 = arith.addf %687, %706 : vector<14x14xf32>
    %708 = vector.broadcast %134 : f32 to vector<14x14xf32>
    %709 = arith.mulf %708, %695 : vector<14x14xf32>
    %710 = arith.addf %690, %709 : vector<14x14xf32>
    %711 = vector.broadcast %161 : f32 to vector<14x14xf32>
    %712 = arith.mulf %711, %695 : vector<14x14xf32>
    %713 = arith.addf %693, %712 : vector<14x14xf32>
    %c0_411 = arith.constant 0 : index
    %c0_412 = arith.constant 0 : index
    %c0_413 = arith.constant 0 : index
    %c0_414 = arith.constant 0 : index
    %714 = vector.load %arg3[%c0_411, %c0_412, %c0_413, %c0_414] : memref<2x6x14x14xf32, #tpu.memory_space<vmem>>, vector<1x1x14x14xf32>
    %715 = vector.shape_cast %714 : vector<1x1x14x14xf32> to vector<14x14xf32>
    %716 = vector.shape_cast %698 : vector<14x14xf32> to vector<1x1x14x14xf32>
    tpu.vector_store %arg3[%c0_411, %c0_412, %c0_413, %c0_414], %716 {strides = array<i32>} : memref<2x6x14x14xf32, #tpu.memory_space<vmem>>, vector<1x1x14x14xf32>,
    %c0_415 = arith.constant 0 : index
    %c1_416 = arith.constant 1 : index
    %c0_417 = arith.constant 0 : index
    %c0_418 = arith.constant 0 : index
    %717 = vector.load %arg3[%c0_415, %c1_416, %c0_417, %c0_418] : memref<2x6x14x14xf32, #tpu.memory_space<vmem>>, vector<1x1x14x14xf32>
    %718 = vector.shape_cast %717 : vector<1x1x14x14xf32> to vector<14x14xf32>
    %719 = vector.shape_cast %701 : vector<14x14xf32> to vector<1x1x14x14xf32>
    tpu.vector_store %arg3[%c0_415, %c1_416, %c0_417, %c0_418], %719 {strides = array<i32>} : memref<2x6x14x14xf32, #tpu.memory_space<vmem>>, vector<1x1x14x14xf32>,
    %c0_419 = arith.constant 0 : index
    %c2_420 = arith.constant 2 : index
    %c0_421 = arith.constant 0 : index
    %c0_422 = arith.constant 0 : index
    %720 = vector.load %arg3[%c0_419, %c2_420, %c0_421, %c0_422] : memref<2x6x14x14xf32, #tpu.memory_space<vmem>>, vector<1x1x14x14xf32>
    %721 = vector.shape_cast %720 : vector<1x1x14x14xf32> to vector<14x14xf32>
    %722 = vector.shape_cast %704 : vector<14x14xf32> to vector<1x1x14x14xf32>
    tpu.vector_store %arg3[%c0_419, %c2_420, %c0_421, %c0_422], %722 {strides = array<i32>} : memref<2x6x14x14xf32, #tpu.memory_space<vmem>>, vector<1x1x14x14xf32>,
    %c0_423 = arith.constant 0 : index
    %c3_424 = arith.constant 3 : index
    %c0_425 = arith.constant 0 : index
    %c0_426 = arith.constant 0 : index
    %723 = vector.load %arg3[%c0_423, %c3_424, %c0_425, %c0_426] : memref<2x6x14x14xf32, #tpu.memory_space<vmem>>, vector<1x1x14x14xf32>
    %724 = vector.shape_cast %723 : vector<1x1x14x14xf32> to vector<14x14xf32>
    %725 = vector.shape_cast %707 : vector<14x14xf32> to vector<1x1x14x14xf32>
    tpu.vector_store %arg3[%c0_423, %c3_424, %c0_425, %c0_426], %725 {strides = array<i32>} : memref<2x6x14x14xf32, #tpu.memory_space<vmem>>, vector<1x1x14x14xf32>,
    %c0_427 = arith.constant 0 : index
    %c4_428 = arith.constant 4 : index
    %c0_429 = arith.constant 0 : index
    %c0_430 = arith.constant 0 : index
    %726 = vector.load %arg3[%c0_427, %c4_428, %c0_429, %c0_430] : memref<2x6x14x14xf32, #tpu.memory_space<vmem>>, vector<1x1x14x14xf32>
    %727 = vector.shape_cast %726 : vector<1x1x14x14xf32> to vector<14x14xf32>
    %728 = vector.shape_cast %710 : vector<14x14xf32> to vector<1x1x14x14xf32>
    tpu.vector_store %arg3[%c0_427, %c4_428, %c0_429, %c0_430], %728 {strides = array<i32>} : memref<2x6x14x14xf32, #tpu.memory_space<vmem>>, vector<1x1x14x14xf32>,
    %c0_431 = arith.constant 0 : index
    %c5_432 = arith.constant 5 : index
    %c0_433 = arith.constant 0 : index
    %c0_434 = arith.constant 0 : index
    %729 = vector.load %arg3[%c0_431, %c5_432, %c0_433, %c0_434] : memref<2x6x14x14xf32, #tpu.memory_space<vmem>>, vector<1x1x14x14xf32>
    %730 = vector.shape_cast %729 : vector<1x1x14x14xf32> to vector<14x14xf32>
    %731 = vector.shape_cast %713 : vector<14x14xf32> to vector<1x1x14x14xf32>
    tpu.vector_store %arg3[%c0_431, %c5_432, %c0_433, %c0_434], %731 {strides = array<i32>} : memref<2x6x14x14xf32, #tpu.memory_space<vmem>>, vector<1x1x14x14xf32>,
    %732 = vector.broadcast %162 : f32 to vector<14x14xf32>
    %733 = vector.broadcast %163 : f32 to vector<14x14xf32>
    %734 = vector.broadcast %164 : f32 to vector<14x14xf32>
    %735 = vector.broadcast %165 : f32 to vector<14x14xf32>
    %736 = vector.broadcast %166 : f32 to vector<14x14xf32>
    %737 = vector.broadcast %167 : f32 to vector<14x14xf32>
    %c1_435 = arith.constant 1 : index
    %c0_436 = arith.constant 0 : index
    %c0_437 = arith.constant 0 : index
    %c0_438 = arith.constant 0 : index
    %738 = vector.load %arg0[%c1_435, %c0_436, %c0_437, %c0_438] : memref<2x3x16x16xf32, #tpu.memory_space<vmem>>, vector<1x1x14x14xf32>
    %739 = vector.shape_cast %738 : vector<1x1x14x14xf32> to vector<14x14xf32>
    %740 = vector.broadcast %0 : f32 to vector<14x14xf32>
    %741 = arith.mulf %740, %739 : vector<14x14xf32>
    %742 = arith.addf %732, %741 : vector<14x14xf32>
    %743 = vector.broadcast %27 : f32 to vector<14x14xf32>
    %744 = arith.mulf %743, %739 : vector<14x14xf32>
    %745 = arith.addf %733, %744 : vector<14x14xf32>
    %746 = vector.broadcast %54 : f32 to vector<14x14xf32>
    %747 = arith.mulf %746, %739 : vector<14x14xf32>
    %748 = arith.addf %734, %747 : vector<14x14xf32>
    %749 = vector.broadcast %81 : f32 to vector<14x14xf32>
    %750 = arith.mulf %749, %739 : vector<14x14xf32>
    %751 = arith.addf %735, %750 : vector<14x14xf32>
    %752 = vector.broadcast %108 : f32 to vector<14x14xf32>
    %753 = arith.mulf %752, %739 : vector<14x14xf32>
    %754 = arith.addf %736, %753 : vector<14x14xf32>
    %755 = vector.broadcast %135 : f32 to vector<14x14xf32>
    %756 = arith.mulf %755, %739 : vector<14x14xf32>
    %757 = arith.addf %737, %756 : vector<14x14xf32>
    %c1_439 = arith.constant 1 : index
    %c0_440 = arith.constant 0 : index
    %c0_441 = arith.constant 0 : index
    %c1_442 = arith.constant 1 : index
    %758 = vector.load %arg0[%c1_439, %c0_440, %c0_441, %c1_442] : memref<2x3x16x16xf32, #tpu.memory_space<vmem>>, vector<1x1x14x14xf32>
    %759 = vector.shape_cast %758 : vector<1x1x14x14xf32> to vector<14x14xf32>
    %760 = vector.broadcast %1 : f32 to vector<14x14xf32>
    %761 = arith.mulf %760, %759 : vector<14x14xf32>
    %762 = arith.addf %742, %761 : vector<14x14xf32>
    %763 = vector.broadcast %28 : f32 to vector<14x14xf32>
    %764 = arith.mulf %763, %759 : vector<14x14xf32>
    %765 = arith.addf %745, %764 : vector<14x14xf32>
    %766 = vector.broadcast %55 : f32 to vector<14x14xf32>
    %767 = arith.mulf %766, %759 : vector<14x14xf32>
    %768 = arith.addf %748, %767 : vector<14x14xf32>
    %769 = vector.broadcast %82 : f32 to vector<14x14xf32>
    %770 = arith.mulf %769, %759 : vector<14x14xf32>
    %771 = arith.addf %751, %770 : vector<14x14xf32>
    %772 = vector.broadcast %109 : f32 to vector<14x14xf32>
    %773 = arith.mulf %772, %759 : vector<14x14xf32>
    %774 = arith.addf %754, %773 : vector<14x14xf32>
    %775 = vector.broadcast %136 : f32 to vector<14x14xf32>
    %776 = arith.mulf %775, %759 : vector<14x14xf32>
    %777 = arith.addf %757, %776 : vector<14x14xf32>
    %c1_443 = arith.constant 1 : index
    %c0_444 = arith.constant 0 : index
    %c0_445 = arith.constant 0 : index
    %c2_446 = arith.constant 2 : index
    %778 = vector.load %arg0[%c1_443, %c0_444, %c0_445, %c2_446] : memref<2x3x16x16xf32, #tpu.memory_space<vmem>>, vector<1x1x14x14xf32>
    %779 = vector.shape_cast %778 : vector<1x1x14x14xf32> to vector<14x14xf32>
    %780 = vector.broadcast %2 : f32 to vector<14x14xf32>
    %781 = arith.mulf %780, %779 : vector<14x14xf32>
    %782 = arith.addf %762, %781 : vector<14x14xf32>
    %783 = vector.broadcast %29 : f32 to vector<14x14xf32>
    %784 = arith.mulf %783, %779 : vector<14x14xf32>
    %785 = arith.addf %765, %784 : vector<14x14xf32>
    %786 = vector.broadcast %56 : f32 to vector<14x14xf32>
    %787 = arith.mulf %786, %779 : vector<14x14xf32>
    %788 = arith.addf %768, %787 : vector<14x14xf32>
    %789 = vector.broadcast %83 : f32 to vector<14x14xf32>
    %790 = arith.mulf %789, %779 : vector<14x14xf32>
    %791 = arith.addf %771, %790 : vector<14x14xf32>
    %792 = vector.broadcast %110 : f32 to vector<14x14xf32>
    %793 = arith.mulf %792, %779 : vector<14x14xf32>
    %794 = arith.addf %774, %793 : vector<14x14xf32>
    %795 = vector.broadcast %137 : f32 to vector<14x14xf32>
    %796 = arith.mulf %795, %779 : vector<14x14xf32>
    %797 = arith.addf %777, %796 : vector<14x14xf32>
    %c1_447 = arith.constant 1 : index
    %c0_448 = arith.constant 0 : index
    %c1_449 = arith.constant 1 : index
    %c0_450 = arith.constant 0 : index
    %798 = vector.load %arg0[%c1_447, %c0_448, %c1_449, %c0_450] : memref<2x3x16x16xf32, #tpu.memory_space<vmem>>, vector<1x1x14x14xf32>
    %799 = vector.shape_cast %798 : vector<1x1x14x14xf32> to vector<14x14xf32>
    %800 = vector.broadcast %3 : f32 to vector<14x14xf32>
    %801 = arith.mulf %800, %799 : vector<14x14xf32>
    %802 = arith.addf %782, %801 : vector<14x14xf32>
    %803 = vector.broadcast %30 : f32 to vector<14x14xf32>
    %804 = arith.mulf %803, %799 : vector<14x14xf32>
    %805 = arith.addf %785, %804 : vector<14x14xf32>
    %806 = vector.broadcast %57 : f32 to vector<14x14xf32>
    %807 = arith.mulf %806, %799 : vector<14x14xf32>
    %808 = arith.addf %788, %807 : vector<14x14xf32>
    %809 = vector.broadcast %84 : f32 to vector<14x14xf32>
    %810 = arith.mulf %809, %799 : vector<14x14xf32>
    %811 = arith.addf %791, %810 : vector<14x14xf32>
    %812 = vector.broadcast %111 : f32 to vector<14x14xf32>
    %813 = arith.mulf %812, %799 : vector<14x14xf32>
    %814 = arith.addf %794, %813 : vector<14x14xf32>
    %815 = vector.broadcast %138 : f32 to vector<14x14xf32>
    %816 = arith.mulf %815, %799 : vector<14x14xf32>
    %817 = arith.addf %797, %816 : vector<14x14xf32>
    %c1_451 = arith.constant 1 : index
    %c0_452 = arith.constant 0 : index
    %c1_453 = arith.constant 1 : index
    %c1_454 = arith.constant 1 : index
    %818 = vector.load %arg0[%c1_451, %c0_452, %c1_453, %c1_454] : memref<2x3x16x16xf32, #tpu.memory_space<vmem>>, vector<1x1x14x14xf32>
    %819 = vector.shape_cast %818 : vector<1x1x14x14xf32> to vector<14x14xf32>
    %820 = vector.broadcast %4 : f32 to vector<14x14xf32>
    %821 = arith.mulf %820, %819 : vector<14x14xf32>
    %822 = arith.addf %802, %821 : vector<14x14xf32>
    %823 = vector.broadcast %31 : f32 to vector<14x14xf32>
    %824 = arith.mulf %823, %819 : vector<14x14xf32>
    %825 = arith.addf %805, %824 : vector<14x14xf32>
    %826 = vector.broadcast %58 : f32 to vector<14x14xf32>
    %827 = arith.mulf %826, %819 : vector<14x14xf32>
    %828 = arith.addf %808, %827 : vector<14x14xf32>
    %829 = vector.broadcast %85 : f32 to vector<14x14xf32>
    %830 = arith.mulf %829, %819 : vector<14x14xf32>
    %831 = arith.addf %811, %830 : vector<14x14xf32>
    %832 = vector.broadcast %112 : f32 to vector<14x14xf32>
    %833 = arith.mulf %832, %819 : vector<14x14xf32>
    %834 = arith.addf %814, %833 : vector<14x14xf32>
    %835 = vector.broadcast %139 : f32 to vector<14x14xf32>
    %836 = arith.mulf %835, %819 : vector<14x14xf32>
    %837 = arith.addf %817, %836 : vector<14x14xf32>
    %c1_455 = arith.constant 1 : index
    %c0_456 = arith.constant 0 : index
    %c1_457 = arith.constant 1 : index
    %c2_458 = arith.constant 2 : index
    %838 = vector.load %arg0[%c1_455, %c0_456, %c1_457, %c2_458] : memref<2x3x16x16xf32, #tpu.memory_space<vmem>>, vector<1x1x14x14xf32>
    %839 = vector.shape_cast %838 : vector<1x1x14x14xf32> to vector<14x14xf32>
    %840 = vector.broadcast %5 : f32 to vector<14x14xf32>
    %841 = arith.mulf %840, %839 : vector<14x14xf32>
    %842 = arith.addf %822, %841 : vector<14x14xf32>
    %843 = vector.broadcast %32 : f32 to vector<14x14xf32>
    %844 = arith.mulf %843, %839 : vector<14x14xf32>
    %845 = arith.addf %825, %844 : vector<14x14xf32>
    %846 = vector.broadcast %59 : f32 to vector<14x14xf32>
    %847 = arith.mulf %846, %839 : vector<14x14xf32>
    %848 = arith.addf %828, %847 : vector<14x14xf32>
    %849 = vector.broadcast %86 : f32 to vector<14x14xf32>
    %850 = arith.mulf %849, %839 : vector<14x14xf32>
    %851 = arith.addf %831, %850 : vector<14x14xf32>
    %852 = vector.broadcast %113 : f32 to vector<14x14xf32>
    %853 = arith.mulf %852, %839 : vector<14x14xf32>
    %854 = arith.addf %834, %853 : vector<14x14xf32>
    %855 = vector.broadcast %140 : f32 to vector<14x14xf32>
    %856 = arith.mulf %855, %839 : vector<14x14xf32>
    %857 = arith.addf %837, %856 : vector<14x14xf32>
    %c1_459 = arith.constant 1 : index
    %c0_460 = arith.constant 0 : index
    %c2_461 = arith.constant 2 : index
    %c0_462 = arith.constant 0 : index
    %858 = vector.load %arg0[%c1_459, %c0_460, %c2_461, %c0_462] : memref<2x3x16x16xf32, #tpu.memory_space<vmem>>, vector<1x1x14x14xf32>
    %859 = vector.shape_cast %858 : vector<1x1x14x14xf32> to vector<14x14xf32>
    %860 = vector.broadcast %6 : f32 to vector<14x14xf32>
    %861 = arith.mulf %860, %859 : vector<14x14xf32>
    %862 = arith.addf %842, %861 : vector<14x14xf32>
    %863 = vector.broadcast %33 : f32 to vector<14x14xf32>
    %864 = arith.mulf %863, %859 : vector<14x14xf32>
    %865 = arith.addf %845, %864 : vector<14x14xf32>
    %866 = vector.broadcast %60 : f32 to vector<14x14xf32>
    %867 = arith.mulf %866, %859 : vector<14x14xf32>
    %868 = arith.addf %848, %867 : vector<14x14xf32>
    %869 = vector.broadcast %87 : f32 to vector<14x14xf32>
    %870 = arith.mulf %869, %859 : vector<14x14xf32>
    %871 = arith.addf %851, %870 : vector<14x14xf32>
    %872 = vector.broadcast %114 : f32 to vector<14x14xf32>
    %873 = arith.mulf %872, %859 : vector<14x14xf32>
    %874 = arith.addf %854, %873 : vector<14x14xf32>
    %875 = vector.broadcast %141 : f32 to vector<14x14xf32>
    %876 = arith.mulf %875, %859 : vector<14x14xf32>
    %877 = arith.addf %857, %876 : vector<14x14xf32>
    %c1_463 = arith.constant 1 : index
    %c0_464 = arith.constant 0 : index
    %c2_465 = arith.constant 2 : index
    %c1_466 = arith.constant 1 : index
    %878 = vector.load %arg0[%c1_463, %c0_464, %c2_465, %c1_466] : memref<2x3x16x16xf32, #tpu.memory_space<vmem>>, vector<1x1x14x14xf32>
    %879 = vector.shape_cast %878 : vector<1x1x14x14xf32> to vector<14x14xf32>
    %880 = vector.broadcast %7 : f32 to vector<14x14xf32>
    %881 = arith.mulf %880, %879 : vector<14x14xf32>
    %882 = arith.addf %862, %881 : vector<14x14xf32>
    %883 = vector.broadcast %34 : f32 to vector<14x14xf32>
    %884 = arith.mulf %883, %879 : vector<14x14xf32>
    %885 = arith.addf %865, %884 : vector<14x14xf32>
    %886 = vector.broadcast %61 : f32 to vector<14x14xf32>
    %887 = arith.mulf %886, %879 : vector<14x14xf32>
    %888 = arith.addf %868, %887 : vector<14x14xf32>
    %889 = vector.broadcast %88 : f32 to vector<14x14xf32>
    %890 = arith.mulf %889, %879 : vector<14x14xf32>
    %891 = arith.addf %871, %890 : vector<14x14xf32>
    %892 = vector.broadcast %115 : f32 to vector<14x14xf32>
    %893 = arith.mulf %892, %879 : vector<14x14xf32>
    %894 = arith.addf %874, %893 : vector<14x14xf32>
    %895 = vector.broadcast %142 : f32 to vector<14x14xf32>
    %896 = arith.mulf %895, %879 : vector<14x14xf32>
    %897 = arith.addf %877, %896 : vector<14x14xf32>
    %c1_467 = arith.constant 1 : index
    %c0_468 = arith.constant 0 : index
    %c2_469 = arith.constant 2 : index
    %c2_470 = arith.constant 2 : index
    %898 = vector.load %arg0[%c1_467, %c0_468, %c2_469, %c2_470] : memref<2x3x16x16xf32, #tpu.memory_space<vmem>>, vector<1x1x14x14xf32>
    %899 = vector.shape_cast %898 : vector<1x1x14x14xf32> to vector<14x14xf32>
    %900 = vector.broadcast %8 : f32 to vector<14x14xf32>
    %901 = arith.mulf %900, %899 : vector<14x14xf32>
    %902 = arith.addf %882, %901 : vector<14x14xf32>
    %903 = vector.broadcast %35 : f32 to vector<14x14xf32>
    %904 = arith.mulf %903, %899 : vector<14x14xf32>
    %905 = arith.addf %885, %904 : vector<14x14xf32>
    %906 = vector.broadcast %62 : f32 to vector<14x14xf32>
    %907 = arith.mulf %906, %899 : vector<14x14xf32>
    %908 = arith.addf %888, %907 : vector<14x14xf32>
    %909 = vector.broadcast %89 : f32 to vector<14x14xf32>
    %910 = arith.mulf %909, %899 : vector<14x14xf32>
    %911 = arith.addf %891, %910 : vector<14x14xf32>
    %912 = vector.broadcast %116 : f32 to vector<14x14xf32>
    %913 = arith.mulf %912, %899 : vector<14x14xf32>
    %914 = arith.addf %894, %913 : vector<14x14xf32>
    %915 = vector.broadcast %143 : f32 to vector<14x14xf32>
    %916 = arith.mulf %915, %899 : vector<14x14xf32>
    %917 = arith.addf %897, %916 : vector<14x14xf32>
    %c1_471 = arith.constant 1 : index
    %c1_472 = arith.constant 1 : index
    %c0_473 = arith.constant 0 : index
    %c0_474 = arith.constant 0 : index
    %918 = vector.load %arg0[%c1_471, %c1_472, %c0_473, %c0_474] : memref<2x3x16x16xf32, #tpu.memory_space<vmem>>, vector<1x1x14x14xf32>
    %919 = vector.shape_cast %918 : vector<1x1x14x14xf32> to vector<14x14xf32>
    %920 = vector.broadcast %9 : f32 to vector<14x14xf32>
    %921 = arith.mulf %920, %919 : vector<14x14xf32>
    %922 = arith.addf %902, %921 : vector<14x14xf32>
    %923 = vector.broadcast %36 : f32 to vector<14x14xf32>
    %924 = arith.mulf %923, %919 : vector<14x14xf32>
    %925 = arith.addf %905, %924 : vector<14x14xf32>
    %926 = vector.broadcast %63 : f32 to vector<14x14xf32>
    %927 = arith.mulf %926, %919 : vector<14x14xf32>
    %928 = arith.addf %908, %927 : vector<14x14xf32>
    %929 = vector.broadcast %90 : f32 to vector<14x14xf32>
    %930 = arith.mulf %929, %919 : vector<14x14xf32>
    %931 = arith.addf %911, %930 : vector<14x14xf32>
    %932 = vector.broadcast %117 : f32 to vector<14x14xf32>
    %933 = arith.mulf %932, %919 : vector<14x14xf32>
    %934 = arith.addf %914, %933 : vector<14x14xf32>
    %935 = vector.broadcast %144 : f32 to vector<14x14xf32>
    %936 = arith.mulf %935, %919 : vector<14x14xf32>
    %937 = arith.addf %917, %936 : vector<14x14xf32>
    %c1_475 = arith.constant 1 : index
    %c1_476 = arith.constant 1 : index
    %c0_477 = arith.constant 0 : index
    %c1_478 = arith.constant 1 : index
    %938 = vector.load %arg0[%c1_475, %c1_476, %c0_477, %c1_478] : memref<2x3x16x16xf32, #tpu.memory_space<vmem>>, vector<1x1x14x14xf32>
    %939 = vector.shape_cast %938 : vector<1x1x14x14xf32> to vector<14x14xf32>
    %940 = vector.broadcast %10 : f32 to vector<14x14xf32>
    %941 = arith.mulf %940, %939 : vector<14x14xf32>
    %942 = arith.addf %922, %941 : vector<14x14xf32>
    %943 = vector.broadcast %37 : f32 to vector<14x14xf32>
    %944 = arith.mulf %943, %939 : vector<14x14xf32>
    %945 = arith.addf %925, %944 : vector<14x14xf32>
    %946 = vector.broadcast %64 : f32 to vector<14x14xf32>
    %947 = arith.mulf %946, %939 : vector<14x14xf32>
    %948 = arith.addf %928, %947 : vector<14x14xf32>
    %949 = vector.broadcast %91 : f32 to vector<14x14xf32>
    %950 = arith.mulf %949, %939 : vector<14x14xf32>
    %951 = arith.addf %931, %950 : vector<14x14xf32>
    %952 = vector.broadcast %118 : f32 to vector<14x14xf32>
    %953 = arith.mulf %952, %939 : vector<14x14xf32>
    %954 = arith.addf %934, %953 : vector<14x14xf32>
    %955 = vector.broadcast %145 : f32 to vector<14x14xf32>
    %956 = arith.mulf %955, %939 : vector<14x14xf32>
    %957 = arith.addf %937, %956 : vector<14x14xf32>
    %c1_479 = arith.constant 1 : index
    %c1_480 = arith.constant 1 : index
    %c0_481 = arith.constant 0 : index
    %c2_482 = arith.constant 2 : index
    %958 = vector.load %arg0[%c1_479, %c1_480, %c0_481, %c2_482] : memref<2x3x16x16xf32, #tpu.memory_space<vmem>>, vector<1x1x14x14xf32>
    %959 = vector.shape_cast %958 : vector<1x1x14x14xf32> to vector<14x14xf32>
    %960 = vector.broadcast %11 : f32 to vector<14x14xf32>
    %961 = arith.mulf %960, %959 : vector<14x14xf32>
    %962 = arith.addf %942, %961 : vector<14x14xf32>
    %963 = vector.broadcast %38 : f32 to vector<14x14xf32>
    %964 = arith.mulf %963, %959 : vector<14x14xf32>
    %965 = arith.addf %945, %964 : vector<14x14xf32>
    %966 = vector.broadcast %65 : f32 to vector<14x14xf32>
    %967 = arith.mulf %966, %959 : vector<14x14xf32>
    %968 = arith.addf %948, %967 : vector<14x14xf32>
    %969 = vector.broadcast %92 : f32 to vector<14x14xf32>
    %970 = arith.mulf %969, %959 : vector<14x14xf32>
    %971 = arith.addf %951, %970 : vector<14x14xf32>
    %972 = vector.broadcast %119 : f32 to vector<14x14xf32>
    %973 = arith.mulf %972, %959 : vector<14x14xf32>
    %974 = arith.addf %954, %973 : vector<14x14xf32>
    %975 = vector.broadcast %146 : f32 to vector<14x14xf32>
    %976 = arith.mulf %975, %959 : vector<14x14xf32>
    %977 = arith.addf %957, %976 : vector<14x14xf32>
    %c1_483 = arith.constant 1 : index
    %c1_484 = arith.constant 1 : index
    %c1_485 = arith.constant 1 : index
    %c0_486 = arith.constant 0 : index
    %978 = vector.load %arg0[%c1_483, %c1_484, %c1_485, %c0_486] : memref<2x3x16x16xf32, #tpu.memory_space<vmem>>, vector<1x1x14x14xf32>
    %979 = vector.shape_cast %978 : vector<1x1x14x14xf32> to vector<14x14xf32>
    %980 = vector.broadcast %12 : f32 to vector<14x14xf32>
    %981 = arith.mulf %980, %979 : vector<14x14xf32>
    %982 = arith.addf %962, %981 : vector<14x14xf32>
    %983 = vector.broadcast %39 : f32 to vector<14x14xf32>
    %984 = arith.mulf %983, %979 : vector<14x14xf32>
    %985 = arith.addf %965, %984 : vector<14x14xf32>
    %986 = vector.broadcast %66 : f32 to vector<14x14xf32>
    %987 = arith.mulf %986, %979 : vector<14x14xf32>
    %988 = arith.addf %968, %987 : vector<14x14xf32>
    %989 = vector.broadcast %93 : f32 to vector<14x14xf32>
    %990 = arith.mulf %989, %979 : vector<14x14xf32>
    %991 = arith.addf %971, %990 : vector<14x14xf32>
    %992 = vector.broadcast %120 : f32 to vector<14x14xf32>
    %993 = arith.mulf %992, %979 : vector<14x14xf32>
    %994 = arith.addf %974, %993 : vector<14x14xf32>
    %995 = vector.broadcast %147 : f32 to vector<14x14xf32>
    %996 = arith.mulf %995, %979 : vector<14x14xf32>
    %997 = arith.addf %977, %996 : vector<14x14xf32>
    %c1_487 = arith.constant 1 : index
    %c1_488 = arith.constant 1 : index
    %c1_489 = arith.constant 1 : index
    %c1_490 = arith.constant 1 : index
    %998 = vector.load %arg0[%c1_487, %c1_488, %c1_489, %c1_490] : memref<2x3x16x16xf32, #tpu.memory_space<vmem>>, vector<1x1x14x14xf32>
    %999 = vector.shape_cast %998 : vector<1x1x14x14xf32> to vector<14x14xf32>
    %1000 = vector.broadcast %13 : f32 to vector<14x14xf32>
    %1001 = arith.mulf %1000, %999 : vector<14x14xf32>
    %1002 = arith.addf %982, %1001 : vector<14x14xf32>
    %1003 = vector.broadcast %40 : f32 to vector<14x14xf32>
    %1004 = arith.mulf %1003, %999 : vector<14x14xf32>
    %1005 = arith.addf %985, %1004 : vector<14x14xf32>
    %1006 = vector.broadcast %67 : f32 to vector<14x14xf32>
    %1007 = arith.mulf %1006, %999 : vector<14x14xf32>
    %1008 = arith.addf %988, %1007 : vector<14x14xf32>
    %1009 = vector.broadcast %94 : f32 to vector<14x14xf32>
    %1010 = arith.mulf %1009, %999 : vector<14x14xf32>
    %1011 = arith.addf %991, %1010 : vector<14x14xf32>
    %1012 = vector.broadcast %121 : f32 to vector<14x14xf32>
    %1013 = arith.mulf %1012, %999 : vector<14x14xf32>
    %1014 = arith.addf %994, %1013 : vector<14x14xf32>
    %1015 = vector.broadcast %148 : f32 to vector<14x14xf32>
    %1016 = arith.mulf %1015, %999 : vector<14x14xf32>
    %1017 = arith.addf %997, %1016 : vector<14x14xf32>
    %c1_491 = arith.constant 1 : index
    %c1_492 = arith.constant 1 : index
    %c1_493 = arith.constant 1 : index
    %c2_494 = arith.constant 2 : index
    %1018 = vector.load %arg0[%c1_491, %c1_492, %c1_493, %c2_494] : memref<2x3x16x16xf32, #tpu.memory_space<vmem>>, vector<1x1x14x14xf32>
    %1019 = vector.shape_cast %1018 : vector<1x1x14x14xf32> to vector<14x14xf32>
    %1020 = vector.broadcast %14 : f32 to vector<14x14xf32>
    %1021 = arith.mulf %1020, %1019 : vector<14x14xf32>
    %1022 = arith.addf %1002, %1021 : vector<14x14xf32>
    %1023 = vector.broadcast %41 : f32 to vector<14x14xf32>
    %1024 = arith.mulf %1023, %1019 : vector<14x14xf32>
    %1025 = arith.addf %1005, %1024 : vector<14x14xf32>
    %1026 = vector.broadcast %68 : f32 to vector<14x14xf32>
    %1027 = arith.mulf %1026, %1019 : vector<14x14xf32>
    %1028 = arith.addf %1008, %1027 : vector<14x14xf32>
    %1029 = vector.broadcast %95 : f32 to vector<14x14xf32>
    %1030 = arith.mulf %1029, %1019 : vector<14x14xf32>
    %1031 = arith.addf %1011, %1030 : vector<14x14xf32>
    %1032 = vector.broadcast %122 : f32 to vector<14x14xf32>
    %1033 = arith.mulf %1032, %1019 : vector<14x14xf32>
    %1034 = arith.addf %1014, %1033 : vector<14x14xf32>
    %1035 = vector.broadcast %149 : f32 to vector<14x14xf32>
    %1036 = arith.mulf %1035, %1019 : vector<14x14xf32>
    %1037 = arith.addf %1017, %1036 : vector<14x14xf32>
    %c1_495 = arith.constant 1 : index
    %c1_496 = arith.constant 1 : index
    %c2_497 = arith.constant 2 : index
    %c0_498 = arith.constant 0 : index
    %1038 = vector.load %arg0[%c1_495, %c1_496, %c2_497, %c0_498] : memref<2x3x16x16xf32, #tpu.memory_space<vmem>>, vector<1x1x14x14xf32>
    %1039 = vector.shape_cast %1038 : vector<1x1x14x14xf32> to vector<14x14xf32>
    %1040 = vector.broadcast %15 : f32 to vector<14x14xf32>
    %1041 = arith.mulf %1040, %1039 : vector<14x14xf32>
    %1042 = arith.addf %1022, %1041 : vector<14x14xf32>
    %1043 = vector.broadcast %42 : f32 to vector<14x14xf32>
    %1044 = arith.mulf %1043, %1039 : vector<14x14xf32>
    %1045 = arith.addf %1025, %1044 : vector<14x14xf32>
    %1046 = vector.broadcast %69 : f32 to vector<14x14xf32>
    %1047 = arith.mulf %1046, %1039 : vector<14x14xf32>
    %1048 = arith.addf %1028, %1047 : vector<14x14xf32>
    %1049 = vector.broadcast %96 : f32 to vector<14x14xf32>
    %1050 = arith.mulf %1049, %1039 : vector<14x14xf32>
    %1051 = arith.addf %1031, %1050 : vector<14x14xf32>
    %1052 = vector.broadcast %123 : f32 to vector<14x14xf32>
    %1053 = arith.mulf %1052, %1039 : vector<14x14xf32>
    %1054 = arith.addf %1034, %1053 : vector<14x14xf32>
    %1055 = vector.broadcast %150 : f32 to vector<14x14xf32>
    %1056 = arith.mulf %1055, %1039 : vector<14x14xf32>
    %1057 = arith.addf %1037, %1056 : vector<14x14xf32>
    %c1_499 = arith.constant 1 : index
    %c1_500 = arith.constant 1 : index
    %c2_501 = arith.constant 2 : index
    %c1_502 = arith.constant 1 : index
    %1058 = vector.load %arg0[%c1_499, %c1_500, %c2_501, %c1_502] : memref<2x3x16x16xf32, #tpu.memory_space<vmem>>, vector<1x1x14x14xf32>
    %1059 = vector.shape_cast %1058 : vector<1x1x14x14xf32> to vector<14x14xf32>
    %1060 = vector.broadcast %16 : f32 to vector<14x14xf32>
    %1061 = arith.mulf %1060, %1059 : vector<14x14xf32>
    %1062 = arith.addf %1042, %1061 : vector<14x14xf32>
    %1063 = vector.broadcast %43 : f32 to vector<14x14xf32>
    %1064 = arith.mulf %1063, %1059 : vector<14x14xf32>
    %1065 = arith.addf %1045, %1064 : vector<14x14xf32>
    %1066 = vector.broadcast %70 : f32 to vector<14x14xf32>
    %1067 = arith.mulf %1066, %1059 : vector<14x14xf32>
    %1068 = arith.addf %1048, %1067 : vector<14x14xf32>
    %1069 = vector.broadcast %97 : f32 to vector<14x14xf32>
    %1070 = arith.mulf %1069, %1059 : vector<14x14xf32>
    %1071 = arith.addf %1051, %1070 : vector<14x14xf32>
    %1072 = vector.broadcast %124 : f32 to vector<14x14xf32>
    %1073 = arith.mulf %1072, %1059 : vector<14x14xf32>
    %1074 = arith.addf %1054, %1073 : vector<14x14xf32>
    %1075 = vector.broadcast %151 : f32 to vector<14x14xf32>
    %1076 = arith.mulf %1075, %1059 : vector<14x14xf32>
    %1077 = arith.addf %1057, %1076 : vector<14x14xf32>
    %c1_503 = arith.constant 1 : index
    %c1_504 = arith.constant 1 : index
    %c2_505 = arith.constant 2 : index
    %c2_506 = arith.constant 2 : index
    %1078 = vector.load %arg0[%c1_503, %c1_504, %c2_505, %c2_506] : memref<2x3x16x16xf32, #tpu.memory_space<vmem>>, vector<1x1x14x14xf32>
    %1079 = vector.shape_cast %1078 : vector<1x1x14x14xf32> to vector<14x14xf32>
    %1080 = vector.broadcast %17 : f32 to vector<14x14xf32>
    %1081 = arith.mulf %1080, %1079 : vector<14x14xf32>
    %1082 = arith.addf %1062, %1081 : vector<14x14xf32>
    %1083 = vector.broadcast %44 : f32 to vector<14x14xf32>
    %1084 = arith.mulf %1083, %1079 : vector<14x14xf32>
    %1085 = arith.addf %1065, %1084 : vector<14x14xf32>
    %1086 = vector.broadcast %71 : f32 to vector<14x14xf32>
    %1087 = arith.mulf %1086, %1079 : vector<14x14xf32>
    %1088 = arith.addf %1068, %1087 : vector<14x14xf32>
    %1089 = vector.broadcast %98 : f32 to vector<14x14xf32>
    %1090 = arith.mulf %1089, %1079 : vector<14x14xf32>
    %1091 = arith.addf %1071, %1090 : vector<14x14xf32>
    %1092 = vector.broadcast %125 : f32 to vector<14x14xf32>
    %1093 = arith.mulf %1092, %1079 : vector<14x14xf32>
    %1094 = arith.addf %1074, %1093 : vector<14x14xf32>
    %1095 = vector.broadcast %152 : f32 to vector<14x14xf32>
    %1096 = arith.mulf %1095, %1079 : vector<14x14xf32>
    %1097 = arith.addf %1077, %1096 : vector<14x14xf32>
    %c1_507 = arith.constant 1 : index
    %c2_508 = arith.constant 2 : index
    %c0_509 = arith.constant 0 : index
    %c0_510 = arith.constant 0 : index
    %1098 = vector.load %arg0[%c1_507, %c2_508, %c0_509, %c0_510] : memref<2x3x16x16xf32, #tpu.memory_space<vmem>>, vector<1x1x14x14xf32>
    %1099 = vector.shape_cast %1098 : vector<1x1x14x14xf32> to vector<14x14xf32>
    %1100 = vector.broadcast %18 : f32 to vector<14x14xf32>
    %1101 = arith.mulf %1100, %1099 : vector<14x14xf32>
    %1102 = arith.addf %1082, %1101 : vector<14x14xf32>
    %1103 = vector.broadcast %45 : f32 to vector<14x14xf32>
    %1104 = arith.mulf %1103, %1099 : vector<14x14xf32>
    %1105 = arith.addf %1085, %1104 : vector<14x14xf32>
    %1106 = vector.broadcast %72 : f32 to vector<14x14xf32>
    %1107 = arith.mulf %1106, %1099 : vector<14x14xf32>
    %1108 = arith.addf %1088, %1107 : vector<14x14xf32>
    %1109 = vector.broadcast %99 : f32 to vector<14x14xf32>
    %1110 = arith.mulf %1109, %1099 : vector<14x14xf32>
    %1111 = arith.addf %1091, %1110 : vector<14x14xf32>
    %1112 = vector.broadcast %126 : f32 to vector<14x14xf32>
    %1113 = arith.mulf %1112, %1099 : vector<14x14xf32>
    %1114 = arith.addf %1094, %1113 : vector<14x14xf32>
    %1115 = vector.broadcast %153 : f32 to vector<14x14xf32>
    %1116 = arith.mulf %1115, %1099 : vector<14x14xf32>
    %1117 = arith.addf %1097, %1116 : vector<14x14xf32>
    %c1_511 = arith.constant 1 : index
    %c2_512 = arith.constant 2 : index
    %c0_513 = arith.constant 0 : index
    %c1_514 = arith.constant 1 : index
    %1118 = vector.load %arg0[%c1_511, %c2_512, %c0_513, %c1_514] : memref<2x3x16x16xf32, #tpu.memory_space<vmem>>, vector<1x1x14x14xf32>
    %1119 = vector.shape_cast %1118 : vector<1x1x14x14xf32> to vector<14x14xf32>
    %1120 = vector.broadcast %19 : f32 to vector<14x14xf32>
    %1121 = arith.mulf %1120, %1119 : vector<14x14xf32>
    %1122 = arith.addf %1102, %1121 : vector<14x14xf32>
    %1123 = vector.broadcast %46 : f32 to vector<14x14xf32>
    %1124 = arith.mulf %1123, %1119 : vector<14x14xf32>
    %1125 = arith.addf %1105, %1124 : vector<14x14xf32>
    %1126 = vector.broadcast %73 : f32 to vector<14x14xf32>
    %1127 = arith.mulf %1126, %1119 : vector<14x14xf32>
    %1128 = arith.addf %1108, %1127 : vector<14x14xf32>
    %1129 = vector.broadcast %100 : f32 to vector<14x14xf32>
    %1130 = arith.mulf %1129, %1119 : vector<14x14xf32>
    %1131 = arith.addf %1111, %1130 : vector<14x14xf32>
    %1132 = vector.broadcast %127 : f32 to vector<14x14xf32>
    %1133 = arith.mulf %1132, %1119 : vector<14x14xf32>
    %1134 = arith.addf %1114, %1133 : vector<14x14xf32>
    %1135 = vector.broadcast %154 : f32 to vector<14x14xf32>
    %1136 = arith.mulf %1135, %1119 : vector<14x14xf32>
    %1137 = arith.addf %1117, %1136 : vector<14x14xf32>
    %c1_515 = arith.constant 1 : index
    %c2_516 = arith.constant 2 : index
    %c0_517 = arith.constant 0 : index
    %c2_518 = arith.constant 2 : index
    %1138 = vector.load %arg0[%c1_515, %c2_516, %c0_517, %c2_518] : memref<2x3x16x16xf32, #tpu.memory_space<vmem>>, vector<1x1x14x14xf32>
    %1139 = vector.shape_cast %1138 : vector<1x1x14x14xf32> to vector<14x14xf32>
    %1140 = vector.broadcast %20 : f32 to vector<14x14xf32>
    %1141 = arith.mulf %1140, %1139 : vector<14x14xf32>
    %1142 = arith.addf %1122, %1141 : vector<14x14xf32>
    %1143 = vector.broadcast %47 : f32 to vector<14x14xf32>
    %1144 = arith.mulf %1143, %1139 : vector<14x14xf32>
    %1145 = arith.addf %1125, %1144 : vector<14x14xf32>
    %1146 = vector.broadcast %74 : f32 to vector<14x14xf32>
    %1147 = arith.mulf %1146, %1139 : vector<14x14xf32>
    %1148 = arith.addf %1128, %1147 : vector<14x14xf32>
    %1149 = vector.broadcast %101 : f32 to vector<14x14xf32>
    %1150 = arith.mulf %1149, %1139 : vector<14x14xf32>
    %1151 = arith.addf %1131, %1150 : vector<14x14xf32>
    %1152 = vector.broadcast %128 : f32 to vector<14x14xf32>
    %1153 = arith.mulf %1152, %1139 : vector<14x14xf32>
    %1154 = arith.addf %1134, %1153 : vector<14x14xf32>
    %1155 = vector.broadcast %155 : f32 to vector<14x14xf32>
    %1156 = arith.mulf %1155, %1139 : vector<14x14xf32>
    %1157 = arith.addf %1137, %1156 : vector<14x14xf32>
    %c1_519 = arith.constant 1 : index
    %c2_520 = arith.constant 2 : index
    %c1_521 = arith.constant 1 : index
    %c0_522 = arith.constant 0 : index
    %1158 = vector.load %arg0[%c1_519, %c2_520, %c1_521, %c0_522] : memref<2x3x16x16xf32, #tpu.memory_space<vmem>>, vector<1x1x14x14xf32>
    %1159 = vector.shape_cast %1158 : vector<1x1x14x14xf32> to vector<14x14xf32>
    %1160 = vector.broadcast %21 : f32 to vector<14x14xf32>
    %1161 = arith.mulf %1160, %1159 : vector<14x14xf32>
    %1162 = arith.addf %1142, %1161 : vector<14x14xf32>
    %1163 = vector.broadcast %48 : f32 to vector<14x14xf32>
    %1164 = arith.mulf %1163, %1159 : vector<14x14xf32>
    %1165 = arith.addf %1145, %1164 : vector<14x14xf32>
    %1166 = vector.broadcast %75 : f32 to vector<14x14xf32>
    %1167 = arith.mulf %1166, %1159 : vector<14x14xf32>
    %1168 = arith.addf %1148, %1167 : vector<14x14xf32>
    %1169 = vector.broadcast %102 : f32 to vector<14x14xf32>
    %1170 = arith.mulf %1169, %1159 : vector<14x14xf32>
    %1171 = arith.addf %1151, %1170 : vector<14x14xf32>
    %1172 = vector.broadcast %129 : f32 to vector<14x14xf32>
    %1173 = arith.mulf %1172, %1159 : vector<14x14xf32>
    %1174 = arith.addf %1154, %1173 : vector<14x14xf32>
    %1175 = vector.broadcast %156 : f32 to vector<14x14xf32>
    %1176 = arith.mulf %1175, %1159 : vector<14x14xf32>
    %1177 = arith.addf %1157, %1176 : vector<14x14xf32>
    %c1_523 = arith.constant 1 : index
    %c2_524 = arith.constant 2 : index
    %c1_525 = arith.constant 1 : index
    %c1_526 = arith.constant 1 : index
    %1178 = vector.load %arg0[%c1_523, %c2_524, %c1_525, %c1_526] : memref<2x3x16x16xf32, #tpu.memory_space<vmem>>, vector<1x1x14x14xf32>
    %1179 = vector.shape_cast %1178 : vector<1x1x14x14xf32> to vector<14x14xf32>
    %1180 = vector.broadcast %22 : f32 to vector<14x14xf32>
    %1181 = arith.mulf %1180, %1179 : vector<14x14xf32>
    %1182 = arith.addf %1162, %1181 : vector<14x14xf32>
    %1183 = vector.broadcast %49 : f32 to vector<14x14xf32>
    %1184 = arith.mulf %1183, %1179 : vector<14x14xf32>
    %1185 = arith.addf %1165, %1184 : vector<14x14xf32>
    %1186 = vector.broadcast %76 : f32 to vector<14x14xf32>
    %1187 = arith.mulf %1186, %1179 : vector<14x14xf32>
    %1188 = arith.addf %1168, %1187 : vector<14x14xf32>
    %1189 = vector.broadcast %103 : f32 to vector<14x14xf32>
    %1190 = arith.mulf %1189, %1179 : vector<14x14xf32>
    %1191 = arith.addf %1171, %1190 : vector<14x14xf32>
    %1192 = vector.broadcast %130 : f32 to vector<14x14xf32>
    %1193 = arith.mulf %1192, %1179 : vector<14x14xf32>
    %1194 = arith.addf %1174, %1193 : vector<14x14xf32>
    %1195 = vector.broadcast %157 : f32 to vector<14x14xf32>
    %1196 = arith.mulf %1195, %1179 : vector<14x14xf32>
    %1197 = arith.addf %1177, %1196 : vector<14x14xf32>
    %c1_527 = arith.constant 1 : index
    %c2_528 = arith.constant 2 : index
    %c1_529 = arith.constant 1 : index
    %c2_530 = arith.constant 2 : index
    %1198 = vector.load %arg0[%c1_527, %c2_528, %c1_529, %c2_530] : memref<2x3x16x16xf32, #tpu.memory_space<vmem>>, vector<1x1x14x14xf32>
    %1199 = vector.shape_cast %1198 : vector<1x1x14x14xf32> to vector<14x14xf32>
    %1200 = vector.broadcast %23 : f32 to vector<14x14xf32>
    %1201 = arith.mulf %1200, %1199 : vector<14x14xf32>
    %1202 = arith.addf %1182, %1201 : vector<14x14xf32>
    %1203 = vector.broadcast %50 : f32 to vector<14x14xf32>
    %1204 = arith.mulf %1203, %1199 : vector<14x14xf32>
    %1205 = arith.addf %1185, %1204 : vector<14x14xf32>
    %1206 = vector.broadcast %77 : f32 to vector<14x14xf32>
    %1207 = arith.mulf %1206, %1199 : vector<14x14xf32>
    %1208 = arith.addf %1188, %1207 : vector<14x14xf32>
    %1209 = vector.broadcast %104 : f32 to vector<14x14xf32>
    %1210 = arith.mulf %1209, %1199 : vector<14x14xf32>
    %1211 = arith.addf %1191, %1210 : vector<14x14xf32>
    %1212 = vector.broadcast %131 : f32 to vector<14x14xf32>
    %1213 = arith.mulf %1212, %1199 : vector<14x14xf32>
    %1214 = arith.addf %1194, %1213 : vector<14x14xf32>
    %1215 = vector.broadcast %158 : f32 to vector<14x14xf32>
    %1216 = arith.mulf %1215, %1199 : vector<14x14xf32>
    %1217 = arith.addf %1197, %1216 : vector<14x14xf32>
    %c1_531 = arith.constant 1 : index
    %c2_532 = arith.constant 2 : index
    %c2_533 = arith.constant 2 : index
    %c0_534 = arith.constant 0 : index
    %1218 = vector.load %arg0[%c1_531, %c2_532, %c2_533, %c0_534] : memref<2x3x16x16xf32, #tpu.memory_space<vmem>>, vector<1x1x14x14xf32>
    %1219 = vector.shape_cast %1218 : vector<1x1x14x14xf32> to vector<14x14xf32>
    %1220 = vector.broadcast %24 : f32 to vector<14x14xf32>
    %1221 = arith.mulf %1220, %1219 : vector<14x14xf32>
    %1222 = arith.addf %1202, %1221 : vector<14x14xf32>
    %1223 = vector.broadcast %51 : f32 to vector<14x14xf32>
    %1224 = arith.mulf %1223, %1219 : vector<14x14xf32>
    %1225 = arith.addf %1205, %1224 : vector<14x14xf32>
    %1226 = vector.broadcast %78 : f32 to vector<14x14xf32>
    %1227 = arith.mulf %1226, %1219 : vector<14x14xf32>
    %1228 = arith.addf %1208, %1227 : vector<14x14xf32>
    %1229 = vector.broadcast %105 : f32 to vector<14x14xf32>
    %1230 = arith.mulf %1229, %1219 : vector<14x14xf32>
    %1231 = arith.addf %1211, %1230 : vector<14x14xf32>
    %1232 = vector.broadcast %132 : f32 to vector<14x14xf32>
    %1233 = arith.mulf %1232, %1219 : vector<14x14xf32>
    %1234 = arith.addf %1214, %1233 : vector<14x14xf32>
    %1235 = vector.broadcast %159 : f32 to vector<14x14xf32>
    %1236 = arith.mulf %1235, %1219 : vector<14x14xf32>
    %1237 = arith.addf %1217, %1236 : vector<14x14xf32>
    %c1_535 = arith.constant 1 : index
    %c2_536 = arith.constant 2 : index
    %c2_537 = arith.constant 2 : index
    %c1_538 = arith.constant 1 : index
    %1238 = vector.load %arg0[%c1_535, %c2_536, %c2_537, %c1_538] : memref<2x3x16x16xf32, #tpu.memory_space<vmem>>, vector<1x1x14x14xf32>
    %1239 = vector.shape_cast %1238 : vector<1x1x14x14xf32> to vector<14x14xf32>
    %1240 = vector.broadcast %25 : f32 to vector<14x14xf32>
    %1241 = arith.mulf %1240, %1239 : vector<14x14xf32>
    %1242 = arith.addf %1222, %1241 : vector<14x14xf32>
    %1243 = vector.broadcast %52 : f32 to vector<14x14xf32>
    %1244 = arith.mulf %1243, %1239 : vector<14x14xf32>
    %1245 = arith.addf %1225, %1244 : vector<14x14xf32>
    %1246 = vector.broadcast %79 : f32 to vector<14x14xf32>
    %1247 = arith.mulf %1246, %1239 : vector<14x14xf32>
    %1248 = arith.addf %1228, %1247 : vector<14x14xf32>
    %1249 = vector.broadcast %106 : f32 to vector<14x14xf32>
    %1250 = arith.mulf %1249, %1239 : vector<14x14xf32>
    %1251 = arith.addf %1231, %1250 : vector<14x14xf32>
    %1252 = vector.broadcast %133 : f32 to vector<14x14xf32>
    %1253 = arith.mulf %1252, %1239 : vector<14x14xf32>
    %1254 = arith.addf %1234, %1253 : vector<14x14xf32>
    %1255 = vector.broadcast %160 : f32 to vector<14x14xf32>
    %1256 = arith.mulf %1255, %1239 : vector<14x14xf32>
    %1257 = arith.addf %1237, %1256 : vector<14x14xf32>
    %c1_539 = arith.constant 1 : index
    %c2_540 = arith.constant 2 : index
    %c2_541 = arith.constant 2 : index
    %c2_542 = arith.constant 2 : index
    %1258 = vector.load %arg0[%c1_539, %c2_540, %c2_541, %c2_542] : memref<2x3x16x16xf32, #tpu.memory_space<vmem>>, vector<1x1x14x14xf32>
    %1259 = vector.shape_cast %1258 : vector<1x1x14x14xf32> to vector<14x14xf32>
    %1260 = vector.broadcast %26 : f32 to vector<14x14xf32>
    %1261 = arith.mulf %1260, %1259 : vector<14x14xf32>
    %1262 = arith.addf %1242, %1261 : vector<14x14xf32>
    %1263 = vector.broadcast %53 : f32 to vector<14x14xf32>
    %1264 = arith.mulf %1263, %1259 : vector<14x14xf32>
    %1265 = arith.addf %1245, %1264 : vector<14x14xf32>
    %1266 = vector.broadcast %80 : f32 to vector<14x14xf32>
    %1267 = arith.mulf %1266, %1259 : vector<14x14xf32>
    %1268 = arith.addf %1248, %1267 : vector<14x14xf32>
    %1269 = vector.broadcast %107 : f32 to vector<14x14xf32>
    %1270 = arith.mulf %1269, %1259 : vector<14x14xf32>
    %1271 = arith.addf %1251, %1270 : vector<14x14xf32>
    %1272 = vector.broadcast %134 : f32 to vector<14x14xf32>
    %1273 = arith.mulf %1272, %1259 : vector<14x14xf32>
    %1274 = arith.addf %1254, %1273 : vector<14x14xf32>
    %1275 = vector.broadcast %161 : f32 to vector<14x14xf32>
    %1276 = arith.mulf %1275, %1259 : vector<14x14xf32>
    %1277 = arith.addf %1257, %1276 : vector<14x14xf32>
    %c1_543 = arith.constant 1 : index
    %c0_544 = arith.constant 0 : index
    %c0_545 = arith.constant 0 : index
    %c0_546 = arith.constant 0 : index
    %1278 = vector.load %arg3[%c1_543, %c0_544, %c0_545, %c0_546] : memref<2x6x14x14xf32, #tpu.memory_space<vmem>>, vector<1x1x14x14xf32>
    %1279 = vector.shape_cast %1278 : vector<1x1x14x14xf32> to vector<14x14xf32>
    %1280 = vector.shape_cast %1262 : vector<14x14xf32> to vector<1x1x14x14xf32>
    tpu.vector_store %arg3[%c1_543, %c0_544, %c0_545, %c0_546], %1280 {strides = array<i32>} : memref<2x6x14x14xf32, #tpu.memory_space<vmem>>, vector<1x1x14x14xf32>,
    %c1_547 = arith.constant 1 : index
    %c1_548 = arith.constant 1 : index
    %c0_549 = arith.constant 0 : index
    %c0_550 = arith.constant 0 : index
    %1281 = vector.load %arg3[%c1_547, %c1_548, %c0_549, %c0_550] : memref<2x6x14x14xf32, #tpu.memory_space<vmem>>, vector<1x1x14x14xf32>
    %1282 = vector.shape_cast %1281 : vector<1x1x14x14xf32> to vector<14x14xf32>
    %1283 = vector.shape_cast %1265 : vector<14x14xf32> to vector<1x1x14x14xf32>
    tpu.vector_store %arg3[%c1_547, %c1_548, %c0_549, %c0_550], %1283 {strides = array<i32>} : memref<2x6x14x14xf32, #tpu.memory_space<vmem>>, vector<1x1x14x14xf32>,
    %c1_551 = arith.constant 1 : index
    %c2_552 = arith.constant 2 : index
    %c0_553 = arith.constant 0 : index
    %c0_554 = arith.constant 0 : index
    %1284 = vector.load %arg3[%c1_551, %c2_552, %c0_553, %c0_554] : memref<2x6x14x14xf32, #tpu.memory_space<vmem>>, vector<1x1x14x14xf32>
    %1285 = vector.shape_cast %1284 : vector<1x1x14x14xf32> to vector<14x14xf32>
    %1286 = vector.shape_cast %1268 : vector<14x14xf32> to vector<1x1x14x14xf32>
    tpu.vector_store %arg3[%c1_551, %c2_552, %c0_553, %c0_554], %1286 {strides = array<i32>} : memref<2x6x14x14xf32, #tpu.memory_space<vmem>>, vector<1x1x14x14xf32>,
    %c1_555 = arith.constant 1 : index
    %c3_556 = arith.constant 3 : index
    %c0_557 = arith.constant 0 : index
    %c0_558 = arith.constant 0 : index
    %1287 = vector.load %arg3[%c1_555, %c3_556, %c0_557, %c0_558] : memref<2x6x14x14xf32, #tpu.memory_space<vmem>>, vector<1x1x14x14xf32>
    %1288 = vector.shape_cast %1287 : vector<1x1x14x14xf32> to vector<14x14xf32>
    %1289 = vector.shape_cast %1271 : vector<14x14xf32> to vector<1x1x14x14xf32>
    tpu.vector_store %arg3[%c1_555, %c3_556, %c0_557, %c0_558], %1289 {strides = array<i32>} : memref<2x6x14x14xf32, #tpu.memory_space<vmem>>, vector<1x1x14x14xf32>,
    %c1_559 = arith.constant 1 : index
    %c4_560 = arith.constant 4 : index
    %c0_561 = arith.constant 0 : index
    %c0_562 = arith.constant 0 : index
    %1290 = vector.load %arg3[%c1_559, %c4_560, %c0_561, %c0_562] : memref<2x6x14x14xf32, #tpu.memory_space<vmem>>, vector<1x1x14x14xf32>
    %1291 = vector.shape_cast %1290 : vector<1x1x14x14xf32> to vector<14x14xf32>
    %1292 = vector.shape_cast %1274 : vector<14x14xf32> to vector<1x1x14x14xf32>
    tpu.vector_store %arg3[%c1_559, %c4_560, %c0_561, %c0_562], %1292 {strides = array<i32>} : memref<2x6x14x14xf32, #tpu.memory_space<vmem>>, vector<1x1x14x14xf32>,
    %c1_563 = arith.constant 1 : index
    %c5_564 = arith.constant 5 : index
    %c0_565 = arith.constant 0 : index
    %c0_566 = arith.constant 0 : index
    %1293 = vector.load %arg3[%c1_563, %c5_564, %c0_565, %c0_566] : memref<2x6x14x14xf32, #tpu.memory_space<vmem>>, vector<1x1x14x14xf32>
    %1294 = vector.shape_cast %1293 : vector<1x1x14x14xf32> to vector<14x14xf32>
    %1295 = vector.shape_cast %1277 : vector<14x14xf32> to vector<1x1x14x14xf32>
    tpu.vector_store %arg3[%c1_563, %c5_564, %c0_565, %c0_566], %1295 {strides = array<i32>} : memref<2x6x14x14xf32, #tpu.memory_space<vmem>>, vector<1x1x14x14xf32>,
    return
  }
}

</mosaic_0001>

<llo_original>
// kernel: conv2d_pallas.1
$region0: #{conv2d_pallas.1}
  #allocation0 [shape = 'u32[]', space=smem, size = 0x4, offset = 0x4, fixed_abs, tag = 'smem constant byte address 0x4 - core index']
  #allocation1 [shape = 'u32[144,128]{1,0:T(1,128)}', space=vmem, size = 0x12000, scoped, tag = 'internal scratch']
  %s0 = inlined_call_operand.vmem [shape: f32[2,3,16,16], index: 0, kind: input, shape index: {}]
  %s1 = inlined_call_operand.vmem [shape: f32[6,27], index: 1, kind: input, shape index: {}]
  %s2 = inlined_call_operand.vmem [shape: f32[6], index: 2, kind: input, shape index: {}]
  %s3 = inlined_call_operand.vmem [shape: f32[2,6,14,14], index: 3, kind: output, shape index: {}]
  %s4 = sld [smem:[#allocation0]]
  $region30: #{conv2d_pallas.1} parent=0
    _
  %s6 = ssub.s32 1, %s4
  %s7 = scalar_select 0, %s6, %s4
  $region1: #{conv2d_pallas.1} parent=0
    #allocation2 [shape = 'u8[4096]{0}', space=smem, size = 0x1000, scoped, tag = 'input window, operand 1, single buffered']
    #allocation3 [shape = 's32[1]{0}', space=sflag, size = 0x4, scoped, tag = 'scoped memory for conv2d_pallas.1']
    #allocation4 [shape = 'u8[512]{0}', space=smem, size = 0x200, scoped, tag = 'input window, operand 2, single buffered']
    #allocation5 [shape = 's32[1]{0}', space=sflag, size = 0x4, scoped, tag = 'scoped memory for conv2d_pallas.1']
    %8 = vsyncpa [#allocation3], 0
    %9 = vsyncpa [#allocation5], 0
    // Predicated region
    $region2: #{conv2d_pallas.1} parent=1 // pred_check
      _
    $region3: #{conv2d_pallas.1} parent=1 // pred_check_branch
      %11 = sbr.rel (0) target = $region5
    $region4: #{conv2d_pallas.1} parent=1 // pred_region
      _
    $region5: #{conv2d_pallas.1} parent=1 // pred_fallthru
      _
    // Predicated region
    $region6: #{conv2d_pallas.1} parent=1 // pred_check
      _
    $region7: #{conv2d_pallas.1} parent=1 // pred_check_branch
      %13 = sbr.rel (0) target = $region9
    $region8: #{conv2d_pallas.1} parent=1 // pred_region
      %s15 = ssub.s32 128, 128
      %16 = vsyncadd [#allocation3], %s15
      %s18 = sshll.u32 %s1, 4
      %s19 = int_to_ptr.vmem [resolvable:$true] %s18
      %21 = dma.vmem_to_smem %s19, 128, [#allocation2], [#allocation3]
    $region9: #{conv2d_pallas.1} parent=1 // pred_fallthru
      _
    // Predicated region
    $region10: #{conv2d_pallas.1} parent=1 // pred_check
      _
    $region11: #{conv2d_pallas.1} parent=1 // pred_check_branch
      %23 = sbr.rel (0) target = $region13
    $region12: #{conv2d_pallas.1} parent=1 // pred_region
      %s25 = ssub.s32 16, 16
      %26 = vsyncadd [#allocation5], %s25
      %s28 = sshll.u32 %s2, 4
      %s29 = int_to_ptr.vmem [resolvable:$true] %s28
      %31 = dma.vmem_to_smem %s29, 16, [#allocation4], [#allocation5]
    $region13: #{conv2d_pallas.1} parent=1 // pred_fallthru
      _
    // Predicated region
    $region14: #{conv2d_pallas.1} parent=1 // pred_check
      _
    $region15: #{conv2d_pallas.1} parent=1 // pred_check_branch
      %33 = sbr.rel (0) target = $region17
    $region16: #{conv2d_pallas.1} parent=1 // pred_region
      %34 = dma.done [#allocation3], 128
    $region17: #{conv2d_pallas.1} parent=1 // pred_fallthru
      _
    // Predicated region
    $region18: #{conv2d_pallas.1} parent=1 // pred_check
      _
    $region19: #{conv2d_pallas.1} parent=1 // pred_check_branch
      %36 = sbr.rel (0) target = $region21
    $region20: #{conv2d_pallas.1} parent=1 // pred_region
      %37 = dma.done [#allocation5], 16
    $region21: #{conv2d_pallas.1} parent=1 // pred_fallthru
      _
    %38 = sfence
    %s39 = sld [smem:[#allocation2]]
    %s40 = sld [smem:[#allocation2 + $0x1]]
    %s41 = sld [smem:[#allocation2 + $0x2]]
    %s42 = sld [smem:[#allocation2 + $0x3]]
    %s43 = sld [smem:[#allocation2 + $0x4]]
    %s44 = sld [smem:[#allocation2 + $0x5]]
    %s45 = sld [smem:[#allocation2 + $0x6]]
    %s46 = sld [smem:[#allocation2 + $0x7]]
    %s47 = sld [smem:[#allocation2 + $0x8]]
    %s48 = sld [smem:[#allocation2 + $0x9]]
    %s49 = sld [smem:[#allocation2 + $0xa]]
    %s50 = sld [smem:[#allocation2 + $0xb]]
    %s51 = sld [smem:[#allocation2 + $0xc]]
    %s52 = sld [smem:[#allocation2 + $0xd]]
    %s53 = sld [smem:[#allocation2 + $0xe]]
    %s54 = sld [smem:[#allocation2 + $0xf]]
    %s55 = sld [smem:[#allocation2 + $0x10]]
    %s56 = sld [smem:[#allocation2 + $0x11]]
    %s57 = sld [smem:[#allocation2 + $0x12]]
    %s58 = sld [smem:[#allocation2 + $0x13]]
    %s59 = sld [smem:[#allocation2 + $0x14]]
    %s60 = sld [smem:[#allocation2 + $0x15]]
    %s61 = sld [smem:[#allocation2 + $0x16]]
    %s62 = sld [smem:[#allocation2 + $0x17]]
    %s63 = sld [smem:[#allocation2 + $0x18]]
    %s64 = sld [smem:[#allocation2 + $0x19]]
    %s65 = sld [smem:[#allocation2 + $0x1a]]
    %s66 = sld [smem:[#allocation2 + $0x80]]
    %s67 = sld [smem:[#allocation2 + $0x81]]
    %s68 = sld [smem:[#allocation2 + $0x82]]
    %s69 = sld [smem:[#allocation2 + $0x83]]
    %s70 = sld [smem:[#allocation2 + $0x84]]
    %s71 = sld [smem:[#allocation2 + $0x85]]
    %s72 = sld [smem:[#allocation2 + $0x86]]
    %s73 = sld [smem:[#allocation2 + $0x87]]
    %s74 = sld [smem:[#allocation2 + $0x88]]
    %s75 = sld [smem:[#allocation2 + $0x89]]
    %s76 = sld [smem:[#allocation2 + $0x8a]]
    %s77 = sld [smem:[#allocation2 + $0x8b]]
    %s78 = sld [smem:[#allocation2 + $0x8c]]
    %s79 = sld [smem:[#allocation2 + $0x8d]]
    %s80 = sld [smem:[#allocation2 + $0x8e]]
    %s81 = sld [smem:[#allocation2 + $0x8f]]
    %s82 = sld [smem:[#allocation2 + $0x90]]
    %s83 = sld [smem:[#allocation2 + $0x91]]
    %s84 = sld [smem:[#allocation2 + $0x92]]
    %s85 = sld [smem:[#allocation2 + $0x93]]
    %s86 = sld [smem:[#allocation2 + $0x94]]
    %s87 = sld [smem:[#allocation2 + $0x95]]
    %s88 = sld [smem:[#allocation2 + $0x96]]
    %s89 = sld [smem:[#allocation2 + $0x97]]
    %s90 = sld [smem:[#allocation2 + $0x98]]
    %s91 = sld [smem:[#allocation2 + $0x99]]
    %s92 = sld [smem:[#allocation2 + $0x9a]]
    %s93 = sld [smem:[#allocation2 + $0x100]]
    %s94 = sld [smem:[#allocation2 + $0x101]]
    %s95 = sld [smem:[#allocation2 + $0x102]]
    %s96 = sld [smem:[#allocation2 + $0x103]]
    %s97 = sld [smem:[#allocation2 + $0x104]]
    %s98 = sld [smem:[#allocation2 + $0x105]]
    %s99 = sld [smem:[#allocation2 + $0x106]]
    %s100 = sld [smem:[#allocation2 + $0x107]]
    %s101 = sld [smem:[#allocation2 + $0x108]]
    %s102 = sld [smem:[#allocation2 + $0x109]]
    %s103 = sld [smem:[#allocation2 + $0x10a]]
    %s104 = sld [smem:[#allocation2 + $0x10b]]
    %s105 = sld [smem:[#allocation2 + $0x10c]]
    %s106 = sld [smem:[#allocation2 + $0x10d]]
    %s107 = sld [smem:[#allocation2 + $0x10e]]
    %s108 = sld [smem:[#allocation2 + $0x10f]]
    %s109 = sld [smem:[#allocation2 + $0x110]]
    %s110 = sld [smem:[#allocation2 + $0x111]]
    %s111 = sld [smem:[#allocation2 + $0x112]]
    %s112 = sld [smem:[#allocation2 + $0x113]]
    %s113 = sld [smem:[#allocation2 + $0x114]]
    %s114 = sld [smem:[#allocation2 + $0x115]]
    %s115 = sld [smem:[#allocation2 + $0x116]]
    %s116 = sld [smem:[#allocation2 + $0x117]]
    %s117 = sld [smem:[#allocation2 + $0x118]]
    %s118 = sld [smem:[#allocation2 + $0x119]]
    %s119 = sld [smem:[#allocation2 + $0x11a]]
    %s120 = sld [smem:[#allocation2 + $0x180]]
    %s121 = sld [smem:[#allocation2 + $0x181]]
    %s122 = sld [smem:[#allocation2 + $0x182]]
    %s123 = sld [smem:[#allocation2 + $0x183]]
    %s124 = sld [smem:[#allocation2 + $0x184]]
    %s125 = sld [smem:[#allocation2 + $0x185]]
    %s126 = sld [smem:[#allocation2 + $0x186]]
    %s127 = sld [smem:[#allocation2 + $0x187]]
    %s128 = sld [smem:[#allocation2 + $0x188]]
    %s129 = sld [smem:[#allocation2 + $0x189]]
    %s130 = sld [smem:[#allocation2 + $0x18a]]
    %s131 = sld [smem:[#allocation2 + $0x18b]]
    %s132 = sld [smem:[#allocation2 + $0x18c]]
    %s133 = sld [smem:[#allocation2 + $0x18d]]
    %s134 = sld [smem:[#allocation2 + $0x18e]]
    %s135 = sld [smem:[#allocation2 + $0x18f]]
    %s136 = sld [smem:[#allocation2 + $0x190]]
    %s137 = sld [smem:[#allocation2 + $0x191]]
    %s138 = sld [smem:[#allocation2 + $0x192]]
    %s139 = sld [smem:[#allocation2 + $0x193]]
    %s140 = sld [smem:[#allocation2 + $0x194]]
    %s141 = sld [smem:[#allocation2 + $0x195]]
    %s142 = sld [smem:[#allocation2 + $0x196]]
    %s143 = sld [smem:[#allocation2 + $0x197]]
    %s144 = sld [smem:[#allocation2 + $0x198]]
    %s145 = sld [smem:[#allocation2 + $0x199]]
    %s146 = sld [smem:[#allocation2 + $0x19a]]
    %s147 = sld [smem:[#allocation2 + $0x200]]
    %s148 = sld [smem:[#allocation2 + $0x201]]
    %s149 = sld [smem:[#allocation2 + $0x202]]
    %s150 = sld [smem:[#allocation2 + $0x203]]
    %s151 = sld [smem:[#allocation2 + $0x204]]
    %s152 = sld [smem:[#allocation2 + $0x205]]
    %s153 = sld [smem:[#allocation2 + $0x206]]
    %s154 = sld [smem:[#allocation2 + $0x207]]
    %s155 = sld [smem:[#allocation2 + $0x208]]
    %s156 = sld [smem:[#allocation2 + $0x209]]
    %s157 = sld [smem:[#allocation2 + $0x20a]]
    %s158 = sld [smem:[#allocation2 + $0x20b]]
    %s159 = sld [smem:[#allocation2 + $0x20c]]
    %s160 = sld [smem:[#allocation2 + $0x20d]]
    %s161 = sld [smem:[#allocation2 + $0x20e]]
    %s162 = sld [smem:[#allocation2 + $0x20f]]
    %s163 = sld [smem:[#allocation2 + $0x210]]
    %s164 = sld [smem:[#allocation2 + $0x211]]
    %s165 = sld [smem:[#allocation2 + $0x212]]
    %s166 = sld [smem:[#allocation2 + $0x213]]
    %s167 = sld [smem:[#allocation2 + $0x214]]
    %s168 = sld [smem:[#allocation2 + $0x215]]
    %s169 = sld [smem:[#allocation2 + $0x216]]
    %s170 = sld [smem:[#allocation2 + $0x217]]
    %s171 = sld [smem:[#allocation2 + $0x218]]
    %s172 = sld [smem:[#allocation2 + $0x219]]
    %s173 = sld [smem:[#allocation2 + $0x21a]]
    %s174 = sld [smem:[#allocation2 + $0x280]]
    %s175 = sld [smem:[#allocation2 + $0x281]]
    %s176 = sld [smem:[#allocation2 + $0x282]]
    %s177 = sld [smem:[#allocation2 + $0x283]]
    %s178 = sld [smem:[#allocation2 + $0x284]]
    %s179 = sld [smem:[#allocation2 + $0x285]]
    %s180 = sld [smem:[#allocation2 + $0x286]]
    %s181 = sld [smem:[#allocation2 + $0x287]]
    %s182 = sld [smem:[#allocation2 + $0x288]]
    %s183 = sld [smem:[#allocation2 + $0x289]]
    %s184 = sld [smem:[#allocation2 + $0x28a]]
    %s185 = sld [smem:[#allocation2 + $0x28b]]
    %s186 = sld [smem:[#allocation2 + $0x28c]]
    %s187 = sld [smem:[#allocation2 + $0x28d]]
    %s188 = sld [smem:[#allocation2 + $0x28e]]
    %s189 = sld [smem:[#allocation2 + $0x28f]]
    %s190 = sld [smem:[#allocation2 + $0x290]]
    %s191 = sld [smem:[#allocation2 + $0x291]]
    %s192 = sld [smem:[#allocation2 + $0x292]]
    %s193 = sld [smem:[#allocation2 + $0x293]]
    %s194 = sld [smem:[#allocation2 + $0x294]]
    %s195 = sld [smem:[#allocation2 + $0x295]]
    %s196 = sld [smem:[#allocation2 + $0x296]]
    %s197 = sld [smem:[#allocation2 + $0x297]]
    %s198 = sld [smem:[#allocation2 + $0x298]]
    %s199 = sld [smem:[#allocation2 + $0x299]]
    %s200 = sld [smem:[#allocation2 + $0x29a]]
    %s201 = sld [smem:[#allocation4]]
    %s202 = sld [smem:[#allocation4 + $0x1]]
    %s203 = sld [smem:[#allocation4 + $0x2]]
    %s204 = sld [smem:[#allocation4 + $0x3]]
    %s205 = sld [smem:[#allocation4 + $0x4]]
    %s206 = sld [smem:[#allocation4 + $0x5]]
    %v207 = vstv %s201
    %v208 = vstv %s202
    %v209 = vstv %s203
    %v210 = vstv %s204
    %v211 = vstv %s205
    %v212 = vstv %s206
    %v213 = vld [vmem:[%s0] sm:$0xff]
    %v214 = vld [vmem:[%s0 + $0x8] sm:$0x3f]
    %v215 = vstv %s39
    %v216 = vmul.f32 %v215, %v213
    %v217 = vmul.f32 %v215, %v214
    %v218 = vadd.f32 %v207, %v216
    %v219 = vadd.f32 %v207, %v217
    %v220 = vstv %s66
    %v221 = vmul.f32 %v220, %v213
    %v222 = vmul.f32 %v220, %v214
    %v223 = vadd.f32 %v208, %v221
    %v224 = vadd.f32 %v208, %v222
    %v225 = vstv %s93
    %v226 = vmul.f32 %v225, %v213
    %v227 = vmul.f32 %v225, %v214
    %v228 = vadd.f32 %v209, %v226
    %v229 = vadd.f32 %v209, %v227
    %v230 = vstv %s120
    %v231 = vmul.f32 %v230, %v213
    %v232 = vmul.f32 %v230, %v214
    %v233 = vadd.f32 %v210, %v231
    %v234 = vadd.f32 %v210, %v232
    %v235 = vstv %s147
    %v236 = vmul.f32 %v235, %v213
    %v237 = vmul.f32 %v235, %v214
    %v238 = vadd.f32 %v211, %v236
    %v239 = vadd.f32 %v211, %v237
    %v240 = vstv %s174
    %v241 = vmul.f32 %v240, %v213
    %v242 = vmul.f32 %v240, %v214
    %v243 = vadd.f32 %v212, %v241
    %v244 = vadd.f32 %v212, %v242
    %v245 = vstv %s40
    %v246 = vmul.f32 %v245, %v213
    %v247 = vmul.f32 %v245, %v214
    %250 = vrot.lane.b32.xlu0 %v246, 127
    %v251 = vpop.permute.xlu0 %250
    %252 = vrot.lane.b32.xlu0 %v247, 127
    %v253 = vpop.permute.xlu0 %252
    %v256 = vadd.f32 %v218, %v251
    %v257 = vadd.f32 %v219, %v253
    %v258 = vstv %s67
    %v259 = vmul.f32 %v258, %v213
    %v260 = vmul.f32 %v258, %v214
    %263 = vrot.lane.b32.xlu0 %v259, 127
    %v264 = vpop.permute.xlu0 %263
    %265 = vrot.lane.b32.xlu0 %v260, 127
    %v266 = vpop.permute.xlu0 %265
    %v269 = vadd.f32 %v223, %v264
    %v270 = vadd.f32 %v224, %v266
    %v271 = vstv %s94
    %v272 = vmul.f32 %v271, %v213
    %v273 = vmul.f32 %v271, %v214
    %276 = vrot.lane.b32.xlu0 %v272, 127
    %v277 = vpop.permute.xlu0 %276
    %278 = vrot.lane.b32.xlu0 %v273, 127
    %v279 = vpop.permute.xlu0 %278
    %v282 = vadd.f32 %v228, %v277
    %v283 = vadd.f32 %v229, %v279
    %v284 = vstv %s121
    %v285 = vmul.f32 %v284, %v213
    %v286 = vmul.f32 %v284, %v214
    %289 = vrot.lane.b32.xlu0 %v285, 127
    %v290 = vpop.permute.xlu0 %289
    %291 = vrot.lane.b32.xlu0 %v286, 127
    %v292 = vpop.permute.xlu0 %291
    %v295 = vadd.f32 %v233, %v290
    %v296 = vadd.f32 %v234, %v292
    %v297 = vstv %s148
    %v298 = vmul.f32 %v297, %v213
    %v299 = vmul.f32 %v297, %v214
    %302 = vrot.lane.b32.xlu0 %v298, 127
    %v303 = vpop.permute.xlu0 %302
    %304 = vrot.lane.b32.xlu0 %v299, 127
    %v305 = vpop.permute.xlu0 %304
    %v308 = vadd.f32 %v238, %v303
    %v309 = vadd.f32 %v239, %v305
    %v310 = vstv %s175
    %v311 = vmul.f32 %v310, %v213
    %v312 = vmul.f32 %v310, %v214
    %315 = vrot.lane.b32.xlu0 %v311, 127
    %v316 = vpop.permute.xlu0 %315
    %317 = vrot.lane.b32.xlu0 %v312, 127
    %v318 = vpop.permute.xlu0 %317
    %v321 = vadd.f32 %v243, %v316
    %v322 = vadd.f32 %v244, %v318
    %v323 = vstv %s41
    %v324 = vmul.f32 %v323, %v213
    %v325 = vmul.f32 %v323, %v214
    %328 = vrot.lane.b32.xlu0 %v324, 126
    %v329 = vpop.permute.xlu0 %328
    %330 = vrot.lane.b32.xlu0 %v325, 126
    %v331 = vpop.permute.xlu0 %330
    %v334 = vadd.f32 %v256, %v329
    %v335 = vadd.f32 %v257, %v331
    %v336 = vstv %s68
    %v337 = vmul.f32 %v336, %v213
    %v338 = vmul.f32 %v336, %v214
    %341 = vrot.lane.b32.xlu0 %v337, 126
    %v342 = vpop.permute.xlu0 %341
    %343 = vrot.lane.b32.xlu0 %v338, 126
    %v344 = vpop.permute.xlu0 %343
    %v347 = vadd.f32 %v269, %v342
    %v348 = vadd.f32 %v270, %v344
    %v349 = vstv %s95
    %v350 = vmul.f32 %v349, %v213
    %v351 = vmul.f32 %v349, %v214
    %354 = vrot.lane.b32.xlu0 %v350, 126
    %v355 = vpop.permute.xlu0 %354
    %356 = vrot.lane.b32.xlu0 %v351, 126
    %v357 = vpop.permute.xlu0 %356
    %v360 = vadd.f32 %v282, %v355
    %v361 = vadd.f32 %v283, %v357
    %v362 = vstv %s122
    %v363 = vmul.f32 %v362, %v213
    %v364 = vmul.f32 %v362, %v214
    %367 = vrot.lane.b32.xlu0 %v363, 126
    %v368 = vpop.permute.xlu0 %367
    %369 = vrot.lane.b32.xlu0 %v364, 126
    %v370 = vpop.permute.xlu0 %369
    %v373 = vadd.f32 %v295, %v368
    %v374 = vadd.f32 %v296, %v370
    %v375 = vstv %s149
    %v376 = vmul.f32 %v375, %v213
    %v377 = vmul.f32 %v375, %v214
    %380 = vrot.lane.b32.xlu0 %v376, 126
    %v381 = vpop.permute.xlu0 %380
    %382 = vrot.lane.b32.xlu0 %v377, 126
    %v383 = vpop.permute.xlu0 %382
    %v386 = vadd.f32 %v308, %v381
    %v387 = vadd.f32 %v309, %v383
    %v388 = vstv %s176
    %v389 = vmul.f32 %v388, %v213
    %v390 = vmul.f32 %v388, %v214
    %393 = vrot.lane.b32.xlu0 %v389, 126
    %v394 = vpop.permute.xlu0 %393
    %395 = vrot.lane.b32.xlu0 %v390, 126
    %v396 = vpop.permute.xlu0 %395
    %v399 = vadd.f32 %v321, %v394
    %v400 = vadd.f32 %v322, %v396
    %v401 = vld [vmem:[%s0 + $0x1] sm:$0xff]
    %v402 = vld [vmem:[%s0 + $0x9] sm:$0x3f]
    %v403 = vstv %s42
    %v404 = vmul.f32 %v403, %v401
    %v405 = vmul.f32 %v403, %v402
    %v406 = vadd.f32 %v334, %v404
    %v407 = vadd.f32 %v335, %v405
    %v408 = vstv %s69
    %v409 = vmul.f32 %v408, %v401
    %v410 = vmul.f32 %v408, %v402
    %v411 = vadd.f32 %v347, %v409
    %v412 = vadd.f32 %v348, %v410
    %v413 = vstv %s96
    %v414 = vmul.f32 %v413, %v401
    %v415 = vmul.f32 %v413, %v402
    %v416 = vadd.f32 %v360, %v414
    %v417 = vadd.f32 %v361, %v415
    %v418 = vstv %s123
    %v419 = vmul.f32 %v418, %v401
    %v420 = vmul.f32 %v418, %v402
    %v421 = vadd.f32 %v373, %v419
    %v422 = vadd.f32 %v374, %v420
    %v423 = vstv %s150
    %v424 = vmul.f32 %v423, %v401
    %v425 = vmul.f32 %v423, %v402
    %v426 = vadd.f32 %v386, %v424
    %v427 = vadd.f32 %v387, %v425
    %v428 = vstv %s177
    %v429 = vmul.f32 %v428, %v401
    %v430 = vmul.f32 %v428, %v402
    %v431 = vadd.f32 %v399, %v429
    %v432 = vadd.f32 %v400, %v430
    %v433 = vstv %s43
    %v434 = vmul.f32 %v433, %v401
    %v435 = vmul.f32 %v433, %v402
    %438 = vrot.lane.b32.xlu0 %v434, 127
    %v439 = vpop.permute.xlu0 %438
    %440 = vrot.lane.b32.xlu0 %v435, 127
    %v441 = vpop.permute.xlu0 %440
    %v444 = vadd.f32 %v406, %v439
    %v445 = vadd.f32 %v407, %v441
    %v446 = vstv %s70
    %v447 = vmul.f32 %v446, %v401
    %v448 = vmul.f32 %v446, %v402
    %451 = vrot.lane.b32.xlu0 %v447, 127
    %v452 = vpop.permute.xlu0 %451
    %453 = vrot.lane.b32.xlu0 %v448, 127
    %v454 = vpop.permute.xlu0 %453
    %v457 = vadd.f32 %v411, %v452
    %v458 = vadd.f32 %v412, %v454
    %v459 = vstv %s97
    %v460 = vmul.f32 %v459, %v401
    %v461 = vmul.f32 %v459, %v402
    %464 = vrot.lane.b32.xlu0 %v460, 127
    %v465 = vpop.permute.xlu0 %464
    %466 = vrot.lane.b32.xlu0 %v461, 127
    %v467 = vpop.permute.xlu0 %466
    %v470 = vadd.f32 %v416, %v465
    %v471 = vadd.f32 %v417, %v467
    %v472 = vstv %s124
    %v473 = vmul.f32 %v472, %v401
    %v474 = vmul.f32 %v472, %v402
    %477 = vrot.lane.b32.xlu0 %v473, 127
    %v478 = vpop.permute.xlu0 %477
    %479 = vrot.lane.b32.xlu0 %v474, 127
    %v480 = vpop.permute.xlu0 %479
    %v483 = vadd.f32 %v421, %v478
    %v484 = vadd.f32 %v422, %v480
    %v485 = vstv %s151
    %v486 = vmul.f32 %v485, %v401
    %v487 = vmul.f32 %v485, %v402
    %490 = vrot.lane.b32.xlu0 %v486, 127
    %v491 = vpop.permute.xlu0 %490
    %492 = vrot.lane.b32.xlu0 %v487, 127
    %v493 = vpop.permute.xlu0 %492
    %v496 = vadd.f32 %v426, %v491
    %v497 = vadd.f32 %v427, %v493
    %v498 = vstv %s178
    %v499 = vmul.f32 %v498, %v401
    %v500 = vmul.f32 %v498, %v402
    %503 = vrot.lane.b32.xlu0 %v499, 127
    %v504 = vpop.permute.xlu0 %503
    %505 = vrot.lane.b32.xlu0 %v500, 127
    %v506 = vpop.permute.xlu0 %505
    %v509 = vadd.f32 %v431, %v504
    %v510 = vadd.f32 %v432, %v506
    %v511 = vstv %s44
    %v512 = vmul.f32 %v511, %v401
    %v513 = vmul.f32 %v511, %v402
    %516 = vrot.lane.b32.xlu0 %v512, 126
    %v517 = vpop.permute.xlu0 %516
    %518 = vrot.lane.b32.xlu0 %v513, 126
    %v519 = vpop.permute.xlu0 %518
    %v522 = vadd.f32 %v444, %v517
    %v523 = vadd.f32 %v445, %v519
    %v524 = vstv %s71
    %v525 = vmul.f32 %v524, %v401
    %v526 = vmul.f32 %v524, %v402
    %529 = vrot.lane.b32.xlu0 %v525, 126
    %v530 = vpop.permute.xlu0 %529
    %531 = vrot.lane.b32.xlu0 %v526, 126
    %v532 = vpop.permute.xlu0 %531
    %v535 = vadd.f32 %v457, %v530
    %v536 = vadd.f32 %v458, %v532
    %v537 = vstv %s98
    %v538 = vmul.f32 %v537, %v401
    %v539 = vmul.f32 %v537, %v402
    %542 = vrot.lane.b32.xlu0 %v538, 126
    %v543 = vpop.permute.xlu0 %542
    %544 = vrot.lane.b32.xlu0 %v539, 126
    %v545 = vpop.permute.xlu0 %544
    %v548 = vadd.f32 %v470, %v543
    %v549 = vadd.f32 %v471, %v545
    %v550 = vstv %s125
    %v551 = vmul.f32 %v550, %v401
    %v552 = vmul.f32 %v550, %v402
    %555 = vrot.lane.b32.xlu0 %v551, 126
    %v556 = vpop.permute.xlu0 %555
    %557 = vrot.lane.b32.xlu0 %v552, 126
    %v558 = vpop.permute.xlu0 %557
    %v561 = vadd.f32 %v483, %v556
    %v562 = vadd.f32 %v484, %v558
    %v563 = vstv %s152
    %v564 = vmul.f32 %v563, %v401
    %v565 = vmul.f32 %v563, %v402
    %568 = vrot.lane.b32.xlu0 %v564, 126
    %v569 = vpop.permute.xlu0 %568
    %570 = vrot.lane.b32.xlu0 %v565, 126
    %v571 = vpop.permute.xlu0 %570
    %v574 = vadd.f32 %v496, %v569
    %v575 = vadd.f32 %v497, %v571
    %v576 = vstv %s179
    %v577 = vmul.f32 %v576, %v401
    %v578 = vmul.f32 %v576, %v402
    %581 = vrot.lane.b32.xlu0 %v577, 126
    %v582 = vpop.permute.xlu0 %581
    %583 = vrot.lane.b32.xlu0 %v578, 126
    %v584 = vpop.permute.xlu0 %583
    %v587 = vadd.f32 %v509, %v582
    %v588 = vadd.f32 %v510, %v584
    %v589 = vld [vmem:[%s0 + $0x2] sm:$0xff]
    %v590 = vld [vmem:[%s0 + $0xa] sm:$0x3f]
    %v591 = vstv %s45
    %v592 = vmul.f32 %v591, %v589
    %v593 = vmul.f32 %v591, %v590
    %v594 = vadd.f32 %v522, %v592
    %v595 = vadd.f32 %v523, %v593
    %v596 = vstv %s72
    %v597 = vmul.f32 %v596, %v589
    %v598 = vmul.f32 %v596, %v590
    %v599 = vadd.f32 %v535, %v597
    %v600 = vadd.f32 %v536, %v598
    %v601 = vstv %s99
    %v602 = vmul.f32 %v601, %v589
    %v603 = vmul.f32 %v601, %v590
    %v604 = vadd.f32 %v548, %v602
    %v605 = vadd.f32 %v549, %v603
    %v606 = vstv %s126
    %v607 = vmul.f32 %v606, %v589
    %v608 = vmul.f32 %v606, %v590
    %v609 = vadd.f32 %v561, %v607
    %v610 = vadd.f32 %v562, %v608
    %v611 = vstv %s153
    %v612 = vmul.f32 %v611, %v589
    %v613 = vmul.f32 %v611, %v590
    %v614 = vadd.f32 %v574, %v612
    %v615 = vadd.f32 %v575, %v613
    %v616 = vstv %s180
    %v617 = vmul.f32 %v616, %v589
    %v618 = vmul.f32 %v616, %v590
    %v619 = vadd.f32 %v587, %v617
    %v620 = vadd.f32 %v588, %v618
    %v621 = vstv %s46
    %v622 = vmul.f32 %v621, %v589
    %v623 = vmul.f32 %v621, %v590
    %626 = vrot.lane.b32.xlu0 %v622, 127
    %v627 = vpop.permute.xlu0 %626
    %628 = vrot.lane.b32.xlu0 %v623, 127
    %v629 = vpop.permute.xlu0 %628
    %v632 = vadd.f32 %v594, %v627
    %v633 = vadd.f32 %v595, %v629
    %v634 = vstv %s73
    %v635 = vmul.f32 %v634, %v589
    %v636 = vmul.f32 %v634, %v590
    %639 = vrot.lane.b32.xlu0 %v635, 127
    %v640 = vpop.permute.xlu0 %639
    %641 = vrot.lane.b32.xlu0 %v636, 127
    %v642 = vpop.permute.xlu0 %641
    %v645 = vadd.f32 %v599, %v640
    %v646 = vadd.f32 %v600, %v642
    %v647 = vstv %s100
    %v648 = vmul.f32 %v647, %v589
    %v649 = vmul.f32 %v647, %v590
    %652 = vrot.lane.b32.xlu0 %v648, 127
    %v653 = vpop.permute.xlu0 %652
    %654 = vrot.lane.b32.xlu0 %v649, 127
    %v655 = vpop.permute.xlu0 %654
    %v658 = vadd.f32 %v604, %v653
    %v659 = vadd.f32 %v605, %v655
    %v660 = vstv %s127
    %v661 = vmul.f32 %v660, %v589
    %v662 = vmul.f32 %v660, %v590
    %665 = vrot.lane.b32.xlu0 %v661, 127
    %v666 = vpop.permute.xlu0 %665
    %667 = vrot.lane.b32.xlu0 %v662, 127
    %v668 = vpop.permute.xlu0 %667
    %v671 = vadd.f32 %v609, %v666
    %v672 = vadd.f32 %v610, %v668
    %v673 = vstv %s154
    %v674 = vmul.f32 %v673, %v589
    %v675 = vmul.f32 %v673, %v590
    %678 = vrot.lane.b32.xlu0 %v674, 127
    %v679 = vpop.permute.xlu0 %678
    %680 = vrot.lane.b32.xlu0 %v675, 127
    %v681 = vpop.permute.xlu0 %680
    %v684 = vadd.f32 %v614, %v679
    %v685 = vadd.f32 %v615, %v681
    %v686 = vstv %s181
    %v687 = vmul.f32 %v686, %v589
    %v688 = vmul.f32 %v686, %v590
    %691 = vrot.lane.b32.xlu0 %v687, 127
    %v692 = vpop.permute.xlu0 %691
    %693 = vrot.lane.b32.xlu0 %v688, 127
    %v694 = vpop.permute.xlu0 %693
    %v697 = vadd.f32 %v619, %v692
    %v698 = vadd.f32 %v620, %v694
    %v699 = vstv %s47
    %v700 = vmul.f32 %v699, %v589
    %v701 = vmul.f32 %v699, %v590
    %704 = vrot.lane.b32.xlu0 %v700, 126
    %v705 = vpop.permute.xlu0 %704
    %706 = vrot.lane.b32.xlu0 %v701, 126
    %v707 = vpop.permute.xlu0 %706
    %v710 = vadd.f32 %v632, %v705
    %v711 = vadd.f32 %v633, %v707
    %v712 = vstv %s74
    %v713 = vmul.f32 %v712, %v589
    %v714 = vmul.f32 %v712, %v590
    %717 = vrot.lane.b32.xlu0 %v713, 126
    %v718 = vpop.permute.xlu0 %717
    %719 = vrot.lane.b32.xlu0 %v714, 126
    %v720 = vpop.permute.xlu0 %719
    %v723 = vadd.f32 %v645, %v718
    %v724 = vadd.f32 %v646, %v720
    %v725 = vstv %s101
    %v726 = vmul.f32 %v725, %v589
    %v727 = vmul.f32 %v725, %v590
    %730 = vrot.lane.b32.xlu0 %v726, 126
    %v731 = vpop.permute.xlu0 %730
    %732 = vrot.lane.b32.xlu0 %v727, 126
    %v733 = vpop.permute.xlu0 %732
    %v736 = vadd.f32 %v658, %v731
    %v737 = vadd.f32 %v659, %v733
    %v738 = vstv %s128
    %v739 = vmul.f32 %v738, %v589
    %v740 = vmul.f32 %v738, %v590
    %743 = vrot.lane.b32.xlu0 %v739, 126
    %v744 = vpop.permute.xlu0 %743
    %745 = vrot.lane.b32.xlu0 %v740, 126
    %v746 = vpop.permute.xlu0 %745
    %v749 = vadd.f32 %v671, %v744
    %v750 = vadd.f32 %v672, %v746
    %v751 = vstv %s155
    %v752 = vmul.f32 %v751, %v589
    %v753 = vmul.f32 %v751, %v590
    %756 = vrot.lane.b32.xlu0 %v752, 126
    %v757 = vpop.permute.xlu0 %756
    %758 = vrot.lane.b32.xlu0 %v753, 126
    %v759 = vpop.permute.xlu0 %758
    %v762 = vadd.f32 %v684, %v757
    %v763 = vadd.f32 %v685, %v759
    %v764 = vstv %s182
    %v765 = vmul.f32 %v764, %v589
    %v766 = vmul.f32 %v764, %v590
    %769 = vrot.lane.b32.xlu0 %v765, 126
    %v770 = vpop.permute.xlu0 %769
    %771 = vrot.lane.b32.xlu0 %v766, 126
    %v772 = vpop.permute.xlu0 %771
    %v775 = vadd.f32 %v697, %v770
    %v776 = vadd.f32 %v698, %v772
    %s777 = scalar_lea.vmem %s0, 16
    %v778 = vld [vmem:[%s777] sm:$0xff]
    %v779 = vld [vmem:[%s777 + $0x8] sm:$0x3f]
    %v780 = vstv %s48
    %v781 = vmul.f32 %v780, %v778
    %v782 = vmul.f32 %v780, %v779
    %v783 = vadd.f32 %v710, %v781
    %v784 = vadd.f32 %v711, %v782
    %v785 = vstv %s75
    %v786 = vmul.f32 %v785, %v778
    %v787 = vmul.f32 %v785, %v779
    %v788 = vadd.f32 %v723, %v786
    %v789 = vadd.f32 %v724, %v787
    %v790 = vstv %s102
    %v791 = vmul.f32 %v790, %v778
    %v792 = vmul.f32 %v790, %v779
    %v793 = vadd.f32 %v736, %v791
    %v794 = vadd.f32 %v737, %v792
    %v795 = vstv %s129
    %v796 = vmul.f32 %v795, %v778
    %v797 = vmul.f32 %v795, %v779
    %v798 = vadd.f32 %v749, %v796
    %v799 = vadd.f32 %v750, %v797
    %v800 = vstv %s156
    %v801 = vmul.f32 %v800, %v778
    %v802 = vmul.f32 %v800, %v779
    %v803 = vadd.f32 %v762, %v801
    %v804 = vadd.f32 %v763, %v802
    %v805 = vstv %s183
    %v806 = vmul.f32 %v805, %v778
    %v807 = vmul.f32 %v805, %v779
    %v808 = vadd.f32 %v775, %v806
    %v809 = vadd.f32 %v776, %v807
    %v810 = vstv %s49
    %v811 = vmul.f32 %v810, %v778
    %v812 = vmul.f32 %v810, %v779
    %815 = vrot.lane.b32.xlu0 %v811, 127
    %v816 = vpop.permute.xlu0 %815
    %817 = vrot.lane.b32.xlu0 %v812, 127
    %v818 = vpop.permute.xlu0 %817
    %v821 = vadd.f32 %v783, %v816
    %v822 = vadd.f32 %v784, %v818
    %v823 = vstv %s76
    %v824 = vmul.f32 %v823, %v778
    %v825 = vmul.f32 %v823, %v779
    %828 = vrot.lane.b32.xlu0 %v824, 127
    %v829 = vpop.permute.xlu0 %828
    %830 = vrot.lane.b32.xlu0 %v825, 127
    %v831 = vpop.permute.xlu0 %830
    %v834 = vadd.f32 %v788, %v829
    %v835 = vadd.f32 %v789, %v831
    %v836 = vstv %s103
    %v837 = vmul.f32 %v836, %v778
    %v838 = vmul.f32 %v836, %v779
    %841 = vrot.lane.b32.xlu0 %v837, 127
    %v842 = vpop.permute.xlu0 %841
    %843 = vrot.lane.b32.xlu0 %v838, 127
    %v844 = vpop.permute.xlu0 %843
    %v847 = vadd.f32 %v793, %v842
    %v848 = vadd.f32 %v794, %v844
    %v849 = vstv %s130
    %v850 = vmul.f32 %v849, %v778
    %v851 = vmul.f32 %v849, %v779
    %854 = vrot.lane.b32.xlu0 %v850, 127
    %v855 = vpop.permute.xlu0 %854
    %856 = vrot.lane.b32.xlu0 %v851, 127
    %v857 = vpop.permute.xlu0 %856
    %v860 = vadd.f32 %v798, %v855
    %v861 = vadd.f32 %v799, %v857
    %v862 = vstv %s157
    %v863 = vmul.f32 %v862, %v778
    %v864 = vmul.f32 %v862, %v779
    %867 = vrot.lane.b32.xlu0 %v863, 127
    %v868 = vpop.permute.xlu0 %867
    %869 = vrot.lane.b32.xlu0 %v864, 127
    %v870 = vpop.permute.xlu0 %869
    %v873 = vadd.f32 %v803, %v868
    %v874 = vadd.f32 %v804, %v870
    %v875 = vstv %s184
    %v876 = vmul.f32 %v875, %v778
    %v877 = vmul.f32 %v875, %v779
    %880 = vrot.lane.b32.xlu0 %v876, 127
    %v881 = vpop.permute.xlu0 %880
    %882 = vrot.lane.b32.xlu0 %v877, 127
    %v883 = vpop.permute.xlu0 %882
    %v886 = vadd.f32 %v808, %v881
    %v887 = vadd.f32 %v809, %v883
    %v888 = vstv %s50
    %v889 = vmul.f32 %v888, %v778
    %v890 = vmul.f32 %v888, %v779
    %893 = vrot.lane.b32.xlu0 %v889, 126
    %v894 = vpop.permute.xlu0 %893
    %895 = vrot.lane.b32.xlu0 %v890, 126
    %v896 = vpop.permute.xlu0 %895
    %v899 = vadd.f32 %v821, %v894
    %v900 = vadd.f32 %v822, %v896
    %v901 = vstv %s77
    %v902 = vmul.f32 %v901, %v778
    %v903 = vmul.f32 %v901, %v779
    %906 = vrot.lane.b32.xlu0 %v902, 126
    %v907 = vpop.permute.xlu0 %906
    %908 = vrot.lane.b32.xlu0 %v903, 126
    %v909 = vpop.permute.xlu0 %908
    %v912 = vadd.f32 %v834, %v907
    %v913 = vadd.f32 %v835, %v909
    %v914 = vstv %s104
    %v915 = vmul.f32 %v914, %v778
    %v916 = vmul.f32 %v914, %v779
    %919 = vrot.lane.b32.xlu0 %v915, 126
    %v920 = vpop.permute.xlu0 %919
    %921 = vrot.lane.b32.xlu0 %v916, 126
    %v922 = vpop.permute.xlu0 %921
    %v925 = vadd.f32 %v847, %v920
    %v926 = vadd.f32 %v848, %v922
    %v927 = vstv %s131
    %v928 = vmul.f32 %v927, %v778
    %v929 = vmul.f32 %v927, %v779
    %932 = vrot.lane.b32.xlu0 %v928, 126
    %v933 = vpop.permute.xlu0 %932
    %934 = vrot.lane.b32.xlu0 %v929, 126
    %v935 = vpop.permute.xlu0 %934
    %v938 = vadd.f32 %v860, %v933
    %v939 = vadd.f32 %v861, %v935
    %v940 = vstv %s158
    %v941 = vmul.f32 %v940, %v778
    %v942 = vmul.f32 %v940, %v779
    %945 = vrot.lane.b32.xlu0 %v941, 126
    %v946 = vpop.permute.xlu0 %945
    %947 = vrot.lane.b32.xlu0 %v942, 126
    %v948 = vpop.permute.xlu0 %947
    %v951 = vadd.f32 %v873, %v946
    %v952 = vadd.f32 %v874, %v948
    %v953 = vstv %s185
    %v954 = vmul.f32 %v953, %v778
    %v955 = vmul.f32 %v953, %v779
    %958 = vrot.lane.b32.xlu0 %v954, 126
    %v959 = vpop.permute.xlu0 %958
    %960 = vrot.lane.b32.xlu0 %v955, 126
    %v961 = vpop.permute.xlu0 %960
    %v964 = vadd.f32 %v886, %v959
    %v965 = vadd.f32 %v887, %v961
    %v966 = vld [vmem:[%s777 + $0x1] sm:$0xff]
    %v967 = vld [vmem:[%s777 + $0x9] sm:$0x3f]
    %v968 = vstv %s51
    %v969 = vmul.f32 %v968, %v966
    %v970 = vmul.f32 %v968, %v967
    %v971 = vadd.f32 %v899, %v969
    %v972 = vadd.f32 %v900, %v970
    %v973 = vstv %s78
    %v974 = vmul.f32 %v973, %v966
    %v975 = vmul.f32 %v973, %v967
    %v976 = vadd.f32 %v912, %v974
    %v977 = vadd.f32 %v913, %v975
    %v978 = vstv %s105
    %v979 = vmul.f32 %v978, %v966
    %v980 = vmul.f32 %v978, %v967
    %v981 = vadd.f32 %v925, %v979
    %v982 = vadd.f32 %v926, %v980
    %v983 = vstv %s132
    %v984 = vmul.f32 %v983, %v966
    %v985 = vmul.f32 %v983, %v967
    %v986 = vadd.f32 %v938, %v984
    %v987 = vadd.f32 %v939, %v985
    %v988 = vstv %s159
    %v989 = vmul.f32 %v988, %v966
    %v990 = vmul.f32 %v988, %v967
    %v991 = vadd.f32 %v951, %v989
    %v992 = vadd.f32 %v952, %v990
    %v993 = vstv %s186
    %v994 = vmul.f32 %v993, %v966
    %v995 = vmul.f32 %v993, %v967
    %v996 = vadd.f32 %v964, %v994
    %v997 = vadd.f32 %v965, %v995
    %v998 = vstv %s52
    %v999 = vmul.f32 %v998, %v966
    %v1000 = vmul.f32 %v998, %v967
    %1003 = vrot.lane.b32.xlu0 %v999, 127
    %v1004 = vpop.permute.xlu0 %1003
    %1005 = vrot.lane.b32.xlu0 %v1000, 127
    %v1006 = vpop.permute.xlu0 %1005
    %v1009 = vadd.f32 %v971, %v1004
    %v1010 = vadd.f32 %v972, %v1006
    %v1011 = vstv %s79
    %v1012 = vmul.f32 %v1011, %v966
    %v1013 = vmul.f32 %v1011, %v967
    %1016 = vrot.lane.b32.xlu0 %v1012, 127
    %v1017 = vpop.permute.xlu0 %1016
    %1018 = vrot.lane.b32.xlu0 %v1013, 127
    %v1019 = vpop.permute.xlu0 %1018
    %v1022 = vadd.f32 %v976, %v1017
    %v1023 = vadd.f32 %v977, %v1019
    %v1024 = vstv %s106
    %v1025 = vmul.f32 %v1024, %v966
    %v1026 = vmul.f32 %v1024, %v967
    %1029 = vrot.lane.b32.xlu0 %v1025, 127
    %v1030 = vpop.permute.xlu0 %1029
    %1031 = vrot.lane.b32.xlu0 %v1026, 127
    %v1032 = vpop.permute.xlu0 %1031
    %v1035 = vadd.f32 %v981, %v1030
    %v1036 = vadd.f32 %v982, %v1032
    %v1037 = vstv %s133
    %v1038 = vmul.f32 %v1037, %v966
    %v1039 = vmul.f32 %v1037, %v967
    %1042 = vrot.lane.b32.xlu0 %v1038, 127
    %v1043 = vpop.permute.xlu0 %1042
    %1044 = vrot.lane.b32.xlu0 %v1039, 127
    %v1045 = vpop.permute.xlu0 %1044
    %v1048 = vadd.f32 %v986, %v1043
    %v1049 = vadd.f32 %v987, %v1045
    %v1050 = vstv %s160
    %v1051 = vmul.f32 %v1050, %v966
    %v1052 = vmul.f32 %v1050, %v967
    %1055 = vrot.lane.b32.xlu0 %v1051, 127
    %v1056 = vpop.permute.xlu0 %1055
    %1057 = vrot.lane.b32.xlu0 %v1052, 127
    %v1058 = vpop.permute.xlu0 %1057
    %v1061 = vadd.f32 %v991, %v1056
    %v1062 = vadd.f32 %v992, %v1058
    %v1063 = vstv %s187
    %v1064 = vmul.f32 %v1063, %v966
    %v1065 = vmul.f32 %v1063, %v967
    %1068 = vrot.lane.b32.xlu0 %v1064, 127
    %v1069 = vpop.permute.xlu0 %1068
    %1070 = vrot.lane.b32.xlu0 %v1065, 127
    %v1071 = vpop.permute.xlu0 %1070
    %v1074 = vadd.f32 %v996, %v1069
    %v1075 = vadd.f32 %v997, %v1071
    %v1076 = vstv %s53
    %v1077 = vmul.f32 %v1076, %v966
    %v1078 = vmul.f32 %v1076, %v967
    %1081 = vrot.lane.b32.xlu0 %v1077, 126
    %v1082 = vpop.permute.xlu0 %1081
    %1083 = vrot.lane.b32.xlu0 %v1078, 126
    %v1084 = vpop.permute.xlu0 %1083
    %v1087 = vadd.f32 %v1009, %v1082
    %v1088 = vadd.f32 %v1010, %v1084
    %v1089 = vstv %s80
    %v1090 = vmul.f32 %v1089, %v966
    %v1091 = vmul.f32 %v1089, %v967
    %1094 = vrot.lane.b32.xlu0 %v1090, 126
    %v1095 = vpop.permute.xlu0 %1094
    %1096 = vrot.lane.b32.xlu0 %v1091, 126
    %v1097 = vpop.permute.xlu0 %1096
    %v1100 = vadd.f32 %v1022, %v1095
    %v1101 = vadd.f32 %v1023, %v1097
    %v1102 = vstv %s107
    %v1103 = vmul.f32 %v1102, %v966
    %v1104 = vmul.f32 %v1102, %v967
    %1107 = vrot.lane.b32.xlu0 %v1103, 126
    %v1108 = vpop.permute.xlu0 %1107
    %1109 = vrot.lane.b32.xlu0 %v1104, 126
    %v1110 = vpop.permute.xlu0 %1109
    %v1113 = vadd.f32 %v1035, %v1108
    %v1114 = vadd.f32 %v1036, %v1110
    %v1115 = vstv %s134
    %v1116 = vmul.f32 %v1115, %v966
    %v1117 = vmul.f32 %v1115, %v967
    %1120 = vrot.lane.b32.xlu0 %v1116, 126
    %v1121 = vpop.permute.xlu0 %1120
    %1122 = vrot.lane.b32.xlu0 %v1117, 126
    %v1123 = vpop.permute.xlu0 %1122
    %v1126 = vadd.f32 %v1048, %v1121
    %v1127 = vadd.f32 %v1049, %v1123
    %v1128 = vstv %s161
    %v1129 = vmul.f32 %v1128, %v966
    %v1130 = vmul.f32 %v1128, %v967
    %1133 = vrot.lane.b32.xlu0 %v1129, 126
    %v1134 = vpop.permute.xlu0 %1133
    %1135 = vrot.lane.b32.xlu0 %v1130, 126
    %v1136 = vpop.permute.xlu0 %1135
    %v1139 = vadd.f32 %v1061, %v1134
    %v1140 = vadd.f32 %v1062, %v1136
    %v1141 = vstv %s188
    %v1142 = vmul.f32 %v1141, %v966
    %v1143 = vmul.f32 %v1141, %v967
    %1146 = vrot.lane.b32.xlu0 %v1142, 126
    %v1147 = vpop.permute.xlu0 %1146
    %1148 = vrot.lane.b32.xlu0 %v1143, 126
    %v1149 = vpop.permute.xlu0 %1148
    %v1152 = vadd.f32 %v1074, %v1147
    %v1153 = vadd.f32 %v1075, %v1149
    %v1154 = vld [vmem:[%s777 + $0x2] sm:$0xff]
    %v1155 = vld [vmem:[%s777 + $0xa] sm:$0x3f]
    %v1156 = vstv %s54
    %v1157 = vmul.f32 %v1156, %v1154
    %v1158 = vmul.f32 %v1156, %v1155
    %v1159 = vadd.f32 %v1087, %v1157
    %v1160 = vadd.f32 %v1088, %v1158
    %v1161 = vstv %s81
    %v1162 = vmul.f32 %v1161, %v1154
    %v1163 = vmul.f32 %v1161, %v1155
    %v1164 = vadd.f32 %v1100, %v1162
    %v1165 = vadd.f32 %v1101, %v1163
    %v1166 = vstv %s108
    %v1167 = vmul.f32 %v1166, %v1154
    %v1168 = vmul.f32 %v1166, %v1155
    %v1169 = vadd.f32 %v1113, %v1167
    %v1170 = vadd.f32 %v1114, %v1168
    %v1171 = vstv %s135
    %v1172 = vmul.f32 %v1171, %v1154
    %v1173 = vmul.f32 %v1171, %v1155
    %v1174 = vadd.f32 %v1126, %v1172
    %v1175 = vadd.f32 %v1127, %v1173
    %v1176 = vstv %s162
    %v1177 = vmul.f32 %v1176, %v1154
    %v1178 = vmul.f32 %v1176, %v1155
    %v1179 = vadd.f32 %v1139, %v1177
    %v1180 = vadd.f32 %v1140, %v1178
    %v1181 = vstv %s189
    %v1182 = vmul.f32 %v1181, %v1154
    %v1183 = vmul.f32 %v1181, %v1155
    %v1184 = vadd.f32 %v1152, %v1182
    %v1185 = vadd.f32 %v1153, %v1183
    %v1186 = vstv %s55
    %v1187 = vmul.f32 %v1186, %v1154
    %v1188 = vmul.f32 %v1186, %v1155
    %1191 = vrot.lane.b32.xlu0 %v1187, 127
    %v1192 = vpop.permute.xlu0 %1191
    %1193 = vrot.lane.b32.xlu0 %v1188, 127
    %v1194 = vpop.permute.xlu0 %1193
    %v1197 = vadd.f32 %v1159, %v1192
    %v1198 = vadd.f32 %v1160, %v1194
    %v1199 = vstv %s82
    %v1200 = vmul.f32 %v1199, %v1154
    %v1201 = vmul.f32 %v1199, %v1155
    %1204 = vrot.lane.b32.xlu0 %v1200, 127
    %v1205 = vpop.permute.xlu0 %1204
    %1206 = vrot.lane.b32.xlu0 %v1201, 127
    %v1207 = vpop.permute.xlu0 %1206
    %v1210 = vadd.f32 %v1164, %v1205
    %v1211 = vadd.f32 %v1165, %v1207
    %v1212 = vstv %s109
    %v1213 = vmul.f32 %v1212, %v1154
    %v1214 = vmul.f32 %v1212, %v1155
    %1217 = vrot.lane.b32.xlu0 %v1213, 127
    %v1218 = vpop.permute.xlu0 %1217
    %1219 = vrot.lane.b32.xlu0 %v1214, 127
    %v1220 = vpop.permute.xlu0 %1219
    %v1223 = vadd.f32 %v1169, %v1218
    %v1224 = vadd.f32 %v1170, %v1220
    %v1225 = vstv %s136
    %v1226 = vmul.f32 %v1225, %v1154
    %v1227 = vmul.f32 %v1225, %v1155
    %1230 = vrot.lane.b32.xlu0 %v1226, 127
    %v1231 = vpop.permute.xlu0 %1230
    %1232 = vrot.lane.b32.xlu0 %v1227, 127
    %v1233 = vpop.permute.xlu0 %1232
    %v1236 = vadd.f32 %v1174, %v1231
    %v1237 = vadd.f32 %v1175, %v1233
    %v1238 = vstv %s163
    %v1239 = vmul.f32 %v1238, %v1154
    %v1240 = vmul.f32 %v1238, %v1155
    %1243 = vrot.lane.b32.xlu0 %v1239, 127
    %v1244 = vpop.permute.xlu0 %1243
    %1245 = vrot.lane.b32.xlu0 %v1240, 127
    %v1246 = vpop.permute.xlu0 %1245
    %v1249 = vadd.f32 %v1179, %v1244
    %v1250 = vadd.f32 %v1180, %v1246
    %v1251 = vstv %s190
    %v1252 = vmul.f32 %v1251, %v1154
    %v1253 = vmul.f32 %v1251, %v1155
    %1256 = vrot.lane.b32.xlu0 %v1252, 127
    %v1257 = vpop.permute.xlu0 %1256
    %1258 = vrot.lane.b32.xlu0 %v1253, 127
    %v1259 = vpop.permute.xlu0 %1258
    %v1262 = vadd.f32 %v1184, %v1257
    %v1263 = vadd.f32 %v1185, %v1259
    %v1264 = vstv %s56
    %v1265 = vmul.f32 %v1264, %v1154
    %v1266 = vmul.f32 %v1264, %v1155
    %1269 = vrot.lane.b32.xlu0 %v1265, 126
    %v1270 = vpop.permute.xlu0 %1269
    %1271 = vrot.lane.b32.xlu0 %v1266, 126
    %v1272 = vpop.permute.xlu0 %1271
    %v1275 = vadd.f32 %v1197, %v1270
    %v1276 = vadd.f32 %v1198, %v1272
    %v1277 = vstv %s83
    %v1278 = vmul.f32 %v1277, %v1154
    %v1279 = vmul.f32 %v1277, %v1155
    %1282 = vrot.lane.b32.xlu0 %v1278, 126
    %v1283 = vpop.permute.xlu0 %1282
    %1284 = vrot.lane.b32.xlu0 %v1279, 126
    %v1285 = vpop.permute.xlu0 %1284
    %v1288 = vadd.f32 %v1210, %v1283
    %v1289 = vadd.f32 %v1211, %v1285
    %v1290 = vstv %s110
    %v1291 = vmul.f32 %v1290, %v1154
    %v1292 = vmul.f32 %v1290, %v1155
    %1295 = vrot.lane.b32.xlu0 %v1291, 126
    %v1296 = vpop.permute.xlu0 %1295
    %1297 = vrot.lane.b32.xlu0 %v1292, 126
    %v1298 = vpop.permute.xlu0 %1297
    %v1301 = vadd.f32 %v1223, %v1296
    %v1302 = vadd.f32 %v1224, %v1298
    %v1303 = vstv %s137
    %v1304 = vmul.f32 %v1303, %v1154
    %v1305 = vmul.f32 %v1303, %v1155
    %1308 = vrot.lane.b32.xlu0 %v1304, 126
    %v1309 = vpop.permute.xlu0 %1308
    %1310 = vrot.lane.b32.xlu0 %v1305, 126
    %v1311 = vpop.permute.xlu0 %1310
    %v1314 = vadd.f32 %v1236, %v1309
    %v1315 = vadd.f32 %v1237, %v1311
    %v1316 = vstv %s164
    %v1317 = vmul.f32 %v1316, %v1154
    %v1318 = vmul.f32 %v1316, %v1155
    %1321 = vrot.lane.b32.xlu0 %v1317, 126
    %v1322 = vpop.permute.xlu0 %1321
    %1323 = vrot.lane.b32.xlu0 %v1318, 126
    %v1324 = vpop.permute.xlu0 %1323
    %v1327 = vadd.f32 %v1249, %v1322
    %v1328 = vadd.f32 %v1250, %v1324
    %v1329 = vstv %s191
    %v1330 = vmul.f32 %v1329, %v1154
    %v1331 = vmul.f32 %v1329, %v1155
    %1334 = vrot.lane.b32.xlu0 %v1330, 126
    %v1335 = vpop.permute.xlu0 %1334
    %1336 = vrot.lane.b32.xlu0 %v1331, 126
    %v1337 = vpop.permute.xlu0 %1336
    %v1340 = vadd.f32 %v1262, %v1335
    %v1341 = vadd.f32 %v1263, %v1337
    %s1342 = scalar_lea.vmem %s0, 32
    %v1343 = vld [vmem:[%s1342] sm:$0xff]
    %v1344 = vld [vmem:[%s1342 + $0x8] sm:$0x3f]
    %v1345 = vstv %s57
    %v1346 = vmul.f32 %v1345, %v1343
    %v1347 = vmul.f32 %v1345, %v1344
    %v1348 = vadd.f32 %v1275, %v1346
    %v1349 = vadd.f32 %v1276, %v1347
    %v1350 = vstv %s84
    %v1351 = vmul.f32 %v1350, %v1343
    %v1352 = vmul.f32 %v1350, %v1344
    %v1353 = vadd.f32 %v1288, %v1351
    %v1354 = vadd.f32 %v1289, %v1352
    %v1355 = vstv %s111
    %v1356 = vmul.f32 %v1355, %v1343
    %v1357 = vmul.f32 %v1355, %v1344
    %v1358 = vadd.f32 %v1301, %v1356
    %v1359 = vadd.f32 %v1302, %v1357
    %v1360 = vstv %s138
    %v1361 = vmul.f32 %v1360, %v1343
    %v1362 = vmul.f32 %v1360, %v1344
    %v1363 = vadd.f32 %v1314, %v1361
    %v1364 = vadd.f32 %v1315, %v1362
    %v1365 = vstv %s165
    %v1366 = vmul.f32 %v1365, %v1343
    %v1367 = vmul.f32 %v1365, %v1344
    %v1368 = vadd.f32 %v1327, %v1366
    %v1369 = vadd.f32 %v1328, %v1367
    %v1370 = vstv %s192
    %v1371 = vmul.f32 %v1370, %v1343
    %v1372 = vmul.f32 %v1370, %v1344
    %v1373 = vadd.f32 %v1340, %v1371
    %v1374 = vadd.f32 %v1341, %v1372
    %v1375 = vstv %s58
    %v1376 = vmul.f32 %v1375, %v1343
    %v1377 = vmul.f32 %v1375, %v1344
    %1380 = vrot.lane.b32.xlu0 %v1376, 127
    %v1381 = vpop.permute.xlu0 %1380
    %1382 = vrot.lane.b32.xlu0 %v1377, 127
    %v1383 = vpop.permute.xlu0 %1382
    %v1386 = vadd.f32 %v1348, %v1381
    %v1387 = vadd.f32 %v1349, %v1383
    %v1388 = vstv %s85
    %v1389 = vmul.f32 %v1388, %v1343
    %v1390 = vmul.f32 %v1388, %v1344
    %1393 = vrot.lane.b32.xlu0 %v1389, 127
    %v1394 = vpop.permute.xlu0 %1393
    %1395 = vrot.lane.b32.xlu0 %v1390, 127
    %v1396 = vpop.permute.xlu0 %1395
    %v1399 = vadd.f32 %v1353, %v1394
    %v1400 = vadd.f32 %v1354, %v1396
    %v1401 = vstv %s112
    %v1402 = vmul.f32 %v1401, %v1343
    %v1403 = vmul.f32 %v1401, %v1344
    %1406 = vrot.lane.b32.xlu0 %v1402, 127
    %v1407 = vpop.permute.xlu0 %1406
    %1408 = vrot.lane.b32.xlu0 %v1403, 127
    %v1409 = vpop.permute.xlu0 %1408
    %v1412 = vadd.f32 %v1358, %v1407
    %v1413 = vadd.f32 %v1359, %v1409
    %v1414 = vstv %s139
    %v1415 = vmul.f32 %v1414, %v1343
    %v1416 = vmul.f32 %v1414, %v1344
    %1419 = vrot.lane.b32.xlu0 %v1415, 127
    %v1420 = vpop.permute.xlu0 %1419
    %1421 = vrot.lane.b32.xlu0 %v1416, 127
    %v1422 = vpop.permute.xlu0 %1421
    %v1425 = vadd.f32 %v1363, %v1420
    %v1426 = vadd.f32 %v1364, %v1422
    %v1427 = vstv %s166
    %v1428 = vmul.f32 %v1427, %v1343
    %v1429 = vmul.f32 %v1427, %v1344
    %1432 = vrot.lane.b32.xlu0 %v1428, 127
    %v1433 = vpop.permute.xlu0 %1432
    %1434 = vrot.lane.b32.xlu0 %v1429, 127
    %v1435 = vpop.permute.xlu0 %1434
    %v1438 = vadd.f32 %v1368, %v1433
    %v1439 = vadd.f32 %v1369, %v1435
    %v1440 = vstv %s193
    %v1441 = vmul.f32 %v1440, %v1343
    %v1442 = vmul.f32 %v1440, %v1344
    %1445 = vrot.lane.b32.xlu0 %v1441, 127
    %v1446 = vpop.permute.xlu0 %1445
    %1447 = vrot.lane.b32.xlu0 %v1442, 127
    %v1448 = vpop.permute.xlu0 %1447
    %v1451 = vadd.f32 %v1373, %v1446
    %v1452 = vadd.f32 %v1374, %v1448
    %v1453 = vstv %s59
    %v1454 = vmul.f32 %v1453, %v1343
    %v1455 = vmul.f32 %v1453, %v1344
    %1458 = vrot.lane.b32.xlu0 %v1454, 126
    %v1459 = vpop.permute.xlu0 %1458
    %1460 = vrot.lane.b32.xlu0 %v1455, 126
    %v1461 = vpop.permute.xlu0 %1460
    %v1464 = vadd.f32 %v1386, %v1459
    %v1465 = vadd.f32 %v1387, %v1461
    %v1466 = vstv %s86
    %v1467 = vmul.f32 %v1466, %v1343
    %v1468 = vmul.f32 %v1466, %v1344
    %1471 = vrot.lane.b32.xlu0 %v1467, 126
    %v1472 = vpop.permute.xlu0 %1471
    %1473 = vrot.lane.b32.xlu0 %v1468, 126
    %v1474 = vpop.permute.xlu0 %1473
    %v1477 = vadd.f32 %v1399, %v1472
    %v1478 = vadd.f32 %v1400, %v1474
    %v1479 = vstv %s113
    %v1480 = vmul.f32 %v1479, %v1343
    %v1481 = vmul.f32 %v1479, %v1344
    %1484 = vrot.lane.b32.xlu0 %v1480, 126
    %v1485 = vpop.permute.xlu0 %1484
    %1486 = vrot.lane.b32.xlu0 %v1481, 126
    %v1487 = vpop.permute.xlu0 %1486
    %v1490 = vadd.f32 %v1412, %v1485
    %v1491 = vadd.f32 %v1413, %v1487
    %v1492 = vstv %s140
    %v1493 = vmul.f32 %v1492, %v1343
    %v1494 = vmul.f32 %v1492, %v1344
    %1497 = vrot.lane.b32.xlu0 %v1493, 126
    %v1498 = vpop.permute.xlu0 %1497
    %1499 = vrot.lane.b32.xlu0 %v1494, 126
    %v1500 = vpop.permute.xlu0 %1499
    %v1503 = vadd.f32 %v1425, %v1498
    %v1504 = vadd.f32 %v1426, %v1500
    %v1505 = vstv %s167
    %v1506 = vmul.f32 %v1505, %v1343
    %v1507 = vmul.f32 %v1505, %v1344
    %1510 = vrot.lane.b32.xlu0 %v1506, 126
    %v1511 = vpop.permute.xlu0 %1510
    %1512 = vrot.lane.b32.xlu0 %v1507, 126
    %v1513 = vpop.permute.xlu0 %1512
    %v1516 = vadd.f32 %v1438, %v1511
    %v1517 = vadd.f32 %v1439, %v1513
    %v1518 = vstv %s194
    %v1519 = vmul.f32 %v1518, %v1343
    %v1520 = vmul.f32 %v1518, %v1344
    %1523 = vrot.lane.b32.xlu0 %v1519, 126
    %v1524 = vpop.permute.xlu0 %1523
    %1525 = vrot.lane.b32.xlu0 %v1520, 126
    %v1526 = vpop.permute.xlu0 %1525
    %v1529 = vadd.f32 %v1451, %v1524
    %v1530 = vadd.f32 %v1452, %v1526
    %v1531 = vld [vmem:[%s1342 + $0x1] sm:$0xff]
    %v1532 = vld [vmem:[%s1342 + $0x9] sm:$0x3f]
    %v1533 = vstv %s60
    %v1534 = vmul.f32 %v1533, %v1531
    %v1535 = vmul.f32 %v1533, %v1532
    %v1536 = vadd.f32 %v1464, %v1534
    %v1537 = vadd.f32 %v1465, %v1535
    %v1538 = vstv %s87
    %v1539 = vmul.f32 %v1538, %v1531
    %v1540 = vmul.f32 %v1538, %v1532
    %v1541 = vadd.f32 %v1477, %v1539
    %v1542 = vadd.f32 %v1478, %v1540
    %v1543 = vstv %s114
    %v1544 = vmul.f32 %v1543, %v1531
    %v1545 = vmul.f32 %v1543, %v1532
    %v1546 = vadd.f32 %v1490, %v1544
    %v1547 = vadd.f32 %v1491, %v1545
    %v1548 = vstv %s141
    %v1549 = vmul.f32 %v1548, %v1531
    %v1550 = vmul.f32 %v1548, %v1532
    %v1551 = vadd.f32 %v1503, %v1549
    %v1552 = vadd.f32 %v1504, %v1550
    %v1553 = vstv %s168
    %v1554 = vmul.f32 %v1553, %v1531
    %v1555 = vmul.f32 %v1553, %v1532
    %v1556 = vadd.f32 %v1516, %v1554
    %v1557 = vadd.f32 %v1517, %v1555
    %v1558 = vstv %s195
    %v1559 = vmul.f32 %v1558, %v1531
    %v1560 = vmul.f32 %v1558, %v1532
    %v1561 = vadd.f32 %v1529, %v1559
    %v1562 = vadd.f32 %v1530, %v1560
    %v1563 = vstv %s61
    %v1564 = vmul.f32 %v1563, %v1531
    %v1565 = vmul.f32 %v1563, %v1532
    %1568 = vrot.lane.b32.xlu0 %v1564, 127
    %v1569 = vpop.permute.xlu0 %1568
    %1570 = vrot.lane.b32.xlu0 %v1565, 127
    %v1571 = vpop.permute.xlu0 %1570
    %v1574 = vadd.f32 %v1536, %v1569
    %v1575 = vadd.f32 %v1537, %v1571
    %v1576 = vstv %s88
    %v1577 = vmul.f32 %v1576, %v1531
    %v1578 = vmul.f32 %v1576, %v1532
    %1581 = vrot.lane.b32.xlu0 %v1577, 127
    %v1582 = vpop.permute.xlu0 %1581
    %1583 = vrot.lane.b32.xlu0 %v1578, 127
    %v1584 = vpop.permute.xlu0 %1583
    %v1587 = vadd.f32 %v1541, %v1582
    %v1588 = vadd.f32 %v1542, %v1584
    %v1589 = vstv %s115
    %v1590 = vmul.f32 %v1589, %v1531
    %v1591 = vmul.f32 %v1589, %v1532
    %1594 = vrot.lane.b32.xlu0 %v1590, 127
    %v1595 = vpop.permute.xlu0 %1594
    %1596 = vrot.lane.b32.xlu0 %v1591, 127
    %v1597 = vpop.permute.xlu0 %1596
    %v1600 = vadd.f32 %v1546, %v1595
    %v1601 = vadd.f32 %v1547, %v1597
    %v1602 = vstv %s142
    %v1603 = vmul.f32 %v1602, %v1531
    %v1604 = vmul.f32 %v1602, %v1532
    %1607 = vrot.lane.b32.xlu0 %v1603, 127
    %v1608 = vpop.permute.xlu0 %1607
    %1609 = vrot.lane.b32.xlu0 %v1604, 127
    %v1610 = vpop.permute.xlu0 %1609
    %v1613 = vadd.f32 %v1551, %v1608
    %v1614 = vadd.f32 %v1552, %v1610
    %v1615 = vstv %s169
    %v1616 = vmul.f32 %v1615, %v1531
    %v1617 = vmul.f32 %v1615, %v1532
    %1620 = vrot.lane.b32.xlu0 %v1616, 127
    %v1621 = vpop.permute.xlu0 %1620
    %1622 = vrot.lane.b32.xlu0 %v1617, 127
    %v1623 = vpop.permute.xlu0 %1622
    %v1626 = vadd.f32 %v1556, %v1621
    %v1627 = vadd.f32 %v1557, %v1623
    %v1628 = vstv %s196
    %v1629 = vmul.f32 %v1628, %v1531
    %v1630 = vmul.f32 %v1628, %v1532
    %1633 = vrot.lane.b32.xlu0 %v1629, 127
    %v1634 = vpop.permute.xlu0 %1633
    %1635 = vrot.lane.b32.xlu0 %v1630, 127
    %v1636 = vpop.permute.xlu0 %1635
    %v1639 = vadd.f32 %v1561, %v1634
    %v1640 = vadd.f32 %v1562, %v1636
    %v1641 = vstv %s62
    %v1642 = vmul.f32 %v1641, %v1531
    %v1643 = vmul.f32 %v1641, %v1532
    %1646 = vrot.lane.b32.xlu0 %v1642, 126
    %v1647 = vpop.permute.xlu0 %1646
    %1648 = vrot.lane.b32.xlu0 %v1643, 126
    %v1649 = vpop.permute.xlu0 %1648
    %v1652 = vadd.f32 %v1574, %v1647
    %v1653 = vadd.f32 %v1575, %v1649
    %v1654 = vstv %s89
    %v1655 = vmul.f32 %v1654, %v1531
    %v1656 = vmul.f32 %v1654, %v1532
    %1659 = vrot.lane.b32.xlu0 %v1655, 126
    %v1660 = vpop.permute.xlu0 %1659
    %1661 = vrot.lane.b32.xlu0 %v1656, 126
    %v1662 = vpop.permute.xlu0 %1661
    %v1665 = vadd.f32 %v1587, %v1660
    %v1666 = vadd.f32 %v1588, %v1662
    %v1667 = vstv %s116
    %v1668 = vmul.f32 %v1667, %v1531
    %v1669 = vmul.f32 %v1667, %v1532
    %1672 = vrot.lane.b32.xlu0 %v1668, 126
    %v1673 = vpop.permute.xlu0 %1672
    %1674 = vrot.lane.b32.xlu0 %v1669, 126
    %v1675 = vpop.permute.xlu0 %1674
    %v1678 = vadd.f32 %v1600, %v1673
    %v1679 = vadd.f32 %v1601, %v1675
    %v1680 = vstv %s143
    %v1681 = vmul.f32 %v1680, %v1531
    %v1682 = vmul.f32 %v1680, %v1532
    %1685 = vrot.lane.b32.xlu0 %v1681, 126
    %v1686 = vpop.permute.xlu0 %1685
    %1687 = vrot.lane.b32.xlu0 %v1682, 126
    %v1688 = vpop.permute.xlu0 %1687
    %v1691 = vadd.f32 %v1613, %v1686
    %v1692 = vadd.f32 %v1614, %v1688
    %v1693 = vstv %s170
    %v1694 = vmul.f32 %v1693, %v1531
    %v1695 = vmul.f32 %v1693, %v1532
    %1698 = vrot.lane.b32.xlu0 %v1694, 126
    %v1699 = vpop.permute.xlu0 %1698
    %1700 = vrot.lane.b32.xlu0 %v1695, 126
    %v1701 = vpop.permute.xlu0 %1700
    %v1704 = vadd.f32 %v1626, %v1699
    %v1705 = vadd.f32 %v1627, %v1701
    %v1706 = vstv %s197
    %v1707 = vmul.f32 %v1706, %v1531
    %v1708 = vmul.f32 %v1706, %v1532
    %1711 = vrot.lane.b32.xlu0 %v1707, 126
    %v1712 = vpop.permute.xlu0 %1711
    %1713 = vrot.lane.b32.xlu0 %v1708, 126
    %v1714 = vpop.permute.xlu0 %1713
    %v1717 = vadd.f32 %v1639, %v1712
    %v1718 = vadd.f32 %v1640, %v1714
    %v1719 = vld [vmem:[%s1342 + $0x2] sm:$0xff]
    %v1720 = vld [vmem:[%s1342 + $0xa] sm:$0x3f]
    %v1721 = vstv %s63
    %v1722 = vmul.f32 %v1721, %v1719
    %v1723 = vmul.f32 %v1721, %v1720
    %v1724 = vadd.f32 %v1652, %v1722
    %v1725 = vadd.f32 %v1653, %v1723
    %v1726 = vstv %s90
    %v1727 = vmul.f32 %v1726, %v1719
    %v1728 = vmul.f32 %v1726, %v1720
    %v1729 = vadd.f32 %v1665, %v1727
    %v1730 = vadd.f32 %v1666, %v1728
    %v1731 = vstv %s117
    %v1732 = vmul.f32 %v1731, %v1719
    %v1733 = vmul.f32 %v1731, %v1720
    %v1734 = vadd.f32 %v1678, %v1732
    %v1735 = vadd.f32 %v1679, %v1733
    %v1736 = vstv %s144
    %v1737 = vmul.f32 %v1736, %v1719
    %v1738 = vmul.f32 %v1736, %v1720
    %v1739 = vadd.f32 %v1691, %v1737
    %v1740 = vadd.f32 %v1692, %v1738
    %v1741 = vstv %s171
    %v1742 = vmul.f32 %v1741, %v1719
    %v1743 = vmul.f32 %v1741, %v1720
    %v1744 = vadd.f32 %v1704, %v1742
    %v1745 = vadd.f32 %v1705, %v1743
    %v1746 = vstv %s198
    %v1747 = vmul.f32 %v1746, %v1719
    %v1748 = vmul.f32 %v1746, %v1720
    %v1749 = vadd.f32 %v1717, %v1747
    %v1750 = vadd.f32 %v1718, %v1748
    %v1751 = vstv %s64
    %v1752 = vmul.f32 %v1751, %v1719
    %v1753 = vmul.f32 %v1751, %v1720
    %1756 = vrot.lane.b32.xlu0 %v1752, 127
    %v1757 = vpop.permute.xlu0 %1756
    %1758 = vrot.lane.b32.xlu0 %v1753, 127
    %v1759 = vpop.permute.xlu0 %1758
    %v1762 = vadd.f32 %v1724, %v1757
    %v1763 = vadd.f32 %v1725, %v1759
    %v1764 = vstv %s91
    %v1765 = vmul.f32 %v1764, %v1719
    %v1766 = vmul.f32 %v1764, %v1720
    %1769 = vrot.lane.b32.xlu0 %v1765, 127
    %v1770 = vpop.permute.xlu0 %1769
    %1771 = vrot.lane.b32.xlu0 %v1766, 127
    %v1772 = vpop.permute.xlu0 %1771
    %v1775 = vadd.f32 %v1729, %v1770
    %v1776 = vadd.f32 %v1730, %v1772
    %v1777 = vstv %s118
    %v1778 = vmul.f32 %v1777, %v1719
    %v1779 = vmul.f32 %v1777, %v1720
    %1782 = vrot.lane.b32.xlu0 %v1778, 127
    %v1783 = vpop.permute.xlu0 %1782
    %1784 = vrot.lane.b32.xlu0 %v1779, 127
    %v1785 = vpop.permute.xlu0 %1784
    %v1788 = vadd.f32 %v1734, %v1783
    %v1789 = vadd.f32 %v1735, %v1785
    %v1790 = vstv %s145
    %v1791 = vmul.f32 %v1790, %v1719
    %v1792 = vmul.f32 %v1790, %v1720
    %1795 = vrot.lane.b32.xlu0 %v1791, 127
    %v1796 = vpop.permute.xlu0 %1795
    %1797 = vrot.lane.b32.xlu0 %v1792, 127
    %v1798 = vpop.permute.xlu0 %1797
    %v1801 = vadd.f32 %v1739, %v1796
    %v1802 = vadd.f32 %v1740, %v1798
    %v1803 = vstv %s172
    %v1804 = vmul.f32 %v1803, %v1719
    %v1805 = vmul.f32 %v1803, %v1720
    %1808 = vrot.lane.b32.xlu0 %v1804, 127
    %v1809 = vpop.permute.xlu0 %1808
    %1810 = vrot.lane.b32.xlu0 %v1805, 127
    %v1811 = vpop.permute.xlu0 %1810
    %v1814 = vadd.f32 %v1744, %v1809
    %v1815 = vadd.f32 %v1745, %v1811
    %v1816 = vstv %s199
    %v1817 = vmul.f32 %v1816, %v1719
    %v1818 = vmul.f32 %v1816, %v1720
    %1821 = vrot.lane.b32.xlu0 %v1817, 127
    %v1822 = vpop.permute.xlu0 %1821
    %1823 = vrot.lane.b32.xlu0 %v1818, 127
    %v1824 = vpop.permute.xlu0 %1823
    %v1827 = vadd.f32 %v1749, %v1822
    %v1828 = vadd.f32 %v1750, %v1824
    %v1829 = vstv %s65
    %v1830 = vmul.f32 %v1829, %v1719
    %v1831 = vmul.f32 %v1829, %v1720
    %1834 = vrot.lane.b32.xlu0 %v1830, 126
    %v1835 = vpop.permute.xlu0 %1834
    %1836 = vrot.lane.b32.xlu0 %v1831, 126
    %v1837 = vpop.permute.xlu0 %1836
    %v1840 = vadd.f32 %v1762, %v1835
    %v1841 = vadd.f32 %v1763, %v1837
    %v1842 = vstv %s92
    %v1843 = vmul.f32 %v1842, %v1719
    %v1844 = vmul.f32 %v1842, %v1720
    %1847 = vrot.lane.b32.xlu0 %v1843, 126
    %v1848 = vpop.permute.xlu0 %1847
    %1849 = vrot.lane.b32.xlu0 %v1844, 126
    %v1850 = vpop.permute.xlu0 %1849
    %v1853 = vadd.f32 %v1775, %v1848
    %v1854 = vadd.f32 %v1776, %v1850
    %v1855 = vstv %s119
    %v1856 = vmul.f32 %v1855, %v1719
    %v1857 = vmul.f32 %v1855, %v1720
    %1860 = vrot.lane.b32.xlu0 %v1856, 126
    %v1861 = vpop.permute.xlu0 %1860
    %1862 = vrot.lane.b32.xlu0 %v1857, 126
    %v1863 = vpop.permute.xlu0 %1862
    %v1866 = vadd.f32 %v1788, %v1861
    %v1867 = vadd.f32 %v1789, %v1863
    %v1868 = vstv %s146
    %v1869 = vmul.f32 %v1868, %v1719
    %v1870 = vmul.f32 %v1868, %v1720
    %1873 = vrot.lane.b32.xlu0 %v1869, 126
    %v1874 = vpop.permute.xlu0 %1873
    %1875 = vrot.lane.b32.xlu0 %v1870, 126
    %v1876 = vpop.permute.xlu0 %1875
    %v1879 = vadd.f32 %v1801, %v1874
    %v1880 = vadd.f32 %v1802, %v1876
    %v1881 = vstv %s173
    %v1882 = vmul.f32 %v1881, %v1719
    %v1883 = vmul.f32 %v1881, %v1720
    %1886 = vrot.lane.b32.xlu0 %v1882, 126
    %v1887 = vpop.permute.xlu0 %1886
    %1888 = vrot.lane.b32.xlu0 %v1883, 126
    %v1889 = vpop.permute.xlu0 %1888
    %v1892 = vadd.f32 %v1814, %v1887
    %v1893 = vadd.f32 %v1815, %v1889
    %v1894 = vstv %s200
    %v1895 = vmul.f32 %v1894, %v1719
    %v1896 = vmul.f32 %v1894, %v1720
    %1899 = vrot.lane.b32.xlu0 %v1895, 126
    %v1900 = vpop.permute.xlu0 %1899
    %1901 = vrot.lane.b32.xlu0 %v1896, 126
    %v1902 = vpop.permute.xlu0 %1901
    %v1905 = vadd.f32 %v1827, %v1900
    %v1906 = vadd.f32 %v1828, %v1902
    %vm1907 = vcmask 113664
    %1908 = vst.msk [vmem:[%s3] sm:$0xff] %vm1907, %v1840
    %vm1909 = vcmask 111616
    %1910 = vst.msk [vmem:[%s3 + $0x8] sm:$0x3f] %vm1909, %v1841
    %s1911 = scalar_lea.vmem %s3, 16
    %1912 = vst.msk [vmem:[%s1911] sm:$0xff] %vm1907, %v1853
    %1913 = vst.msk [vmem:[%s1911 + $0x8] sm:$0x3f] %vm1909, %v1854
    %s1914 = scalar_lea.vmem %s3, 32
    %1915 = vst.msk [vmem:[%s1914] sm:$0xff] %vm1907, %v1866
    %1916 = vst.msk [vmem:[%s1914 + $0x8] sm:$0x3f] %vm1909, %v1867
    %s1917 = scalar_lea.vmem %s3, 48
    %1918 = vst.msk [vmem:[%s1917] sm:$0xff] %vm1907, %v1879
    %1919 = vst.msk [vmem:[%s1917 + $0x8] sm:$0x3f] %vm1909, %v1880
    %s1920 = scalar_lea.vmem %s3, 64
    %1921 = vst.msk [vmem:[%s1920] sm:$0xff] %vm1907, %v1892
    %1922 = vst.msk [vmem:[%s1920 + $0x8] sm:$0x3f] %vm1909, %v1893
    %s1923 = scalar_lea.vmem %s3, 80
    %1924 = vst.msk [vmem:[%s1923] sm:$0xff] %vm1907, %v1905
    %1925 = vst.msk [vmem:[%s1923 + $0x8] sm:$0x3f] %vm1909, %v1906
    %s1926 = scalar_lea.vmem %s0, 48
    %v1927 = vld [vmem:[%s1926] sm:$0xff]
    %v1928 = vld [vmem:[%s1926 + $0x8] sm:$0x3f]
    %v1929 = vmul.f32 %v215, %v1927
    %v1930 = vmul.f32 %v215, %v1928
    %v1931 = vadd.f32 %v207, %v1929
    %v1932 = vadd.f32 %v207, %v1930
    %v1933 = vmul.f32 %v220, %v1927
    %v1934 = vmul.f32 %v220, %v1928
    %v1935 = vadd.f32 %v208, %v1933
    %v1936 = vadd.f32 %v208, %v1934
    %v1937 = vmul.f32 %v225, %v1927
    %v1938 = vmul.f32 %v225, %v1928
    %v1939 = vadd.f32 %v209, %v1937
    %v1940 = vadd.f32 %v209, %v1938
    %v1941 = vmul.f32 %v230, %v1927
    %v1942 = vmul.f32 %v230, %v1928
    %v1943 = vadd.f32 %v210, %v1941
    %v1944 = vadd.f32 %v210, %v1942
    %v1945 = vmul.f32 %v235, %v1927
    %v1946 = vmul.f32 %v235, %v1928
    %v1947 = vadd.f32 %v211, %v1945
    %v1948 = vadd.f32 %v211, %v1946
    %v1949 = vmul.f32 %v240, %v1927
    %v1950 = vmul.f32 %v240, %v1928
    %v1951 = vadd.f32 %v212, %v1949
    %v1952 = vadd.f32 %v212, %v1950
    %v1953 = vmul.f32 %v245, %v1927
    %v1954 = vmul.f32 %v245, %v1928
    %1957 = vrot.lane.b32.xlu0 %v1953, 127
    %v1958 = vpop.permute.xlu0 %1957
    %1959 = vrot.lane.b32.xlu0 %v1954, 127
    %v1960 = vpop.permute.xlu0 %1959
    %v1963 = vadd.f32 %v1931, %v1958
    %v1964 = vadd.f32 %v1932, %v1960
    %v1965 = vmul.f32 %v258, %v1927
    %v1966 = vmul.f32 %v258, %v1928
    %1969 = vrot.lane.b32.xlu0 %v1965, 127
    %v1970 = vpop.permute.xlu0 %1969
    %1971 = vrot.lane.b32.xlu0 %v1966, 127
    %v1972 = vpop.permute.xlu0 %1971
    %v1975 = vadd.f32 %v1935, %v1970
    %v1976 = vadd.f32 %v1936, %v1972
    %v1977 = vmul.f32 %v271, %v1927
    %v1978 = vmul.f32 %v271, %v1928
    %1981 = vrot.lane.b32.xlu0 %v1977, 127
    %v1982 = vpop.permute.xlu0 %1981
    %1983 = vrot.lane.b32.xlu0 %v1978, 127
    %v1984 = vpop.permute.xlu0 %1983
    %v1987 = vadd.f32 %v1939, %v1982
    %v1988 = vadd.f32 %v1940, %v1984
    %v1989 = vmul.f32 %v284, %v1927
    %v1990 = vmul.f32 %v284, %v1928
    %1993 = vrot.lane.b32.xlu0 %v1989, 127
    %v1994 = vpop.permute.xlu0 %1993
    %1995 = vrot.lane.b32.xlu0 %v1990, 127
    %v1996 = vpop.permute.xlu0 %1995
    %v1999 = vadd.f32 %v1943, %v1994
    %v2000 = vadd.f32 %v1944, %v1996
    %v2001 = vmul.f32 %v297, %v1927
    %v2002 = vmul.f32 %v297, %v1928
    %2005 = vrot.lane.b32.xlu0 %v2001, 127
    %v2006 = vpop.permute.xlu0 %2005
    %2007 = vrot.lane.b32.xlu0 %v2002, 127
    %v2008 = vpop.permute.xlu0 %2007
    %v2011 = vadd.f32 %v1947, %v2006
    %v2012 = vadd.f32 %v1948, %v2008
    %v2013 = vmul.f32 %v310, %v1927
    %v2014 = vmul.f32 %v310, %v1928
    %2017 = vrot.lane.b32.xlu0 %v2013, 127
    %v2018 = vpop.permute.xlu0 %2017
    %2019 = vrot.lane.b32.xlu0 %v2014, 127
    %v2020 = vpop.permute.xlu0 %2019
    %v2023 = vadd.f32 %v1951, %v2018
    %v2024 = vadd.f32 %v1952, %v2020
    %v2025 = vmul.f32 %v323, %v1927
    %v2026 = vmul.f32 %v323, %v1928
    %2029 = vrot.lane.b32.xlu0 %v2025, 126
    %v2030 = vpop.permute.xlu0 %2029
    %2031 = vrot.lane.b32.xlu0 %v2026, 126
    %v2032 = vpop.permute.xlu0 %2031
    %v2035 = vadd.f32 %v1963, %v2030
    %v2036 = vadd.f32 %v1964, %v2032
    %v2037 = vmul.f32 %v336, %v1927
    %v2038 = vmul.f32 %v336, %v1928
    %2041 = vrot.lane.b32.xlu0 %v2037, 126
    %v2042 = vpop.permute.xlu0 %2041
    %2043 = vrot.lane.b32.xlu0 %v2038, 126
    %v2044 = vpop.permute.xlu0 %2043
    %v2047 = vadd.f32 %v1975, %v2042
    %v2048 = vadd.f32 %v1976, %v2044
    %v2049 = vmul.f32 %v349, %v1927
    %v2050 = vmul.f32 %v349, %v1928
    %2053 = vrot.lane.b32.xlu0 %v2049, 126
    %v2054 = vpop.permute.xlu0 %2053
    %2055 = vrot.lane.b32.xlu0 %v2050, 126
    %v2056 = vpop.permute.xlu0 %2055
    %v2059 = vadd.f32 %v1987, %v2054
    %v2060 = vadd.f32 %v1988, %v2056
    %v2061 = vmul.f32 %v362, %v1927
    %v2062 = vmul.f32 %v362, %v1928
    %2065 = vrot.lane.b32.xlu0 %v2061, 126
    %v2066 = vpop.permute.xlu0 %2065
    %2067 = vrot.lane.b32.xlu0 %v2062, 126
    %v2068 = vpop.permute.xlu0 %2067
    %v2071 = vadd.f32 %v1999, %v2066
    %v2072 = vadd.f32 %v2000, %v2068
    %v2073 = vmul.f32 %v375, %v1927
    %v2074 = vmul.f32 %v375, %v1928
    %2077 = vrot.lane.b32.xlu0 %v2073, 126
    %v2078 = vpop.permute.xlu0 %2077
    %2079 = vrot.lane.b32.xlu0 %v2074, 126
    %v2080 = vpop.permute.xlu0 %2079
    %v2083 = vadd.f32 %v2011, %v2078
    %v2084 = vadd.f32 %v2012, %v2080
    %v2085 = vmul.f32 %v388, %v1927
    %v2086 = vmul.f32 %v388, %v1928
    %2089 = vrot.lane.b32.xlu0 %v2085, 126
    %v2090 = vpop.permute.xlu0 %2089
    %2091 = vrot.lane.b32.xlu0 %v2086, 126
    %v2092 = vpop.permute.xlu0 %2091
    %v2095 = vadd.f32 %v2023, %v2090
    %v2096 = vadd.f32 %v2024, %v2092
    %v2097 = vld [vmem:[%s1926 + $0x1] sm:$0xff]
    %v2098 = vld [vmem:[%s1926 + $0x9] sm:$0x3f]
    %v2099 = vmul.f32 %v403, %v2097
    %v2100 = vmul.f32 %v403, %v2098
    %v2101 = vadd.f32 %v2035, %v2099
    %v2102 = vadd.f32 %v2036, %v2100
    %v2103 = vmul.f32 %v408, %v2097
    %v2104 = vmul.f32 %v408, %v2098
    %v2105 = vadd.f32 %v2047, %v2103
    %v2106 = vadd.f32 %v2048, %v2104
    %v2107 = vmul.f32 %v413, %v2097
    %v2108 = vmul.f32 %v413, %v2098
    %v2109 = vadd.f32 %v2059, %v2107
    %v2110 = vadd.f32 %v2060, %v2108
    %v2111 = vmul.f32 %v418, %v2097
    %v2112 = vmul.f32 %v418, %v2098
    %v2113 = vadd.f32 %v2071, %v2111
    %v2114 = vadd.f32 %v2072, %v2112
    %v2115 = vmul.f32 %v423, %v2097
    %v2116 = vmul.f32 %v423, %v2098
    %v2117 = vadd.f32 %v2083, %v2115
    %v2118 = vadd.f32 %v2084, %v2116
    %v2119 = vmul.f32 %v428, %v2097
    %v2120 = vmul.f32 %v428, %v2098
    %v2121 = vadd.f32 %v2095, %v2119
    %v2122 = vadd.f32 %v2096, %v2120
    %v2123 = vmul.f32 %v433, %v2097
    %v2124 = vmul.f32 %v433, %v2098
    %2127 = vrot.lane.b32.xlu0 %v2123, 127
    %v2128 = vpop.permute.xlu0 %2127
    %2129 = vrot.lane.b32.xlu0 %v2124, 127
    %v2130 = vpop.permute.xlu0 %2129
    %v2133 = vadd.f32 %v2101, %v2128
    %v2134 = vadd.f32 %v2102, %v2130
    %v2135 = vmul.f32 %v446, %v2097
    %v2136 = vmul.f32 %v446, %v2098
    %2139 = vrot.lane.b32.xlu0 %v2135, 127
    %v2140 = vpop.permute.xlu0 %2139
    %2141 = vrot.lane.b32.xlu0 %v2136, 127
    %v2142 = vpop.permute.xlu0 %2141
    %v2145 = vadd.f32 %v2105, %v2140
    %v2146 = vadd.f32 %v2106, %v2142
    %v2147 = vmul.f32 %v459, %v2097
    %v2148 = vmul.f32 %v459, %v2098
    %2151 = vrot.lane.b32.xlu0 %v2147, 127
    %v2152 = vpop.permute.xlu0 %2151
    %2153 = vrot.lane.b32.xlu0 %v2148, 127
    %v2154 = vpop.permute.xlu0 %2153
    %v2157 = vadd.f32 %v2109, %v2152
    %v2158 = vadd.f32 %v2110, %v2154
    %v2159 = vmul.f32 %v472, %v2097
    %v2160 = vmul.f32 %v472, %v2098
    %2163 = vrot.lane.b32.xlu0 %v2159, 127
    %v2164 = vpop.permute.xlu0 %2163
    %2165 = vrot.lane.b32.xlu0 %v2160, 127
    %v2166 = vpop.permute.xlu0 %2165
    %v2169 = vadd.f32 %v2113, %v2164
    %v2170 = vadd.f32 %v2114, %v2166
    %v2171 = vmul.f32 %v485, %v2097
    %v2172 = vmul.f32 %v485, %v2098
    %2175 = vrot.lane.b32.xlu0 %v2171, 127
    %v2176 = vpop.permute.xlu0 %2175
    %2177 = vrot.lane.b32.xlu0 %v2172, 127
    %v2178 = vpop.permute.xlu0 %2177
    %v2181 = vadd.f32 %v2117, %v2176
    %v2182 = vadd.f32 %v2118, %v2178
    %v2183 = vmul.f32 %v498, %v2097
    %v2184 = vmul.f32 %v498, %v2098
    %2187 = vrot.lane.b32.xlu0 %v2183, 127
    %v2188 = vpop.permute.xlu0 %2187
    %2189 = vrot.lane.b32.xlu0 %v2184, 127
    %v2190 = vpop.permute.xlu0 %2189
    %v2193 = vadd.f32 %v2121, %v2188
    %v2194 = vadd.f32 %v2122, %v2190
    %v2195 = vmul.f32 %v511, %v2097
    %v2196 = vmul.f32 %v511, %v2098
    %2199 = vrot.lane.b32.xlu0 %v2195, 126
    %v2200 = vpop.permute.xlu0 %2199
    %2201 = vrot.lane.b32.xlu0 %v2196, 126
    %v2202 = vpop.permute.xlu0 %2201
    %v2205 = vadd.f32 %v2133, %v2200
    %v2206 = vadd.f32 %v2134, %v2202
    %v2207 = vmul.f32 %v524, %v2097
    %v2208 = vmul.f32 %v524, %v2098
    %2211 = vrot.lane.b32.xlu0 %v2207, 126
    %v2212 = vpop.permute.xlu0 %2211
    %2213 = vrot.lane.b32.xlu0 %v2208, 126
    %v2214 = vpop.permute.xlu0 %2213
    %v2217 = vadd.f32 %v2145, %v2212
    %v2218 = vadd.f32 %v2146, %v2214
    %v2219 = vmul.f32 %v537, %v2097
    %v2220 = vmul.f32 %v537, %v2098
    %2223 = vrot.lane.b32.xlu0 %v2219, 126
    %v2224 = vpop.permute.xlu0 %2223
    %2225 = vrot.lane.b32.xlu0 %v2220, 126
    %v2226 = vpop.permute.xlu0 %2225
    %v2229 = vadd.f32 %v2157, %v2224
    %v2230 = vadd.f32 %v2158, %v2226
    %v2231 = vmul.f32 %v550, %v2097
    %v2232 = vmul.f32 %v550, %v2098
    %2235 = vrot.lane.b32.xlu0 %v2231, 126
    %v2236 = vpop.permute.xlu0 %2235
    %2237 = vrot.lane.b32.xlu0 %v2232, 126
    %v2238 = vpop.permute.xlu0 %2237
    %v2241 = vadd.f32 %v2169, %v2236
    %v2242 = vadd.f32 %v2170, %v2238
    %v2243 = vmul.f32 %v563, %v2097
    %v2244 = vmul.f32 %v563, %v2098
    %2247 = vrot.lane.b32.xlu0 %v2243, 126
    %v2248 = vpop.permute.xlu0 %2247
    %2249 = vrot.lane.b32.xlu0 %v2244, 126
    %v2250 = vpop.permute.xlu0 %2249
    %v2253 = vadd.f32 %v2181, %v2248
    %v2254 = vadd.f32 %v2182, %v2250
    %v2255 = vmul.f32 %v576, %v2097
    %v2256 = vmul.f32 %v576, %v2098
    %2259 = vrot.lane.b32.xlu0 %v2255, 126
    %v2260 = vpop.permute.xlu0 %2259
    %2261 = vrot.lane.b32.xlu0 %v2256, 126
    %v2262 = vpop.permute.xlu0 %2261
    %v2265 = vadd.f32 %v2193, %v2260
    %v2266 = vadd.f32 %v2194, %v2262
    %v2267 = vld [vmem:[%s1926 + $0x2] sm:$0xff]
    %v2268 = vld [vmem:[%s1926 + $0xa] sm:$0x3f]
    %v2269 = vmul.f32 %v591, %v2267
    %v2270 = vmul.f32 %v591, %v2268
    %v2271 = vadd.f32 %v2205, %v2269
    %v2272 = vadd.f32 %v2206, %v2270
    %v2273 = vmul.f32 %v596, %v2267
    %v2274 = vmul.f32 %v596, %v2268
    %v2275 = vadd.f32 %v2217, %v2273
    %v2276 = vadd.f32 %v2218, %v2274
    %v2277 = vmul.f32 %v601, %v2267
    %v2278 = vmul.f32 %v601, %v2268
    %v2279 = vadd.f32 %v2229, %v2277
    %v2280 = vadd.f32 %v2230, %v2278
    %v2281 = vmul.f32 %v606, %v2267
    %v2282 = vmul.f32 %v606, %v2268
    %v2283 = vadd.f32 %v2241, %v2281
    %v2284 = vadd.f32 %v2242, %v2282
    %v2285 = vmul.f32 %v611, %v2267
    %v2286 = vmul.f32 %v611, %v2268
    %v2287 = vadd.f32 %v2253, %v2285
    %v2288 = vadd.f32 %v2254, %v2286
    %v2289 = vmul.f32 %v616, %v2267
    %v2290 = vmul.f32 %v616, %v2268
    %v2291 = vadd.f32 %v2265, %v2289
    %v2292 = vadd.f32 %v2266, %v2290
    %v2293 = vmul.f32 %v621, %v2267
    %v2294 = vmul.f32 %v621, %v2268
    %2297 = vrot.lane.b32.xlu0 %v2293, 127
    %v2298 = vpop.permute.xlu0 %2297
    %2299 = vrot.lane.b32.xlu0 %v2294, 127
    %v2300 = vpop.permute.xlu0 %2299
    %v2303 = vadd.f32 %v2271, %v2298
    %v2304 = vadd.f32 %v2272, %v2300
    %v2305 = vmul.f32 %v634, %v2267
    %v2306 = vmul.f32 %v634, %v2268
    %2309 = vrot.lane.b32.xlu0 %v2305, 127
    %v2310 = vpop.permute.xlu0 %2309
    %2311 = vrot.lane.b32.xlu0 %v2306, 127
    %v2312 = vpop.permute.xlu0 %2311
    %v2315 = vadd.f32 %v2275, %v2310
    %v2316 = vadd.f32 %v2276, %v2312
    %v2317 = vmul.f32 %v647, %v2267
    %v2318 = vmul.f32 %v647, %v2268
    %2321 = vrot.lane.b32.xlu0 %v2317, 127
    %v2322 = vpop.permute.xlu0 %2321
    %2323 = vrot.lane.b32.xlu0 %v2318, 127
    %v2324 = vpop.permute.xlu0 %2323
    %v2327 = vadd.f32 %v2279, %v2322
    %v2328 = vadd.f32 %v2280, %v2324
    %v2329 = vmul.f32 %v660, %v2267
    %v2330 = vmul.f32 %v660, %v2268
    %2333 = vrot.lane.b32.xlu0 %v2329, 127
    %v2334 = vpop.permute.xlu0 %2333
    %2335 = vrot.lane.b32.xlu0 %v2330, 127
    %v2336 = vpop.permute.xlu0 %2335
    %v2339 = vadd.f32 %v2283, %v2334
    %v2340 = vadd.f32 %v2284, %v2336
    %v2341 = vmul.f32 %v673, %v2267
    %v2342 = vmul.f32 %v673, %v2268
    %2345 = vrot.lane.b32.xlu0 %v2341, 127
    %v2346 = vpop.permute.xlu0 %2345
    %2347 = vrot.lane.b32.xlu0 %v2342, 127
    %v2348 = vpop.permute.xlu0 %2347
    %v2351 = vadd.f32 %v2287, %v2346
    %v2352 = vadd.f32 %v2288, %v2348
    %v2353 = vmul.f32 %v686, %v2267
    %v2354 = vmul.f32 %v686, %v2268
    %2357 = vrot.lane.b32.xlu0 %v2353, 127
    %v2358 = vpop.permute.xlu0 %2357
    %2359 = vrot.lane.b32.xlu0 %v2354, 127
    %v2360 = vpop.permute.xlu0 %2359
    %v2363 = vadd.f32 %v2291, %v2358
    %v2364 = vadd.f32 %v2292, %v2360
    %v2365 = vmul.f32 %v699, %v2267
    %v2366 = vmul.f32 %v699, %v2268
    %2369 = vrot.lane.b32.xlu0 %v2365, 126
    %v2370 = vpop.permute.xlu0 %2369
    %2371 = vrot.lane.b32.xlu0 %v2366, 126
    %v2372 = vpop.permute.xlu0 %2371
    %v2375 = vadd.f32 %v2303, %v2370
    %v2376 = vadd.f32 %v2304, %v2372
    %v2377 = vmul.f32 %v712, %v2267
    %v2378 = vmul.f32 %v712, %v2268
    %2381 = vrot.lane.b32.xlu0 %v2377, 126
    %v2382 = vpop.permute.xlu0 %2381
    %2383 = vrot.lane.b32.xlu0 %v2378, 126
    %v2384 = vpop.permute.xlu0 %2383
    %v2387 = vadd.f32 %v2315, %v2382
    %v2388 = vadd.f32 %v2316, %v2384
    %v2389 = vmul.f32 %v725, %v2267
    %v2390 = vmul.f32 %v725, %v2268
    %2393 = vrot.lane.b32.xlu0 %v2389, 126
    %v2394 = vpop.permute.xlu0 %2393
    %2395 = vrot.lane.b32.xlu0 %v2390, 126
    %v2396 = vpop.permute.xlu0 %2395
    %v2399 = vadd.f32 %v2327, %v2394
    %v2400 = vadd.f32 %v2328, %v2396
    %v2401 = vmul.f32 %v738, %v2267
    %v2402 = vmul.f32 %v738, %v2268
    %2405 = vrot.lane.b32.xlu0 %v2401, 126
    %v2406 = vpop.permute.xlu0 %2405
    %2407 = vrot.lane.b32.xlu0 %v2402, 126
    %v2408 = vpop.permute.xlu0 %2407
    %v2411 = vadd.f32 %v2339, %v2406
    %v2412 = vadd.f32 %v2340, %v2408
    %v2413 = vmul.f32 %v751, %v2267
    %v2414 = vmul.f32 %v751, %v2268
    %2417 = vrot.lane.b32.xlu0 %v2413, 126
    %v2418 = vpop.permute.xlu0 %2417
    %2419 = vrot.lane.b32.xlu0 %v2414, 126
    %v2420 = vpop.permute.xlu0 %2419
    %v2423 = vadd.f32 %v2351, %v2418
    %v2424 = vadd.f32 %v2352, %v2420
    %v2425 = vmul.f32 %v764, %v2267
    %v2426 = vmul.f32 %v764, %v2268
    %2429 = vrot.lane.b32.xlu0 %v2425, 126
    %v2430 = vpop.permute.xlu0 %2429
    %2431 = vrot.lane.b32.xlu0 %v2426, 126
    %v2432 = vpop.permute.xlu0 %2431
    %v2435 = vadd.f32 %v2363, %v2430
    %v2436 = vadd.f32 %v2364, %v2432
    %s2437 = scalar_lea.vmem %s0, 64
    %v2438 = vld [vmem:[%s2437] sm:$0xff]
    %v2439 = vld [vmem:[%s2437 + $0x8] sm:$0x3f]
    %v2440 = vmul.f32 %v780, %v2438
    %v2441 = vmul.f32 %v780, %v2439
    %v2442 = vadd.f32 %v2375, %v2440
    %v2443 = vadd.f32 %v2376, %v2441
    %v2444 = vmul.f32 %v785, %v2438
    %v2445 = vmul.f32 %v785, %v2439
    %v2446 = vadd.f32 %v2387, %v2444
    %v2447 = vadd.f32 %v2388, %v2445
    %v2448 = vmul.f32 %v790, %v2438
    %v2449 = vmul.f32 %v790, %v2439
    %v2450 = vadd.f32 %v2399, %v2448
    %v2451 = vadd.f32 %v2400, %v2449
    %v2452 = vmul.f32 %v795, %v2438
    %v2453 = vmul.f32 %v795, %v2439
    %v2454 = vadd.f32 %v2411, %v2452
    %v2455 = vadd.f32 %v2412, %v2453
    %v2456 = vmul.f32 %v800, %v2438
    %v2457 = vmul.f32 %v800, %v2439
    %v2458 = vadd.f32 %v2423, %v2456
    %v2459 = vadd.f32 %v2424, %v2457
    %v2460 = vmul.f32 %v805, %v2438
    %v2461 = vmul.f32 %v805, %v2439
    %v2462 = vadd.f32 %v2435, %v2460
    %v2463 = vadd.f32 %v2436, %v2461
    %v2464 = vmul.f32 %v810, %v2438
    %v2465 = vmul.f32 %v810, %v2439
    %2468 = vrot.lane.b32.xlu0 %v2464, 127
    %v2469 = vpop.permute.xlu0 %2468
    %2470 = vrot.lane.b32.xlu0 %v2465, 127
    %v2471 = vpop.permute.xlu0 %2470
    %v2474 = vadd.f32 %v2442, %v2469
    %v2475 = vadd.f32 %v2443, %v2471
    %v2476 = vmul.f32 %v823, %v2438
    %v2477 = vmul.f32 %v823, %v2439
    %2480 = vrot.lane.b32.xlu0 %v2476, 127
    %v2481 = vpop.permute.xlu0 %2480
    %2482 = vrot.lane.b32.xlu0 %v2477, 127
    %v2483 = vpop.permute.xlu0 %2482
    %v2486 = vadd.f32 %v2446, %v2481
    %v2487 = vadd.f32 %v2447, %v2483
    %v2488 = vmul.f32 %v836, %v2438
    %v2489 = vmul.f32 %v836, %v2439
    %2492 = vrot.lane.b32.xlu0 %v2488, 127
    %v2493 = vpop.permute.xlu0 %2492
    %2494 = vrot.lane.b32.xlu0 %v2489, 127
    %v2495 = vpop.permute.xlu0 %2494
    %v2498 = vadd.f32 %v2450, %v2493
    %v2499 = vadd.f32 %v2451, %v2495
    %v2500 = vmul.f32 %v849, %v2438
    %v2501 = vmul.f32 %v849, %v2439
    %2504 = vrot.lane.b32.xlu0 %v2500, 127
    %v2505 = vpop.permute.xlu0 %2504
    %2506 = vrot.lane.b32.xlu0 %v2501, 127
    %v2507 = vpop.permute.xlu0 %2506
    %v2510 = vadd.f32 %v2454, %v2505
    %v2511 = vadd.f32 %v2455, %v2507
    %v2512 = vmul.f32 %v862, %v2438
    %v2513 = vmul.f32 %v862, %v2439
    %2516 = vrot.lane.b32.xlu0 %v2512, 127
    %v2517 = vpop.permute.xlu0 %2516
    %2518 = vrot.lane.b32.xlu0 %v2513, 127
    %v2519 = vpop.permute.xlu0 %2518
    %v2522 = vadd.f32 %v2458, %v2517
    %v2523 = vadd.f32 %v2459, %v2519
    %v2524 = vmul.f32 %v875, %v2438
    %v2525 = vmul.f32 %v875, %v2439
    %2528 = vrot.lane.b32.xlu0 %v2524, 127
    %v2529 = vpop.permute.xlu0 %2528
    %2530 = vrot.lane.b32.xlu0 %v2525, 127
    %v2531 = vpop.permute.xlu0 %2530
    %v2534 = vadd.f32 %v2462, %v2529
    %v2535 = vadd.f32 %v2463, %v2531
    %v2536 = vmul.f32 %v888, %v2438
    %v2537 = vmul.f32 %v888, %v2439
    %2540 = vrot.lane.b32.xlu0 %v2536, 126
    %v2541 = vpop.permute.xlu0 %2540
    %2542 = vrot.lane.b32.xlu0 %v2537, 126
    %v2543 = vpop.permute.xlu0 %2542
    %v2546 = vadd.f32 %v2474, %v2541
    %v2547 = vadd.f32 %v2475, %v2543
    %v2548 = vmul.f32 %v901, %v2438
    %v2549 = vmul.f32 %v901, %v2439
    %2552 = vrot.lane.b32.xlu0 %v2548, 126
    %v2553 = vpop.permute.xlu0 %2552
    %2554 = vrot.lane.b32.xlu0 %v2549, 126
    %v2555 = vpop.permute.xlu0 %2554
    %v2558 = vadd.f32 %v2486, %v2553
    %v2559 = vadd.f32 %v2487, %v2555
    %v2560 = vmul.f32 %v914, %v2438
    %v2561 = vmul.f32 %v914, %v2439
    %2564 = vrot.lane.b32.xlu0 %v2560, 126
    %v2565 = vpop.permute.xlu0 %2564
    %2566 = vrot.lane.b32.xlu0 %v2561, 126
    %v2567 = vpop.permute.xlu0 %2566
    %v2570 = vadd.f32 %v2498, %v2565
    %v2571 = vadd.f32 %v2499, %v2567
    %v2572 = vmul.f32 %v927, %v2438
    %v2573 = vmul.f32 %v927, %v2439
    %2576 = vrot.lane.b32.xlu0 %v2572, 126
    %v2577 = vpop.permute.xlu0 %2576
    %2578 = vrot.lane.b32.xlu0 %v2573, 126
    %v2579 = vpop.permute.xlu0 %2578
    %v2582 = vadd.f32 %v2510, %v2577
    %v2583 = vadd.f32 %v2511, %v2579
    %v2584 = vmul.f32 %v940, %v2438
    %v2585 = vmul.f32 %v940, %v2439
    %2588 = vrot.lane.b32.xlu0 %v2584, 126
    %v2589 = vpop.permute.xlu0 %2588
    %2590 = vrot.lane.b32.xlu0 %v2585, 126
    %v2591 = vpop.permute.xlu0 %2590
    %v2594 = vadd.f32 %v2522, %v2589
    %v2595 = vadd.f32 %v2523, %v2591
    %v2596 = vmul.f32 %v953, %v2438
    %v2597 = vmul.f32 %v953, %v2439
    %2600 = vrot.lane.b32.xlu0 %v2596, 126
    %v2601 = vpop.permute.xlu0 %2600
    %2602 = vrot.lane.b32.xlu0 %v2597, 126
    %v2603 = vpop.permute.xlu0 %2602
    %v2606 = vadd.f32 %v2534, %v2601
    %v2607 = vadd.f32 %v2535, %v2603
    %v2608 = vld [vmem:[%s2437 + $0x1] sm:$0xff]
    %v2609 = vld [vmem:[%s2437 + $0x9] sm:$0x3f]
    %v2610 = vmul.f32 %v968, %v2608
    %v2611 = vmul.f32 %v968, %v2609
    %v2612 = vadd.f32 %v2546, %v2610
    %v2613 = vadd.f32 %v2547, %v2611
    %v2614 = vmul.f32 %v973, %v2608
    %v2615 = vmul.f32 %v973, %v2609
    %v2616 = vadd.f32 %v2558, %v2614
    %v2617 = vadd.f32 %v2559, %v2615
    %v2618 = vmul.f32 %v978, %v2608
    %v2619 = vmul.f32 %v978, %v2609
    %v2620 = vadd.f32 %v2570, %v2618
    %v2621 = vadd.f32 %v2571, %v2619
    %v2622 = vmul.f32 %v983, %v2608
    %v2623 = vmul.f32 %v983, %v2609
    %v2624 = vadd.f32 %v2582, %v2622
    %v2625 = vadd.f32 %v2583, %v2623
    %v2626 = vmul.f32 %v988, %v2608
    %v2627 = vmul.f32 %v988, %v2609
    %v2628 = vadd.f32 %v2594, %v2626
    %v2629 = vadd.f32 %v2595, %v2627
    %v2630 = vmul.f32 %v993, %v2608
    %v2631 = vmul.f32 %v993, %v2609
    %v2632 = vadd.f32 %v2606, %v2630
    %v2633 = vadd.f32 %v2607, %v2631
    %v2634 = vmul.f32 %v998, %v2608
    %v2635 = vmul.f32 %v998, %v2609
    %2638 = vrot.lane.b32.xlu0 %v2634, 127
    %v2639 = vpop.permute.xlu0 %2638
    %2640 = vrot.lane.b32.xlu0 %v2635, 127
    %v2641 = vpop.permute.xlu0 %2640
    %v2644 = vadd.f32 %v2612, %v2639
    %v2645 = vadd.f32 %v2613, %v2641
    %v2646 = vmul.f32 %v1011, %v2608
    %v2647 = vmul.f32 %v1011, %v2609
    %2650 = vrot.lane.b32.xlu0 %v2646, 127
    %v2651 = vpop.permute.xlu0 %2650
    %2652 = vrot.lane.b32.xlu0 %v2647, 127
    %v2653 = vpop.permute.xlu0 %2652
    %v2656 = vadd.f32 %v2616, %v2651
    %v2657 = vadd.f32 %v2617, %v2653
    %v2658 = vmul.f32 %v1024, %v2608
    %v2659 = vmul.f32 %v1024, %v2609
    %2662 = vrot.lane.b32.xlu0 %v2658, 127
    %v2663 = vpop.permute.xlu0 %2662
    %2664 = vrot.lane.b32.xlu0 %v2659, 127
    %v2665 = vpop.permute.xlu0 %2664
    %v2668 = vadd.f32 %v2620, %v2663
    %v2669 = vadd.f32 %v2621, %v2665
    %v2670 = vmul.f32 %v1037, %v2608
    %v2671 = vmul.f32 %v1037, %v2609
    %2674 = vrot.lane.b32.xlu0 %v2670, 127
    %v2675 = vpop.permute.xlu0 %2674
    %2676 = vrot.lane.b32.xlu0 %v2671, 127
    %v2677 = vpop.permute.xlu0 %2676
    %v2680 = vadd.f32 %v2624, %v2675
    %v2681 = vadd.f32 %v2625, %v2677
    %v2682 = vmul.f32 %v1050, %v2608
    %v2683 = vmul.f32 %v1050, %v2609
    %2686 = vrot.lane.b32.xlu0 %v2682, 127
    %v2687 = vpop.permute.xlu0 %2686
    %2688 = vrot.lane.b32.xlu0 %v2683, 127
    %v2689 = vpop.permute.xlu0 %2688
    %v2692 = vadd.f32 %v2628, %v2687
    %v2693 = vadd.f32 %v2629, %v2689
    %v2694 = vmul.f32 %v1063, %v2608
    %v2695 = vmul.f32 %v1063, %v2609
    %2698 = vrot.lane.b32.xlu0 %v2694, 127
    %v2699 = vpop.permute.xlu0 %2698
    %2700 = vrot.lane.b32.xlu0 %v2695, 127
    %v2701 = vpop.permute.xlu0 %2700
    %v2704 = vadd.f32 %v2632, %v2699
    %v2705 = vadd.f32 %v2633, %v2701
    %v2706 = vmul.f32 %v1076, %v2608
    %v2707 = vmul.f32 %v1076, %v2609
    %2710 = vrot.lane.b32.xlu0 %v2706, 126
    %v2711 = vpop.permute.xlu0 %2710
    %2712 = vrot.lane.b32.xlu0 %v2707, 126
    %v2713 = vpop.permute.xlu0 %2712
    %v2716 = vadd.f32 %v2644, %v2711
    %v2717 = vadd.f32 %v2645, %v2713
    %v2718 = vmul.f32 %v1089, %v2608
    %v2719 = vmul.f32 %v1089, %v2609
    %2722 = vrot.lane.b32.xlu0 %v2718, 126
    %v2723 = vpop.permute.xlu0 %2722
    %2724 = vrot.lane.b32.xlu0 %v2719, 126
    %v2725 = vpop.permute.xlu0 %2724
    %v2728 = vadd.f32 %v2656, %v2723
    %v2729 = vadd.f32 %v2657, %v2725
    %v2730 = vmul.f32 %v1102, %v2608
    %v2731 = vmul.f32 %v1102, %v2609
    %2734 = vrot.lane.b32.xlu0 %v2730, 126
    %v2735 = vpop.permute.xlu0 %2734
    %2736 = vrot.lane.b32.xlu0 %v2731, 126
    %v2737 = vpop.permute.xlu0 %2736
    %v2740 = vadd.f32 %v2668, %v2735
    %v2741 = vadd.f32 %v2669, %v2737
    %v2742 = vmul.f32 %v1115, %v2608
    %v2743 = vmul.f32 %v1115, %v2609
    %2746 = vrot.lane.b32.xlu0 %v2742, 126
    %v2747 = vpop.permute.xlu0 %2746
    %2748 = vrot.lane.b32.xlu0 %v2743, 126
    %v2749 = vpop.permute.xlu0 %2748
    %v2752 = vadd.f32 %v2680, %v2747
    %v2753 = vadd.f32 %v2681, %v2749
    %v2754 = vmul.f32 %v1128, %v2608
    %v2755 = vmul.f32 %v1128, %v2609
    %2758 = vrot.lane.b32.xlu0 %v2754, 126
    %v2759 = vpop.permute.xlu0 %2758
    %2760 = vrot.lane.b32.xlu0 %v2755, 126
    %v2761 = vpop.permute.xlu0 %2760
    %v2764 = vadd.f32 %v2692, %v2759
    %v2765 = vadd.f32 %v2693, %v2761
    %v2766 = vmul.f32 %v1141, %v2608
    %v2767 = vmul.f32 %v1141, %v2609
    %2770 = vrot.lane.b32.xlu0 %v2766, 126
    %v2771 = vpop.permute.xlu0 %2770
    %2772 = vrot.lane.b32.xlu0 %v2767, 126
    %v2773 = vpop.permute.xlu0 %2772
    %v2776 = vadd.f32 %v2704, %v2771
    %v2777 = vadd.f32 %v2705, %v2773
    %v2778 = vld [vmem:[%s2437 + $0x2] sm:$0xff]
    %v2779 = vld [vmem:[%s2437 + $0xa] sm:$0x3f]
    %v2780 = vmul.f32 %v1156, %v2778
    %v2781 = vmul.f32 %v1156, %v2779
    %v2782 = vadd.f32 %v2716, %v2780
    %v2783 = vadd.f32 %v2717, %v2781
    %v2784 = vmul.f32 %v1161, %v2778
    %v2785 = vmul.f32 %v1161, %v2779
    %v2786 = vadd.f32 %v2728, %v2784
    %v2787 = vadd.f32 %v2729, %v2785
    %v2788 = vmul.f32 %v1166, %v2778
    %v2789 = vmul.f32 %v1166, %v2779
    %v2790 = vadd.f32 %v2740, %v2788
    %v2791 = vadd.f32 %v2741, %v2789
    %v2792 = vmul.f32 %v1171, %v2778
    %v2793 = vmul.f32 %v1171, %v2779
    %v2794 = vadd.f32 %v2752, %v2792
    %v2795 = vadd.f32 %v2753, %v2793
    %v2796 = vmul.f32 %v1176, %v2778
    %v2797 = vmul.f32 %v1176, %v2779
    %v2798 = vadd.f32 %v2764, %v2796
    %v2799 = vadd.f32 %v2765, %v2797
    %v2800 = vmul.f32 %v1181, %v2778
    %v2801 = vmul.f32 %v1181, %v2779
    %v2802 = vadd.f32 %v2776, %v2800
    %v2803 = vadd.f32 %v2777, %v2801
    %v2804 = vmul.f32 %v1186, %v2778
    %v2805 = vmul.f32 %v1186, %v2779
    %2808 = vrot.lane.b32.xlu0 %v2804, 127
    %v2809 = vpop.permute.xlu0 %2808
    %2810 = vrot.lane.b32.xlu0 %v2805, 127
    %v2811 = vpop.permute.xlu0 %2810
    %v2814 = vadd.f32 %v2782, %v2809
    %v2815 = vadd.f32 %v2783, %v2811
    %v2816 = vmul.f32 %v1199, %v2778
    %v2817 = vmul.f32 %v1199, %v2779
    %2820 = vrot.lane.b32.xlu0 %v2816, 127
    %v2821 = vpop.permute.xlu0 %2820
    %2822 = vrot.lane.b32.xlu0 %v2817, 127
    %v2823 = vpop.permute.xlu0 %2822
    %v2826 = vadd.f32 %v2786, %v2821
    %v2827 = vadd.f32 %v2787, %v2823
    %v2828 = vmul.f32 %v1212, %v2778
    %v2829 = vmul.f32 %v1212, %v2779
    %2832 = vrot.lane.b32.xlu0 %v2828, 127
    %v2833 = vpop.permute.xlu0 %2832
    %2834 = vrot.lane.b32.xlu0 %v2829, 127
    %v2835 = vpop.permute.xlu0 %2834
    %v2838 = vadd.f32 %v2790, %v2833
    %v2839 = vadd.f32 %v2791, %v2835
    %v2840 = vmul.f32 %v1225, %v2778
    %v2841 = vmul.f32 %v1225, %v2779
    %2844 = vrot.lane.b32.xlu0 %v2840, 127
    %v2845 = vpop.permute.xlu0 %2844
    %2846 = vrot.lane.b32.xlu0 %v2841, 127
    %v2847 = vpop.permute.xlu0 %2846
    %v2850 = vadd.f32 %v2794, %v2845
    %v2851 = vadd.f32 %v2795, %v2847
    %v2852 = vmul.f32 %v1238, %v2778
    %v2853 = vmul.f32 %v1238, %v2779
    %2856 = vrot.lane.b32.xlu0 %v2852, 127
    %v2857 = vpop.permute.xlu0 %2856
    %2858 = vrot.lane.b32.xlu0 %v2853, 127
    %v2859 = vpop.permute.xlu0 %2858
    %v2862 = vadd.f32 %v2798, %v2857
    %v2863 = vadd.f32 %v2799, %v2859
    %v2864 = vmul.f32 %v1251, %v2778
    %v2865 = vmul.f32 %v1251, %v2779
    %2868 = vrot.lane.b32.xlu0 %v2864, 127
    %v2869 = vpop.permute.xlu0 %2868
    %2870 = vrot.lane.b32.xlu0 %v2865, 127
    %v2871 = vpop.permute.xlu0 %2870
    %v2874 = vadd.f32 %v2802, %v2869
    %v2875 = vadd.f32 %v2803, %v2871
    %v2876 = vmul.f32 %v1264, %v2778
    %v2877 = vmul.f32 %v1264, %v2779
    %2880 = vrot.lane.b32.xlu0 %v2876, 126
    %v2881 = vpop.permute.xlu0 %2880
    %2882 = vrot.lane.b32.xlu0 %v2877, 126
    %v2883 = vpop.permute.xlu0 %2882
    %v2886 = vadd.f32 %v2814, %v2881
    %v2887 = vadd.f32 %v2815, %v2883
    %v2888 = vmul.f32 %v1277, %v2778
    %v2889 = vmul.f32 %v1277, %v2779
    %2892 = vrot.lane.b32.xlu0 %v2888, 126
    %v2893 = vpop.permute.xlu0 %2892
    %2894 = vrot.lane.b32.xlu0 %v2889, 126
    %v2895 = vpop.permute.xlu0 %2894
    %v2898 = vadd.f32 %v2826, %v2893
    %v2899 = vadd.f32 %v2827, %v2895
    %v2900 = vmul.f32 %v1290, %v2778
    %v2901 = vmul.f32 %v1290, %v2779
    %2904 = vrot.lane.b32.xlu0 %v2900, 126
    %v2905 = vpop.permute.xlu0 %2904
    %2906 = vrot.lane.b32.xlu0 %v2901, 126
    %v2907 = vpop.permute.xlu0 %2906
    %v2910 = vadd.f32 %v2838, %v2905
    %v2911 = vadd.f32 %v2839, %v2907
    %v2912 = vmul.f32 %v1303, %v2778
    %v2913 = vmul.f32 %v1303, %v2779
    %2916 = vrot.lane.b32.xlu0 %v2912, 126
    %v2917 = vpop.permute.xlu0 %2916
    %2918 = vrot.lane.b32.xlu0 %v2913, 126
    %v2919 = vpop.permute.xlu0 %2918
    %v2922 = vadd.f32 %v2850, %v2917
    %v2923 = vadd.f32 %v2851, %v2919
    %v2924 = vmul.f32 %v1316, %v2778
    %v2925 = vmul.f32 %v1316, %v2779
    %2928 = vrot.lane.b32.xlu0 %v2924, 126
    %v2929 = vpop.permute.xlu0 %2928
    %2930 = vrot.lane.b32.xlu0 %v2925, 126
    %v2931 = vpop.permute.xlu0 %2930
    %v2934 = vadd.f32 %v2862, %v2929
    %v2935 = vadd.f32 %v2863, %v2931
    %v2936 = vmul.f32 %v1329, %v2778
    %v2937 = vmul.f32 %v1329, %v2779
    %2940 = vrot.lane.b32.xlu0 %v2936, 126
    %v2941 = vpop.permute.xlu0 %2940
    %2942 = vrot.lane.b32.xlu0 %v2937, 126
    %v2943 = vpop.permute.xlu0 %2942
    %v2946 = vadd.f32 %v2874, %v2941
    %v2947 = vadd.f32 %v2875, %v2943
    %s2948 = scalar_lea.vmem %s0, 80
    %v2949 = vld [vmem:[%s2948] sm:$0xff]
    %v2950 = vld [vmem:[%s2948 + $0x8] sm:$0x3f]
    %v2951 = vmul.f32 %v1345, %v2949
    %v2952 = vmul.f32 %v1345, %v2950
    %v2953 = vadd.f32 %v2886, %v2951
    %v2954 = vadd.f32 %v2887, %v2952
    %v2955 = vmul.f32 %v1350, %v2949
    %v2956 = vmul.f32 %v1350, %v2950
    %v2957 = vadd.f32 %v2898, %v2955
    %v2958 = vadd.f32 %v2899, %v2956
    %v2959 = vmul.f32 %v1355, %v2949
    %v2960 = vmul.f32 %v1355, %v2950
    %v2961 = vadd.f32 %v2910, %v2959
    %v2962 = vadd.f32 %v2911, %v2960
    %v2963 = vmul.f32 %v1360, %v2949
    %v2964 = vmul.f32 %v1360, %v2950
    %v2965 = vadd.f32 %v2922, %v2963
    %v2966 = vadd.f32 %v2923, %v2964
    %v2967 = vmul.f32 %v1365, %v2949
    %v2968 = vmul.f32 %v1365, %v2950
    %v2969 = vadd.f32 %v2934, %v2967
    %v2970 = vadd.f32 %v2935, %v2968
    %v2971 = vmul.f32 %v1370, %v2949
    %v2972 = vmul.f32 %v1370, %v2950
    %v2973 = vadd.f32 %v2946, %v2971
    %v2974 = vadd.f32 %v2947, %v2972
    %v2975 = vmul.f32 %v1375, %v2949
    %v2976 = vmul.f32 %v1375, %v2950
    %2979 = vrot.lane.b32.xlu0 %v2975, 127
    %v2980 = vpop.permute.xlu0 %2979
    %2981 = vrot.lane.b32.xlu0 %v2976, 127
    %v2982 = vpop.permute.xlu0 %2981
    %v2985 = vadd.f32 %v2953, %v2980
    %v2986 = vadd.f32 %v2954, %v2982
    %v2987 = vmul.f32 %v1388, %v2949
    %v2988 = vmul.f32 %v1388, %v2950
    %2991 = vrot.lane.b32.xlu0 %v2987, 127
    %v2992 = vpop.permute.xlu0 %2991
    %2993 = vrot.lane.b32.xlu0 %v2988, 127
    %v2994 = vpop.permute.xlu0 %2993
    %v2997 = vadd.f32 %v2957, %v2992
    %v2998 = vadd.f32 %v2958, %v2994
    %v2999 = vmul.f32 %v1401, %v2949
    %v3000 = vmul.f32 %v1401, %v2950
    %3003 = vrot.lane.b32.xlu0 %v2999, 127
    %v3004 = vpop.permute.xlu0 %3003
    %3005 = vrot.lane.b32.xlu0 %v3000, 127
    %v3006 = vpop.permute.xlu0 %3005
    %v3009 = vadd.f32 %v2961, %v3004
    %v3010 = vadd.f32 %v2962, %v3006
    %v3011 = vmul.f32 %v1414, %v2949
    %v3012 = vmul.f32 %v1414, %v2950
    %3015 = vrot.lane.b32.xlu0 %v3011, 127
    %v3016 = vpop.permute.xlu0 %3015
    %3017 = vrot.lane.b32.xlu0 %v3012, 127
    %v3018 = vpop.permute.xlu0 %3017
    %v3021 = vadd.f32 %v2965, %v3016
    %v3022 = vadd.f32 %v2966, %v3018
    %v3023 = vmul.f32 %v1427, %v2949
    %v3024 = vmul.f32 %v1427, %v2950
    %3027 = vrot.lane.b32.xlu0 %v3023, 127
    %v3028 = vpop.permute.xlu0 %3027
    %3029 = vrot.lane.b32.xlu0 %v3024, 127
    %v3030 = vpop.permute.xlu0 %3029
    %v3033 = vadd.f32 %v2969, %v3028
    %v3034 = vadd.f32 %v2970, %v3030
    %v3035 = vmul.f32 %v1440, %v2949
    %v3036 = vmul.f32 %v1440, %v2950
    %3039 = vrot.lane.b32.xlu0 %v3035, 127
    %v3040 = vpop.permute.xlu0 %3039
    %3041 = vrot.lane.b32.xlu0 %v3036, 127
    %v3042 = vpop.permute.xlu0 %3041
    %v3045 = vadd.f32 %v2973, %v3040
    %v3046 = vadd.f32 %v2974, %v3042
    %v3047 = vmul.f32 %v1453, %v2949
    %v3048 = vmul.f32 %v1453, %v2950
    %3051 = vrot.lane.b32.xlu0 %v3047, 126
    %v3052 = vpop.permute.xlu0 %3051
    %3053 = vrot.lane.b32.xlu0 %v3048, 126
    %v3054 = vpop.permute.xlu0 %3053
    %v3057 = vadd.f32 %v2985, %v3052
    %v3058 = vadd.f32 %v2986, %v3054
    %v3059 = vmul.f32 %v1466, %v2949
    %v3060 = vmul.f32 %v1466, %v2950
    %3063 = vrot.lane.b32.xlu0 %v3059, 126
    %v3064 = vpop.permute.xlu0 %3063
    %3065 = vrot.lane.b32.xlu0 %v3060, 126
    %v3066 = vpop.permute.xlu0 %3065
    %v3069 = vadd.f32 %v2997, %v3064
    %v3070 = vadd.f32 %v2998, %v3066
    %v3071 = vmul.f32 %v1479, %v2949
    %v3072 = vmul.f32 %v1479, %v2950
    %3075 = vrot.lane.b32.xlu0 %v3071, 126
    %v3076 = vpop.permute.xlu0 %3075
    %3077 = vrot.lane.b32.xlu0 %v3072, 126
    %v3078 = vpop.permute.xlu0 %3077
    %v3081 = vadd.f32 %v3009, %v3076
    %v3082 = vadd.f32 %v3010, %v3078
    %v3083 = vmul.f32 %v1492, %v2949
    %v3084 = vmul.f32 %v1492, %v2950
    %3087 = vrot.lane.b32.xlu0 %v3083, 126
    %v3088 = vpop.permute.xlu0 %3087
    %3089 = vrot.lane.b32.xlu0 %v3084, 126
    %v3090 = vpop.permute.xlu0 %3089
    %v3093 = vadd.f32 %v3021, %v3088
    %v3094 = vadd.f32 %v3022, %v3090
    %v3095 = vmul.f32 %v1505, %v2949
    %v3096 = vmul.f32 %v1505, %v2950
    %3099 = vrot.lane.b32.xlu0 %v3095, 126
    %v3100 = vpop.permute.xlu0 %3099
    %3101 = vrot.lane.b32.xlu0 %v3096, 126
    %v3102 = vpop.permute.xlu0 %3101
    %v3105 = vadd.f32 %v3033, %v3100
    %v3106 = vadd.f32 %v3034, %v3102
    %v3107 = vmul.f32 %v1518, %v2949
    %v3108 = vmul.f32 %v1518, %v2950
    %3111 = vrot.lane.b32.xlu0 %v3107, 126
    %v3112 = vpop.permute.xlu0 %3111
    %3113 = vrot.lane.b32.xlu0 %v3108, 126
    %v3114 = vpop.permute.xlu0 %3113
    %v3117 = vadd.f32 %v3045, %v3112
    %v3118 = vadd.f32 %v3046, %v3114
    %v3119 = vld [vmem:[%s2948 + $0x1] sm:$0xff]
    %v3120 = vld [vmem:[%s2948 + $0x9] sm:$0x3f]
    %v3121 = vmul.f32 %v1533, %v3119
    %v3122 = vmul.f32 %v1533, %v3120
    %v3123 = vadd.f32 %v3057, %v3121
    %v3124 = vadd.f32 %v3058, %v3122
    %v3125 = vmul.f32 %v1538, %v3119
    %v3126 = vmul.f32 %v1538, %v3120
    %v3127 = vadd.f32 %v3069, %v3125
    %v3128 = vadd.f32 %v3070, %v3126
    %v3129 = vmul.f32 %v1543, %v3119
    %v3130 = vmul.f32 %v1543, %v3120
    %v3131 = vadd.f32 %v3081, %v3129
    %v3132 = vadd.f32 %v3082, %v3130
    %v3133 = vmul.f32 %v1548, %v3119
    %v3134 = vmul.f32 %v1548, %v3120
    %v3135 = vadd.f32 %v3093, %v3133
    %v3136 = vadd.f32 %v3094, %v3134
    %v3137 = vmul.f32 %v1553, %v3119
    %v3138 = vmul.f32 %v1553, %v3120
    %v3139 = vadd.f32 %v3105, %v3137
    %v3140 = vadd.f32 %v3106, %v3138
    %v3141 = vmul.f32 %v1558, %v3119
    %v3142 = vmul.f32 %v1558, %v3120
    %v3143 = vadd.f32 %v3117, %v3141
    %v3144 = vadd.f32 %v3118, %v3142
    %v3145 = vmul.f32 %v1563, %v3119
    %v3146 = vmul.f32 %v1563, %v3120
    %3149 = vrot.lane.b32.xlu0 %v3145, 127
    %v3150 = vpop.permute.xlu0 %3149
    %3151 = vrot.lane.b32.xlu0 %v3146, 127
    %v3152 = vpop.permute.xlu0 %3151
    %v3155 = vadd.f32 %v3123, %v3150
    %v3156 = vadd.f32 %v3124, %v3152
    %v3157 = vmul.f32 %v1576, %v3119
    %v3158 = vmul.f32 %v1576, %v3120
    %3161 = vrot.lane.b32.xlu0 %v3157, 127
    %v3162 = vpop.permute.xlu0 %3161
    %3163 = vrot.lane.b32.xlu0 %v3158, 127
    %v3164 = vpop.permute.xlu0 %3163
    %v3167 = vadd.f32 %v3127, %v3162
    %v3168 = vadd.f32 %v3128, %v3164
    %v3169 = vmul.f32 %v1589, %v3119
    %v3170 = vmul.f32 %v1589, %v3120
    %3173 = vrot.lane.b32.xlu0 %v3169, 127
    %v3174 = vpop.permute.xlu0 %3173
    %3175 = vrot.lane.b32.xlu0 %v3170, 127
    %v3176 = vpop.permute.xlu0 %3175
    %v3179 = vadd.f32 %v3131, %v3174
    %v3180 = vadd.f32 %v3132, %v3176
    %v3181 = vmul.f32 %v1602, %v3119
    %v3182 = vmul.f32 %v1602, %v3120
    %3185 = vrot.lane.b32.xlu0 %v3181, 127
    %v3186 = vpop.permute.xlu0 %3185
    %3187 = vrot.lane.b32.xlu0 %v3182, 127
    %v3188 = vpop.permute.xlu0 %3187
    %v3191 = vadd.f32 %v3135, %v3186
    %v3192 = vadd.f32 %v3136, %v3188
    %v3193 = vmul.f32 %v1615, %v3119
    %v3194 = vmul.f32 %v1615, %v3120
    %3197 = vrot.lane.b32.xlu0 %v3193, 127
    %v3198 = vpop.permute.xlu0 %3197
    %3199 = vrot.lane.b32.xlu0 %v3194, 127
    %v3200 = vpop.permute.xlu0 %3199
    %v3203 = vadd.f32 %v3139, %v3198
    %v3204 = vadd.f32 %v3140, %v3200
    %v3205 = vmul.f32 %v1628, %v3119
    %v3206 = vmul.f32 %v1628, %v3120
    %3209 = vrot.lane.b32.xlu0 %v3205, 127
    %v3210 = vpop.permute.xlu0 %3209
    %3211 = vrot.lane.b32.xlu0 %v3206, 127
    %v3212 = vpop.permute.xlu0 %3211
    %v3215 = vadd.f32 %v3143, %v3210
    %v3216 = vadd.f32 %v3144, %v3212
    %v3217 = vmul.f32 %v1641, %v3119
    %v3218 = vmul.f32 %v1641, %v3120
    %3221 = vrot.lane.b32.xlu0 %v3217, 126
    %v3222 = vpop.permute.xlu0 %3221
    %3223 = vrot.lane.b32.xlu0 %v3218, 126
    %v3224 = vpop.permute.xlu0 %3223
    %v3227 = vadd.f32 %v3155, %v3222
    %v3228 = vadd.f32 %v3156, %v3224
    %v3229 = vmul.f32 %v1654, %v3119
    %v3230 = vmul.f32 %v1654, %v3120
    %3233 = vrot.lane.b32.xlu0 %v3229, 126
    %v3234 = vpop.permute.xlu0 %3233
    %3235 = vrot.lane.b32.xlu0 %v3230, 126
    %v3236 = vpop.permute.xlu0 %3235
    %v3239 = vadd.f32 %v3167, %v3234
    %v3240 = vadd.f32 %v3168, %v3236
    %v3241 = vmul.f32 %v1667, %v3119
    %v3242 = vmul.f32 %v1667, %v3120
    %3245 = vrot.lane.b32.xlu0 %v3241, 126
    %v3246 = vpop.permute.xlu0 %3245
    %3247 = vrot.lane.b32.xlu0 %v3242, 126
    %v3248 = vpop.permute.xlu0 %3247
    %v3251 = vadd.f32 %v3179, %v3246
    %v3252 = vadd.f32 %v3180, %v3248
    %v3253 = vmul.f32 %v1680, %v3119
    %v3254 = vmul.f32 %v1680, %v3120
    %3257 = vrot.lane.b32.xlu0 %v3253, 126
    %v3258 = vpop.permute.xlu0 %3257
    %3259 = vrot.lane.b32.xlu0 %v3254, 126
    %v3260 = vpop.permute.xlu0 %3259
    %v3263 = vadd.f32 %v3191, %v3258
    %v3264 = vadd.f32 %v3192, %v3260
    %v3265 = vmul.f32 %v1693, %v3119
    %v3266 = vmul.f32 %v1693, %v3120
    %3269 = vrot.lane.b32.xlu0 %v3265, 126
    %v3270 = vpop.permute.xlu0 %3269
    %3271 = vrot.lane.b32.xlu0 %v3266, 126
    %v3272 = vpop.permute.xlu0 %3271
    %v3275 = vadd.f32 %v3203, %v3270
    %v3276 = vadd.f32 %v3204, %v3272
    %v3277 = vmul.f32 %v1706, %v3119
    %v3278 = vmul.f32 %v1706, %v3120
    %3281 = vrot.lane.b32.xlu0 %v3277, 126
    %v3282 = vpop.permute.xlu0 %3281
    %3283 = vrot.lane.b32.xlu0 %v3278, 126
    %v3284 = vpop.permute.xlu0 %3283
    %v3287 = vadd.f32 %v3215, %v3282
    %v3288 = vadd.f32 %v3216, %v3284
    %v3289 = vld [vmem:[%s2948 + $0x2] sm:$0xff]
    %v3290 = vld [vmem:[%s2948 + $0xa] sm:$0x3f]
    %v3291 = vmul.f32 %v1721, %v3289
    %v3292 = vmul.f32 %v1721, %v3290
    %v3293 = vadd.f32 %v3227, %v3291
    %v3294 = vadd.f32 %v3228, %v3292
    %v3295 = vmul.f32 %v1726, %v3289
    %v3296 = vmul.f32 %v1726, %v3290
    %v3297 = vadd.f32 %v3239, %v3295
    %v3298 = vadd.f32 %v3240, %v3296
    %v3299 = vmul.f32 %v1731, %v3289
    %v3300 = vmul.f32 %v1731, %v3290
    %v3301 = vadd.f32 %v3251, %v3299
    %v3302 = vadd.f32 %v3252, %v3300
    %v3303 = vmul.f32 %v1736, %v3289
    %v3304 = vmul.f32 %v1736, %v3290
    %v3305 = vadd.f32 %v3263, %v3303
    %v3306 = vadd.f32 %v3264, %v3304
    %v3307 = vmul.f32 %v1741, %v3289
    %v3308 = vmul.f32 %v1741, %v3290
    %v3309 = vadd.f32 %v3275, %v3307
    %v3310 = vadd.f32 %v3276, %v3308
    %v3311 = vmul.f32 %v1746, %v3289
    %v3312 = vmul.f32 %v1746, %v3290
    %v3313 = vadd.f32 %v3287, %v3311
    %v3314 = vadd.f32 %v3288, %v3312
    %v3315 = vmul.f32 %v1751, %v3289
    %v3316 = vmul.f32 %v1751, %v3290
    %3319 = vrot.lane.b32.xlu0 %v3315, 127
    %v3320 = vpop.permute.xlu0 %3319
    %3321 = vrot.lane.b32.xlu0 %v3316, 127
    %v3322 = vpop.permute.xlu0 %3321
    %v3325 = vadd.f32 %v3293, %v3320
    %v3326 = vadd.f32 %v3294, %v3322
    %v3327 = vmul.f32 %v1764, %v3289
    %v3328 = vmul.f32 %v1764, %v3290
    %3331 = vrot.lane.b32.xlu0 %v3327, 127
    %v3332 = vpop.permute.xlu0 %3331
    %3333 = vrot.lane.b32.xlu0 %v3328, 127
    %v3334 = vpop.permute.xlu0 %3333
    %v3337 = vadd.f32 %v3297, %v3332
    %v3338 = vadd.f32 %v3298, %v3334
    %v3339 = vmul.f32 %v1777, %v3289
    %v3340 = vmul.f32 %v1777, %v3290
    %3343 = vrot.lane.b32.xlu0 %v3339, 127
    %v3344 = vpop.permute.xlu0 %3343
    %3345 = vrot.lane.b32.xlu0 %v3340, 127
    %v3346 = vpop.permute.xlu0 %3345
    %v3349 = vadd.f32 %v3301, %v3344
    %v3350 = vadd.f32 %v3302, %v3346
    %v3351 = vmul.f32 %v1790, %v3289
    %v3352 = vmul.f32 %v1790, %v3290
    %3355 = vrot.lane.b32.xlu0 %v3351, 127
    %v3356 = vpop.permute.xlu0 %3355
    %3357 = vrot.lane.b32.xlu0 %v3352, 127
    %v3358 = vpop.permute.xlu0 %3357
    %v3361 = vadd.f32 %v3305, %v3356
    %v3362 = vadd.f32 %v3306, %v3358
    %v3363 = vmul.f32 %v1803, %v3289
    %v3364 = vmul.f32 %v1803, %v3290
    %3367 = vrot.lane.b32.xlu0 %v3363, 127
    %v3368 = vpop.permute.xlu0 %3367
    %3369 = vrot.lane.b32.xlu0 %v3364, 127
    %v3370 = vpop.permute.xlu0 %3369
    %v3373 = vadd.f32 %v3309, %v3368
    %v3374 = vadd.f32 %v3310, %v3370
    %v3375 = vmul.f32 %v1816, %v3289
    %v3376 = vmul.f32 %v1816, %v3290
    %3379 = vrot.lane.b32.xlu0 %v3375, 127
    %v3380 = vpop.permute.xlu0 %3379
    %3381 = vrot.lane.b32.xlu0 %v3376, 127
    %v3382 = vpop.permute.xlu0 %3381
    %v3385 = vadd.f32 %v3313, %v3380
    %v3386 = vadd.f32 %v3314, %v3382
    %v3387 = vmul.f32 %v1829, %v3289
    %v3388 = vmul.f32 %v1829, %v3290
    %3391 = vrot.lane.b32.xlu0 %v3387, 126
    %v3392 = vpop.permute.xlu0 %3391
    %3393 = vrot.lane.b32.xlu0 %v3388, 126
    %v3394 = vpop.permute.xlu0 %3393
    %v3397 = vadd.f32 %v3325, %v3392
    %v3398 = vadd.f32 %v3326, %v3394
    %v3399 = vmul.f32 %v1842, %v3289
    %v3400 = vmul.f32 %v1842, %v3290
    %3403 = vrot.lane.b32.xlu0 %v3399, 126
    %v3404 = vpop.permute.xlu0 %3403
    %3405 = vrot.lane.b32.xlu0 %v3400, 126
    %v3406 = vpop.permute.xlu0 %3405
    %v3409 = vadd.f32 %v3337, %v3404
    %v3410 = vadd.f32 %v3338, %v3406
    %v3411 = vmul.f32 %v1855, %v3289
    %v3412 = vmul.f32 %v1855, %v3290
    %3415 = vrot.lane.b32.xlu0 %v3411, 126
    %v3416 = vpop.permute.xlu0 %3415
    %3417 = vrot.lane.b32.xlu0 %v3412, 126
    %v3418 = vpop.permute.xlu0 %3417
    %v3421 = vadd.f32 %v3349, %v3416
    %v3422 = vadd.f32 %v3350, %v3418
    %v3423 = vmul.f32 %v1868, %v3289
    %v3424 = vmul.f32 %v1868, %v3290
    %3427 = vrot.lane.b32.xlu0 %v3423, 126
    %v3428 = vpop.permute.xlu0 %3427
    %3429 = vrot.lane.b32.xlu0 %v3424, 126
    %v3430 = vpop.permute.xlu0 %3429
    %v3433 = vadd.f32 %v3361, %v3428
    %v3434 = vadd.f32 %v3362, %v3430
    %v3435 = vmul.f32 %v1881, %v3289
    %v3436 = vmul.f32 %v1881, %v3290
    %3439 = vrot.lane.b32.xlu0 %v3435, 126
    %v3440 = vpop.permute.xlu0 %3439
    %3441 = vrot.lane.b32.xlu0 %v3436, 126
    %v3442 = vpop.permute.xlu0 %3441
    %v3445 = vadd.f32 %v3373, %v3440
    %v3446 = vadd.f32 %v3374, %v3442
    %v3447 = vmul.f32 %v1894, %v3289
    %v3448 = vmul.f32 %v1894, %v3290
    %3451 = vrot.lane.b32.xlu0 %v3447, 126
    %v3452 = vpop.permute.xlu0 %3451
    %3453 = vrot.lane.b32.xlu0 %v3448, 126
    %v3454 = vpop.permute.xlu0 %3453
    %v3457 = vadd.f32 %v3385, %v3452
    %v3458 = vadd.f32 %v3386, %v3454
    %s3459 = scalar_lea.vmem %s3, 96
    %3460 = vst.msk [vmem:[%s3459] sm:$0xff] %vm1907, %v3397
    %3461 = vst.msk [vmem:[%s3459 + $0x8] sm:$0x3f] %vm1909, %v3398
    %s3462 = scalar_lea.vmem %s3, 112
    %3463 = vst.msk [vmem:[%s3462] sm:$0xff] %vm1907, %v3409
    %3464 = vst.msk [vmem:[%s3462 + $0x8] sm:$0x3f] %vm1909, %v3410
    %s3465 = scalar_lea.vmem %s3, 128
    %3466 = vst.msk [vmem:[%s3465] sm:$0xff] %vm1907, %v3421
    %3467 = vst.msk [vmem:[%s3465 + $0x8] sm:$0x3f] %vm1909, %v3422
    %s3468 = scalar_lea.vmem %s3, 144
    %3469 = vst.msk [vmem:[%s3468] sm:$0xff] %vm1907, %v3433
    %3470 = vst.msk [vmem:[%s3468 + $0x8] sm:$0x3f] %vm1909, %v3434
    %s3471 = scalar_lea.vmem %s3, 160
    %3472 = vst.msk [vmem:[%s3471] sm:$0xff] %vm1907, %v3445
    %3473 = vst.msk [vmem:[%s3471 + $0x8] sm:$0x3f] %vm1909, %v3446
    %s3474 = scalar_lea.vmem %s3, 176
    %3475 = vst.msk [vmem:[%s3474] sm:$0xff] %vm1907, %v3457
    %3476 = vst.msk [vmem:[%s3474 + $0x8] sm:$0x3f] %vm1909, %v3458
    // Predicated region
    $region22: #{conv2d_pallas.1} parent=1 // pred_check
      _
    $region23: #{conv2d_pallas.1} parent=1 // pred_check_branch
      %3478 = sbr.rel (0) target = $region25
    $region24: #{conv2d_pallas.1} parent=1 // pred_region
      _
    $region25: #{conv2d_pallas.1} parent=1 // pred_fallthru
      _
    // Predicated region
    $region26: #{conv2d_pallas.1} parent=1 // pred_check
      _
    $region27: #{conv2d_pallas.1} parent=1 // pred_check_branch
      %3480 = sbr.rel (0) target = $region29
    $region28: #{conv2d_pallas.1} parent=1 // pred_region
      _
    $region29: #{conv2d_pallas.1} parent=1 // pred_fallthru
      _
    %3481 = vsyncpa [#allocation3], 1
    %3482 = vsyncpa [#allocation5], 1

</llo_original>
